<compile_context>
chip_gen: v5e
topology: v5e:2x2
jax: 0.10.0
libtpu: 0.0.40
codegen_flags: <defaults>
</compile_context>

<pallas_src>
import jax
import jax.numpy as jnp
from jax import lax
from jax.experimental import pallas as pl
from jax.experimental.pallas import tpu as pltpu


def _round_up(n, m):
    return ((n + m - 1) // m) * m


# ----------------------------- fused Pallas kernel ---------------------------

def _make_fused_kernel(num_layers, T, B_pad, D_pad, H_pad):
    """Builds the fused LSTM(+FC) kernel for a fixed layer count / padded dims."""

    def kernel(*refs):
        x_ref = refs[0]                                    # (T, B_pad, D_pad)
        layer_refs = refs[1:1 + 3 * num_layers]            # (w_ih, w_hh, b) per layer
        fc_w_ref = refs[1 + 3 * num_layers]                # (H_pad, O_pad)
        fc_b_ref = refs[2 + 3 * num_layers]                # (1, O_pad)
        out_ref = refs[3 + 3 * num_layers]                 # (B_pad, O_pad)
        act_scr = refs[4 + 3 * num_layers]                 # (T, B_pad, H_pad)
        gx_scr = refs[5 + 3 * num_layers]                  # (T, B_pad, 4*H_pad)
        h_scr = refs[6 + 3 * num_layers]                   # (B_pad, H_pad)
        c_scr = refs[7 + 3 * num_layers]                   # (B_pad, H_pad)

        for l in range(num_layers):
            w_ih = layer_refs[3 * l]                       # (D_in_pad, 4*H_pad)
            w_hh = layer_refs[3 * l + 1]                   # (H_pad,    4*H_pad)
            b = layer_refs[3 * l + 2]                      # (1,        4*H_pad)

            # ---- hoisted input projection: one well-shaped MXU matmul ----
            if l == 0:
                inp = x_ref[...].reshape(T * B_pad, D_pad)
            else:
                inp = act_scr[...].reshape(T * B_pad, H_pad)
            gx = (jnp.dot(inp, w_ih[...], preferred_element_type=jnp.float32)
                  + b[...])                                # bias folded in, once
            gx_scr[...] = gx.reshape(T, B_pad, 4 * H_pad)

            # ---- recurrence: only h @ W_hh + gate math per step ----
            h_scr[...] = jnp.zeros_like(h_scr)
            c_scr[...] = jnp.zeros_like(c_scr)
            write_act = (l != num_layers - 1)              # last layer keeps only h_T

            def step(t, carry):
                h = h_scr[...]
                c = c_scr[...]
                gates = gx_scr[t] + jnp.dot(
                    h, w_hh[...], preferred_element_type=jnp.float32)
                # lane-aligned gate slices (multiples of 128)
                i_g = jax.nn.sigmoid(gates[:, 0 * H_pad:1 * H_pad])
                f_g = jax.nn.sigmoid(gates[:, 1 * H_pad:2 * H_pad])
                g_g = jnp.tanh(gates[:, 2 * H_pad:3 * H_pad])
                o_g = jax.nn.sigmoid(gates[:, 3 * H_pad:4 * H_pad])
                c_new = f_g * c + i_g * g_g
                h_new = o_g * jnp.tanh(c_new)
                c_scr[...] = c_new
                h_scr[...] = h_new
                if write_act:
                    act_scr[t] = h_new
                return carry

            lax.fori_loop(0, T, step, 0, unroll=True)

        # ---- FC head epilogue on the final hidden state (lane-dense output) ----
        out_ref[...] = (jnp.dot(h_scr[...], fc_w_ref[...],
                                preferred_element_type=jnp.float32)
                        + fc_b_ref[...]).astype(out_ref.dtype)

    return kernel


# ------------------------- parameter packing (one-time) ----------------------

def _pack_gate_weights(w, d_in_pad, h, h_pad):
    """PyTorch (4H, D_in) -> kernel (D_in_pad, 4*H_pad), gate blocks at 128-lane boundaries."""
    d_in = w.shape[1]
    out = jnp.zeros((d_in_pad, 4 * h_pad), jnp.float32)
    for g in range(4):
        blk = jnp.transpose(w[g * h:(g + 1) * h, :])       # (D_in, H)
        out = out.at[:d_in, g * h_pad:g * h_pad + h].set(blk)
    return out


def _pack_gate_bias(b_ih, b_hh, h, h_pad):
    b = (b_ih + b_hh).astype(jnp.float32)
    out = jnp.zeros((1, 4 * h_pad), jnp.float32)
    for g in range(4):
        out = out.at[0, g * h_pad:g * h_pad + h].set(b[g * h:(g + 1) * h])
    return out


def prepare_params(params, input_size, hidden_size, output_size):
    """Transpose / pad / fuse biases once (not per forward)."""
    H = hidden_size
    H_pad = _round_up(H, 128)
    D_pad = _round_up(input_size, 128)
    O_pad = _round_up(output_size, 128)
    kparams = {
        "lstm": [], "h_pad": H_pad, "d_pad": D_pad, "o_pad": O_pad,
        "hidden_size": H, "output_size": output_size,
    }
    for l, layer in enumerate(params["lstm"]):
        d_in_pad = D_pad if l == 0 else H_pad
        kparams["lstm"].append({
            "w_ih": _pack_gate_weights(layer["w_ih"], d_in_pad, H, H_pad),
            "w_hh": _pack_gate_weights(layer["w_hh"], H_pad, H, H_pad),
            "b": _pack_gate_bias(layer["b_ih"], layer["b_hh"], H, H_pad),
        })
    kparams["fc_w"] = (jnp.zeros((H_pad, O_pad), jnp.float32)
                       .at[:H, :output_size].set(jnp.transpose(params["fc_w"])))
    kparams["fc_b"] = (jnp.zeros((1, O_pad), jnp.float32)
                       .at[0, :output_size].set(params["fc_b"]))
    return kparams


# ------------------------------ forward wrapper -------------------------------

def lstm_model_forward(x, kparams):
    """Equivalent of LSTM_Model.forward (eval mode). x: (B, T, input_size)."""
    B, T, D = x.shape
    H_pad = kparams["h_pad"]
    D_pad = kparams["d_pad"]
    O_pad = kparams["o_pad"]
    O = kparams["output_size"]
    B_pad = _round_up(B, 8)
    num_layers = len(kparams["lstm"])

    # time-major + pad batch (sublanes) and feature (lanes) dims
    x_tbd = jnp.transpose(x, (1, 0, 2)).astype(jnp.float32)
    x_pad = jnp.zeros((T, B_pad, D_pad), jnp.float32).at[:, :B, :D].set(x_tbd)

    kernel = _make_fused_kernel(num_layers, T, B_pad, D_pad, H_pad)

    inputs = [x_pad]
    in_specs = [pl.BlockSpec((T, B_pad, D_pad), lambda: (0, 0, 0))]
    for l, layer in enumerate(kparams["lstm"]):
        d_in_pad = D_pad if l == 0 else H_pad
        inputs += [layer["w_ih"], layer["w_hh"], layer["b"]]
        in_specs += [
            pl.BlockSpec((d_in_pad, 4 * H_pad), lambda: (0, 0)),
            pl.BlockSpec((H_pad, 4 * H_pad), lambda: (0, 0)),
            pl.BlockSpec((1, 4 * H_pad), lambda: (0, 0)),
        ]
    inputs += [kparams["fc_w"], kparams["fc_b"]]
    in_specs += [
        pl.BlockSpec((H_pad, O_pad), lambda: (0, 0)),
        pl.BlockSpec((1, O_pad), lambda: (0, 0)),
    ]

    out_pad = pl.pallas_call(
        kernel,
        out_shape=jax.ShapeDtypeStruct((B_pad, O_pad), jnp.float32),
        in_specs=in_specs,
        out_specs=pl.BlockSpec((B_pad, O_pad), lambda: (0, 0)),
        scratch_shapes=[
            pltpu.VMEM((T, B_pad, H_pad), jnp.float32),        # inter-layer activations
            pltpu.VMEM((T, B_pad, 4 * H_pad), jnp.float32),    # precomputed input-proj gates
            pltpu.VMEM((B_pad, H_pad), jnp.float32),           # h state
            pltpu.VMEM((B_pad, H_pad), jnp.float32),           # c state
        ],
        compiler_params=pltpu.CompilerParams(
            vmem_limit_bytes=32 * 1024 * 1024),
    )(*inputs)

    return out_pad[:B, :O]


# --------------------------- parameter construction --------------------------

def init_params(key, input_size, hidden_size, num_layers, output_size):
    k = 1.0 / jnp.sqrt(hidden_size)
    params = {"lstm": []}
    for layer in range(num_layers):
        d_in = input_size if layer == 0 else hidden_size
        key, k1, k2, k3, k4 = jax.random.split(key, 5)
        params["lstm"].append({
            "w_ih": jax.random.uniform(k1, (4 * hidden_size, d_in),
                                       jnp.float32, -k, k),
            "w_hh": jax.random.uniform(k2, (4 * hidden_size, hidden_size),
                                       jnp.float32, -k, k),
            "b_ih": jax.random.uniform(k3, (4 * hidden_size,),
                                       jnp.float32, -k, k),
            "b_hh": jax.random.uniform(k4, (4 * hidden_size,),
                                       jnp.float32, -k, k),
        })
    key, k5, k6 = jax.random.split(key, 3)
    kf = 1.0 / jnp.sqrt(hidden_size)
    params["fc_w"] = jax.random.uniform(k5, (output_size, hidden_size),
                                        jnp.float32, -kf, kf)
    params["fc_b"] = jax.random.uniform(k6, (output_size,),
                                        jnp.float32, -kf, kf)
    return params


# ----------------------------- pure-JAX reference ----------------------------

def _ref_forward(x, params):
    h_seq = jnp.transpose(x, (1, 0, 2))
    for layer in params["lstm"]:
        T, B, _ = h_seq.shape
        H = layer["w_hh"].shape[1]
        w_ih_t, w_hh_t = layer["w_ih"].T, layer["w_hh"].T
        b = layer["b_ih"] + layer["b_hh"]

        def step(carry, x_t):
            h, c = carry
            g = x_t @ w_ih_t + h @ w_hh_t + b
            i = jax.nn.sigmoid(g[:, :H])
            f = jax.nn.sigmoid(g[:, H:2 * H])
            gg = jnp.tanh(g[:, 2 * H:3 * H])
            o = jax.nn.sigmoid(g[:, 3 * H:])
            c = f * c + i * gg
            h = o * jnp.tanh(c)
            return (h, c), h

        init = (jnp.zeros((B, H), jnp.float32), jnp.zeros((B, H), jnp.float32))
        _, h_seq = lax.scan(step, init, h_seq)
    return h_seq[-1] @ params["fc_w"].T + params["fc_b"]


# ----------------------------------- main ------------------------------------

if __name__ == "__main__":
    B, T = 2, 8
    input_size, hidden_size, num_layers, output_size = 4, 32, 2, 1

    key = jax.random.PRNGKey(0)
    key, xk, pk = jax.random.split(key, 3)
    x = jax.random.normal(xk, (B, T, input_size), jnp.float32)
    params = init_params(pk, input_size, hidden_size, num_layers, output_size)
    kparams = prepare_params(params, input_size, hidden_size, output_size)

    out = jax.block_until_ready(lstm_model_forward(x, kparams))
    ref = jax.block_until_ready(_ref_forward(x, params))

    assert out.shape == (B, output_size)
    assert jnp.allclose(out, ref, atol=1e-5, rtol=1e-5), float(jnp.max(jnp.abs(out - ref)))

    print("KERNEL_OK")
</pallas_src>

<mosaic_0001>
module attributes {stable_mosaic.version = 11 : i64} {
  func.func @kernel(%arg0: memref<8x8x128xf32, #tpu.memory_space<vmem>>, %arg1: memref<128x512xf32, #tpu.memory_space<vmem>>, %arg2: memref<128x512xf32, #tpu.memory_space<vmem>>, %arg3: memref<1x512xf32, #tpu.memory_space<vmem>>, %arg4: memref<128x512xf32, #tpu.memory_space<vmem>>, %arg5: memref<128x512xf32, #tpu.memory_space<vmem>>, %arg6: memref<1x512xf32, #tpu.memory_space<vmem>>, %arg7: memref<128x128xf32, #tpu.memory_space<vmem>>, %arg8: memref<1x128xf32, #tpu.memory_space<vmem>>, %arg9: memref<8x128xf32, #tpu.memory_space<vmem>>, %arg10: memref<8x8x128xf32, #tpu.memory_space<vmem>>, %arg11: memref<8x8x512xf32, #tpu.memory_space<vmem>>, %arg12: memref<8x128xf32, #tpu.memory_space<vmem>>, %arg13: memref<8x128xf32, #tpu.memory_space<vmem>>) attributes {dimension_semantics = [], scalar_prefetch = 0 : i64, scratch_operands = 4 : i64, tpu.core_type = #tpu.core_type<tc>} {
    %c0 = arith.constant 0 : index
    %c0_0 = arith.constant 0 : index
    %c0_1 = arith.constant 0 : index
    %0 = vector.load %arg0[%c0, %c0_0, %c0_1] : memref<8x8x128xf32, #tpu.memory_space<vmem>>, vector<8x8x128xf32>
    %1 = vector.shape_cast %0 : vector<8x8x128xf32> to vector<64x128xf32>
    %c0_2 = arith.constant 0 : index
    %c0_3 = arith.constant 0 : index
    %2 = vector.load %arg1[%c0_2, %c0_3] : memref<128x512xf32, #tpu.memory_space<vmem>>, vector<128x512xf32>
    %cst = arith.constant dense<0.000000e+00> : vector<64x512xf32>
    %3 = tpu.matmul %1, %2, %cst {dimension_numbers = #tpu.dot_dimension_numbers<[1], [0], [0], [1], [0, 0, 1, 1], [], []>} : vector<64x128xf32>, vector<128x512xf32>, vector<64x512xf32> -> vector<64x512xf32>
    %c0_4 = arith.constant 0 : index
    %c0_5 = arith.constant 0 : index
    %4 = vector.load %arg3[%c0_4, %c0_5] : memref<1x512xf32, #tpu.memory_space<vmem>>, vector<1x512xf32>
    %5 = vector.broadcast %4 : vector<1x512xf32> to vector<64x512xf32>
    %6 = arith.addf %3, %5 : vector<64x512xf32>
    %7 = vector.shape_cast %6 : vector<64x512xf32> to vector<8x8x512xf32>
    %c0_6 = arith.constant 0 : index
    %c0_7 = arith.constant 0 : index
    %c0_8 = arith.constant 0 : index
    %8 = vector.load %arg11[%c0_6, %c0_7, %c0_8] : memref<8x8x512xf32, #tpu.memory_space<vmem>>, vector<8x8x512xf32>
    tpu.vector_store %arg11[%c0_6, %c0_7, %c0_8], %7 {strides = array<i32>} : memref<8x8x512xf32, #tpu.memory_space<vmem>>, vector<8x8x512xf32>,
    %cst_9 = arith.constant 0.000000e+00 : f32
    %9 = vector.broadcast %cst_9 : f32 to vector<8x128xf32>
    %c0_10 = arith.constant 0 : index
    %c0_11 = arith.constant 0 : index
    %10 = vector.load %arg12[%c0_10, %c0_11] : memref<8x128xf32, #tpu.memory_space<vmem>>, vector<8x128xf32>
    tpu.vector_store %arg12[%c0_10, %c0_11], %9 {strides = array<i32>} : memref<8x128xf32, #tpu.memory_space<vmem>>, vector<8x128xf32>,
    %cst_12 = arith.constant 0.000000e+00 : f32
    %11 = vector.broadcast %cst_12 : f32 to vector<8x128xf32>
    %c0_13 = arith.constant 0 : index
    %c0_14 = arith.constant 0 : index
    %12 = vector.load %arg13[%c0_13, %c0_14] : memref<8x128xf32, #tpu.memory_space<vmem>>, vector<8x128xf32>
    tpu.vector_store %arg13[%c0_13, %c0_14], %11 {strides = array<i32>} : memref<8x128xf32, #tpu.memory_space<vmem>>, vector<8x128xf32>,
    %c0_i32 = arith.constant 0 : i32
    %c0_15 = arith.constant 0 : index
    %c0_16 = arith.constant 0 : index
    %13 = vector.load %arg12[%c0_15, %c0_16] : memref<8x128xf32, #tpu.memory_space<vmem>>, vector<8x128xf32>
    %c0_17 = arith.constant 0 : index
    %c0_18 = arith.constant 0 : index
    %14 = vector.load %arg13[%c0_17, %c0_18] : memref<8x128xf32, #tpu.memory_space<vmem>>, vector<8x128xf32>
    %15 = arith.index_cast %c0_i32 : i32 to index
    %c0_19 = arith.constant 0 : index
    %c0_20 = arith.constant 0 : index
    %16 = vector.load %arg11[%15, %c0_19, %c0_20] : memref<8x8x512xf32, #tpu.memory_space<vmem>>, vector<1x8x512xf32>
    %17 = vector.shape_cast %16 : vector<1x8x512xf32> to vector<8x512xf32>
    %c0_21 = arith.constant 0 : index
    %c0_22 = arith.constant 0 : index
    %18 = vector.load %arg2[%c0_21, %c0_22] : memref<128x512xf32, #tpu.memory_space<vmem>>, vector<128x512xf32>
    %cst_23 = arith.constant dense<0.000000e+00> : vector<8x512xf32>
    %19 = tpu.matmul %13, %18, %cst_23 {dimension_numbers = #tpu.dot_dimension_numbers<[1], [0], [0], [1], [0, 0, 1, 1], [], []>} : vector<8x128xf32>, vector<128x512xf32>, vector<8x512xf32> -> vector<8x512xf32>
    %20 = arith.addf %17, %19 : vector<8x512xf32>
    %21 = vector.extract_strided_slice %20 {offsets = [0, 0], sizes = [8, 128], strides = [1, 1]} : vector<8x512xf32> to vector<8x128xf32>
    %22 = arith.negf %21 : vector<8x128xf32>
    %23 = math.exp %22 : vector<8x128xf32>
    %cst_24 = arith.constant 1.000000e+00 : f32
    %24 = vector.broadcast %cst_24 : f32 to vector<8x128xf32>
    %25 = arith.addf %24, %23 : vector<8x128xf32>
    %26 = arith.divf %24, %25 : vector<8x128xf32>
    %27 = vector.extract_strided_slice %20 {offsets = [0, 128], sizes = [8, 128], strides = [1, 1]} : vector<8x512xf32> to vector<8x128xf32>
    %28 = arith.negf %27 : vector<8x128xf32>
    %29 = math.exp %28 : vector<8x128xf32>
    %cst_25 = arith.constant 1.000000e+00 : f32
    %30 = vector.broadcast %cst_25 : f32 to vector<8x128xf32>
    %31 = arith.addf %30, %29 : vector<8x128xf32>
    %32 = arith.divf %30, %31 : vector<8x128xf32>
    %33 = vector.extract_strided_slice %20 {offsets = [0, 256], sizes = [8, 128], strides = [1, 1]} : vector<8x512xf32> to vector<8x128xf32>
    %34 = math.tanh %33 : vector<8x128xf32>
    %35 = vector.extract_strided_slice %20 {offsets = [0, 384], sizes = [8, 128], strides = [1, 1]} : vector<8x512xf32> to vector<8x128xf32>
    %36 = arith.negf %35 : vector<8x128xf32>
    %37 = math.exp %36 : vector<8x128xf32>
    %cst_26 = arith.constant 1.000000e+00 : f32
    %38 = vector.broadcast %cst_26 : f32 to vector<8x128xf32>
    %39 = arith.addf %38, %37 : vector<8x128xf32>
    %40 = arith.divf %38, %39 : vector<8x128xf32>
    %41 = arith.mulf %32, %14 : vector<8x128xf32>
    %42 = arith.mulf %26, %34 : vector<8x128xf32>
    %43 = arith.addf %41, %42 : vector<8x128xf32>
    %44 = math.tanh %43 : vector<8x128xf32>
    %45 = arith.mulf %40, %44 : vector<8x128xf32>
    %c0_27 = arith.constant 0 : index
    %c0_28 = arith.constant 0 : index
    %46 = vector.load %arg13[%c0_27, %c0_28] : memref<8x128xf32, #tpu.memory_space<vmem>>, vector<8x128xf32>
    tpu.vector_store %arg13[%c0_27, %c0_28], %43 {strides = array<i32>} : memref<8x128xf32, #tpu.memory_space<vmem>>, vector<8x128xf32>,
    %c0_29 = arith.constant 0 : index
    %c0_30 = arith.constant 0 : index
    %47 = vector.load %arg12[%c0_29, %c0_30] : memref<8x128xf32, #tpu.memory_space<vmem>>, vector<8x128xf32>
    tpu.vector_store %arg12[%c0_29, %c0_30], %45 {strides = array<i32>} : memref<8x128xf32, #tpu.memory_space<vmem>>, vector<8x128xf32>,
    %48 = arith.index_cast %c0_i32 : i32 to index
    %c0_31 = arith.constant 0 : index
    %c0_32 = arith.constant 0 : index
    %49 = vector.load %arg10[%48, %c0_31, %c0_32] : memref<8x8x128xf32, #tpu.memory_space<vmem>>, vector<1x8x128xf32>
    %50 = vector.shape_cast %49 : vector<1x8x128xf32> to vector<8x128xf32>
    %51 = vector.shape_cast %45 : vector<8x128xf32> to vector<1x8x128xf32>
    tpu.vector_store %arg10[%48, %c0_31, %c0_32], %51 {strides = array<i32>} : memref<8x8x128xf32, #tpu.memory_space<vmem>>, vector<1x8x128xf32>,
    %c1_i32 = arith.constant 1 : i32
    %c0_33 = arith.constant 0 : index
    %c0_34 = arith.constant 0 : index
    %52 = vector.load %arg12[%c0_33, %c0_34] : memref<8x128xf32, #tpu.memory_space<vmem>>, vector<8x128xf32>
    %c0_35 = arith.constant 0 : index
    %c0_36 = arith.constant 0 : index
    %53 = vector.load %arg13[%c0_35, %c0_36] : memref<8x128xf32, #tpu.memory_space<vmem>>, vector<8x128xf32>
    %54 = arith.index_cast %c1_i32 : i32 to index
    %c0_37 = arith.constant 0 : index
    %c0_38 = arith.constant 0 : index
    %55 = vector.load %arg11[%54, %c0_37, %c0_38] : memref<8x8x512xf32, #tpu.memory_space<vmem>>, vector<1x8x512xf32>
    %56 = vector.shape_cast %55 : vector<1x8x512xf32> to vector<8x512xf32>
    %c0_39 = arith.constant 0 : index
    %c0_40 = arith.constant 0 : index
    %57 = vector.load %arg2[%c0_39, %c0_40] : memref<128x512xf32, #tpu.memory_space<vmem>>, vector<128x512xf32>
    %cst_41 = arith.constant dense<0.000000e+00> : vector<8x512xf32>
    %58 = tpu.matmul %52, %57, %cst_41 {dimension_numbers = #tpu.dot_dimension_numbers<[1], [0], [0], [1], [0, 0, 1, 1], [], []>} : vector<8x128xf32>, vector<128x512xf32>, vector<8x512xf32> -> vector<8x512xf32>
    %59 = arith.addf %56, %58 : vector<8x512xf32>
    %60 = vector.extract_strided_slice %59 {offsets = [0, 0], sizes = [8, 128], strides = [1, 1]} : vector<8x512xf32> to vector<8x128xf32>
    %61 = arith.negf %60 : vector<8x128xf32>
    %62 = math.exp %61 : vector<8x128xf32>
    %cst_42 = arith.constant 1.000000e+00 : f32
    %63 = vector.broadcast %cst_42 : f32 to vector<8x128xf32>
    %64 = arith.addf %63, %62 : vector<8x128xf32>
    %65 = arith.divf %63, %64 : vector<8x128xf32>
    %66 = vector.extract_strided_slice %59 {offsets = [0, 128], sizes = [8, 128], strides = [1, 1]} : vector<8x512xf32> to vector<8x128xf32>
    %67 = arith.negf %66 : vector<8x128xf32>
    %68 = math.exp %67 : vector<8x128xf32>
    %cst_43 = arith.constant 1.000000e+00 : f32
    %69 = vector.broadcast %cst_43 : f32 to vector<8x128xf32>
    %70 = arith.addf %69, %68 : vector<8x128xf32>
    %71 = arith.divf %69, %70 : vector<8x128xf32>
    %72 = vector.extract_strided_slice %59 {offsets = [0, 256], sizes = [8, 128], strides = [1, 1]} : vector<8x512xf32> to vector<8x128xf32>
    %73 = math.tanh %72 : vector<8x128xf32>
    %74 = vector.extract_strided_slice %59 {offsets = [0, 384], sizes = [8, 128], strides = [1, 1]} : vector<8x512xf32> to vector<8x128xf32>
    %75 = arith.negf %74 : vector<8x128xf32>
    %76 = math.exp %75 : vector<8x128xf32>
    %cst_44 = arith.constant 1.000000e+00 : f32
    %77 = vector.broadcast %cst_44 : f32 to vector<8x128xf32>
    %78 = arith.addf %77, %76 : vector<8x128xf32>
    %79 = arith.divf %77, %78 : vector<8x128xf32>
    %80 = arith.mulf %71, %53 : vector<8x128xf32>
    %81 = arith.mulf %65, %73 : vector<8x128xf32>
    %82 = arith.addf %80, %81 : vector<8x128xf32>
    %83 = math.tanh %82 : vector<8x128xf32>
    %84 = arith.mulf %79, %83 : vector<8x128xf32>
    %c0_45 = arith.constant 0 : index
    %c0_46 = arith.constant 0 : index
    %85 = vector.load %arg13[%c0_45, %c0_46] : memref<8x128xf32, #tpu.memory_space<vmem>>, vector<8x128xf32>
    tpu.vector_store %arg13[%c0_45, %c0_46], %82 {strides = array<i32>} : memref<8x128xf32, #tpu.memory_space<vmem>>, vector<8x128xf32>,
    %c0_47 = arith.constant 0 : index
    %c0_48 = arith.constant 0 : index
    %86 = vector.load %arg12[%c0_47, %c0_48] : memref<8x128xf32, #tpu.memory_space<vmem>>, vector<8x128xf32>
    tpu.vector_store %arg12[%c0_47, %c0_48], %84 {strides = array<i32>} : memref<8x128xf32, #tpu.memory_space<vmem>>, vector<8x128xf32>,
    %87 = arith.index_cast %c1_i32 : i32 to index
    %c0_49 = arith.constant 0 : index
    %c0_50 = arith.constant 0 : index
    %88 = vector.load %arg10[%87, %c0_49, %c0_50] : memref<8x8x128xf32, #tpu.memory_space<vmem>>, vector<1x8x128xf32>
    %89 = vector.shape_cast %88 : vector<1x8x128xf32> to vector<8x128xf32>
    %90 = vector.shape_cast %84 : vector<8x128xf32> to vector<1x8x128xf32>
    tpu.vector_store %arg10[%87, %c0_49, %c0_50], %90 {strides = array<i32>} : memref<8x8x128xf32, #tpu.memory_space<vmem>>, vector<1x8x128xf32>,
    %c2_i32 = arith.constant 2 : i32
    %c0_51 = arith.constant 0 : index
    %c0_52 = arith.constant 0 : index
    %91 = vector.load %arg12[%c0_51, %c0_52] : memref<8x128xf32, #tpu.memory_space<vmem>>, vector<8x128xf32>
    %c0_53 = arith.constant 0 : index
    %c0_54 = arith.constant 0 : index
    %92 = vector.load %arg13[%c0_53, %c0_54] : memref<8x128xf32, #tpu.memory_space<vmem>>, vector<8x128xf32>
    %93 = arith.index_cast %c2_i32 : i32 to index
    %c0_55 = arith.constant 0 : index
    %c0_56 = arith.constant 0 : index
    %94 = vector.load %arg11[%93, %c0_55, %c0_56] : memref<8x8x512xf32, #tpu.memory_space<vmem>>, vector<1x8x512xf32>
    %95 = vector.shape_cast %94 : vector<1x8x512xf32> to vector<8x512xf32>
    %c0_57 = arith.constant 0 : index
    %c0_58 = arith.constant 0 : index
    %96 = vector.load %arg2[%c0_57, %c0_58] : memref<128x512xf32, #tpu.memory_space<vmem>>, vector<128x512xf32>
    %cst_59 = arith.constant dense<0.000000e+00> : vector<8x512xf32>
    %97 = tpu.matmul %91, %96, %cst_59 {dimension_numbers = #tpu.dot_dimension_numbers<[1], [0], [0], [1], [0, 0, 1, 1], [], []>} : vector<8x128xf32>, vector<128x512xf32>, vector<8x512xf32> -> vector<8x512xf32>
    %98 = arith.addf %95, %97 : vector<8x512xf32>
    %99 = vector.extract_strided_slice %98 {offsets = [0, 0], sizes = [8, 128], strides = [1, 1]} : vector<8x512xf32> to vector<8x128xf32>
    %100 = arith.negf %99 : vector<8x128xf32>
    %101 = math.exp %100 : vector<8x128xf32>
    %cst_60 = arith.constant 1.000000e+00 : f32
    %102 = vector.broadcast %cst_60 : f32 to vector<8x128xf32>
    %103 = arith.addf %102, %101 : vector<8x128xf32>
    %104 = arith.divf %102, %103 : vector<8x128xf32>
    %105 = vector.extract_strided_slice %98 {offsets = [0, 128], sizes = [8, 128], strides = [1, 1]} : vector<8x512xf32> to vector<8x128xf32>
    %106 = arith.negf %105 : vector<8x128xf32>
    %107 = math.exp %106 : vector<8x128xf32>
    %cst_61 = arith.constant 1.000000e+00 : f32
    %108 = vector.broadcast %cst_61 : f32 to vector<8x128xf32>
    %109 = arith.addf %108, %107 : vector<8x128xf32>
    %110 = arith.divf %108, %109 : vector<8x128xf32>
    %111 = vector.extract_strided_slice %98 {offsets = [0, 256], sizes = [8, 128], strides = [1, 1]} : vector<8x512xf32> to vector<8x128xf32>
    %112 = math.tanh %111 : vector<8x128xf32>
    %113 = vector.extract_strided_slice %98 {offsets = [0, 384], sizes = [8, 128], strides = [1, 1]} : vector<8x512xf32> to vector<8x128xf32>
    %114 = arith.negf %113 : vector<8x128xf32>
    %115 = math.exp %114 : vector<8x128xf32>
    %cst_62 = arith.constant 1.000000e+00 : f32
    %116 = vector.broadcast %cst_62 : f32 to vector<8x128xf32>
    %117 = arith.addf %116, %115 : vector<8x128xf32>
    %118 = arith.divf %116, %117 : vector<8x128xf32>
    %119 = arith.mulf %110, %92 : vector<8x128xf32>
    %120 = arith.mulf %104, %112 : vector<8x128xf32>
    %121 = arith.addf %119, %120 : vector<8x128xf32>
    %122 = math.tanh %121 : vector<8x128xf32>
    %123 = arith.mulf %118, %122 : vector<8x128xf32>
    %c0_63 = arith.constant 0 : index
    %c0_64 = arith.constant 0 : index
    %124 = vector.load %arg13[%c0_63, %c0_64] : memref<8x128xf32, #tpu.memory_space<vmem>>, vector<8x128xf32>
    tpu.vector_store %arg13[%c0_63, %c0_64], %121 {strides = array<i32>} : memref<8x128xf32, #tpu.memory_space<vmem>>, vector<8x128xf32>,
    %c0_65 = arith.constant 0 : index
    %c0_66 = arith.constant 0 : index
    %125 = vector.load %arg12[%c0_65, %c0_66] : memref<8x128xf32, #tpu.memory_space<vmem>>, vector<8x128xf32>
    tpu.vector_store %arg12[%c0_65, %c0_66], %123 {strides = array<i32>} : memref<8x128xf32, #tpu.memory_space<vmem>>, vector<8x128xf32>,
    %126 = arith.index_cast %c2_i32 : i32 to index
    %c0_67 = arith.constant 0 : index
    %c0_68 = arith.constant 0 : index
    %127 = vector.load %arg10[%126, %c0_67, %c0_68] : memref<8x8x128xf32, #tpu.memory_space<vmem>>, vector<1x8x128xf32>
    %128 = vector.shape_cast %127 : vector<1x8x128xf32> to vector<8x128xf32>
    %129 = vector.shape_cast %123 : vector<8x128xf32> to vector<1x8x128xf32>
    tpu.vector_store %arg10[%126, %c0_67, %c0_68], %129 {strides = array<i32>} : memref<8x8x128xf32, #tpu.memory_space<vmem>>, vector<1x8x128xf32>,
    %c3_i32 = arith.constant 3 : i32
    %c0_69 = arith.constant 0 : index
    %c0_70 = arith.constant 0 : index
    %130 = vector.load %arg12[%c0_69, %c0_70] : memref<8x128xf32, #tpu.memory_space<vmem>>, vector<8x128xf32>
    %c0_71 = arith.constant 0 : index
    %c0_72 = arith.constant 0 : index
    %131 = vector.load %arg13[%c0_71, %c0_72] : memref<8x128xf32, #tpu.memory_space<vmem>>, vector<8x128xf32>
    %132 = arith.index_cast %c3_i32 : i32 to index
    %c0_73 = arith.constant 0 : index
    %c0_74 = arith.constant 0 : index
    %133 = vector.load %arg11[%132, %c0_73, %c0_74] : memref<8x8x512xf32, #tpu.memory_space<vmem>>, vector<1x8x512xf32>
    %134 = vector.shape_cast %133 : vector<1x8x512xf32> to vector<8x512xf32>
    %c0_75 = arith.constant 0 : index
    %c0_76 = arith.constant 0 : index
    %135 = vector.load %arg2[%c0_75, %c0_76] : memref<128x512xf32, #tpu.memory_space<vmem>>, vector<128x512xf32>
    %cst_77 = arith.constant dense<0.000000e+00> : vector<8x512xf32>
    %136 = tpu.matmul %130, %135, %cst_77 {dimension_numbers = #tpu.dot_dimension_numbers<[1], [0], [0], [1], [0, 0, 1, 1], [], []>} : vector<8x128xf32>, vector<128x512xf32>, vector<8x512xf32> -> vector<8x512xf32>
    %137 = arith.addf %134, %136 : vector<8x512xf32>
    %138 = vector.extract_strided_slice %137 {offsets = [0, 0], sizes = [8, 128], strides = [1, 1]} : vector<8x512xf32> to vector<8x128xf32>
    %139 = arith.negf %138 : vector<8x128xf32>
    %140 = math.exp %139 : vector<8x128xf32>
    %cst_78 = arith.constant 1.000000e+00 : f32
    %141 = vector.broadcast %cst_78 : f32 to vector<8x128xf32>
    %142 = arith.addf %141, %140 : vector<8x128xf32>
    %143 = arith.divf %141, %142 : vector<8x128xf32>
    %144 = vector.extract_strided_slice %137 {offsets = [0, 128], sizes = [8, 128], strides = [1, 1]} : vector<8x512xf32> to vector<8x128xf32>
    %145 = arith.negf %144 : vector<8x128xf32>
    %146 = math.exp %145 : vector<8x128xf32>
    %cst_79 = arith.constant 1.000000e+00 : f32
    %147 = vector.broadcast %cst_79 : f32 to vector<8x128xf32>
    %148 = arith.addf %147, %146 : vector<8x128xf32>
    %149 = arith.divf %147, %148 : vector<8x128xf32>
    %150 = vector.extract_strided_slice %137 {offsets = [0, 256], sizes = [8, 128], strides = [1, 1]} : vector<8x512xf32> to vector<8x128xf32>
    %151 = math.tanh %150 : vector<8x128xf32>
    %152 = vector.extract_strided_slice %137 {offsets = [0, 384], sizes = [8, 128], strides = [1, 1]} : vector<8x512xf32> to vector<8x128xf32>
    %153 = arith.negf %152 : vector<8x128xf32>
    %154 = math.exp %153 : vector<8x128xf32>
    %cst_80 = arith.constant 1.000000e+00 : f32
    %155 = vector.broadcast %cst_80 : f32 to vector<8x128xf32>
    %156 = arith.addf %155, %154 : vector<8x128xf32>
    %157 = arith.divf %155, %156 : vector<8x128xf32>
    %158 = arith.mulf %149, %131 : vector<8x128xf32>
    %159 = arith.mulf %143, %151 : vector<8x128xf32>
    %160 = arith.addf %158, %159 : vector<8x128xf32>
    %161 = math.tanh %160 : vector<8x128xf32>
    %162 = arith.mulf %157, %161 : vector<8x128xf32>
    %c0_81 = arith.constant 0 : index
    %c0_82 = arith.constant 0 : index
    %163 = vector.load %arg13[%c0_81, %c0_82] : memref<8x128xf32, #tpu.memory_space<vmem>>, vector<8x128xf32>
    tpu.vector_store %arg13[%c0_81, %c0_82], %160 {strides = array<i32>} : memref<8x128xf32, #tpu.memory_space<vmem>>, vector<8x128xf32>,
    %c0_83 = arith.constant 0 : index
    %c0_84 = arith.constant 0 : index
    %164 = vector.load %arg12[%c0_83, %c0_84] : memref<8x128xf32, #tpu.memory_space<vmem>>, vector<8x128xf32>
    tpu.vector_store %arg12[%c0_83, %c0_84], %162 {strides = array<i32>} : memref<8x128xf32, #tpu.memory_space<vmem>>, vector<8x128xf32>,
    %165 = arith.index_cast %c3_i32 : i32 to index
    %c0_85 = arith.constant 0 : index
    %c0_86 = arith.constant 0 : index
    %166 = vector.load %arg10[%165, %c0_85, %c0_86] : memref<8x8x128xf32, #tpu.memory_space<vmem>>, vector<1x8x128xf32>
    %167 = vector.shape_cast %166 : vector<1x8x128xf32> to vector<8x128xf32>
    %168 = vector.shape_cast %162 : vector<8x128xf32> to vector<1x8x128xf32>
    tpu.vector_store %arg10[%165, %c0_85, %c0_86], %168 {strides = array<i32>} : memref<8x8x128xf32, #tpu.memory_space<vmem>>, vector<1x8x128xf32>,
    %c4_i32 = arith.constant 4 : i32
    %c0_87 = arith.constant 0 : index
    %c0_88 = arith.constant 0 : index
    %169 = vector.load %arg12[%c0_87, %c0_88] : memref<8x128xf32, #tpu.memory_space<vmem>>, vector<8x128xf32>
    %c0_89 = arith.constant 0 : index
    %c0_90 = arith.constant 0 : index
    %170 = vector.load %arg13[%c0_89, %c0_90] : memref<8x128xf32, #tpu.memory_space<vmem>>, vector<8x128xf32>
    %171 = arith.index_cast %c4_i32 : i32 to index
    %c0_91 = arith.constant 0 : index
    %c0_92 = arith.constant 0 : index
    %172 = vector.load %arg11[%171, %c0_91, %c0_92] : memref<8x8x512xf32, #tpu.memory_space<vmem>>, vector<1x8x512xf32>
    %173 = vector.shape_cast %172 : vector<1x8x512xf32> to vector<8x512xf32>
    %c0_93 = arith.constant 0 : index
    %c0_94 = arith.constant 0 : index
    %174 = vector.load %arg2[%c0_93, %c0_94] : memref<128x512xf32, #tpu.memory_space<vmem>>, vector<128x512xf32>
    %cst_95 = arith.constant dense<0.000000e+00> : vector<8x512xf32>
    %175 = tpu.matmul %169, %174, %cst_95 {dimension_numbers = #tpu.dot_dimension_numbers<[1], [0], [0], [1], [0, 0, 1, 1], [], []>} : vector<8x128xf32>, vector<128x512xf32>, vector<8x512xf32> -> vector<8x512xf32>
    %176 = arith.addf %173, %175 : vector<8x512xf32>
    %177 = vector.extract_strided_slice %176 {offsets = [0, 0], sizes = [8, 128], strides = [1, 1]} : vector<8x512xf32> to vector<8x128xf32>
    %178 = arith.negf %177 : vector<8x128xf32>
    %179 = math.exp %178 : vector<8x128xf32>
    %cst_96 = arith.constant 1.000000e+00 : f32
    %180 = vector.broadcast %cst_96 : f32 to vector<8x128xf32>
    %181 = arith.addf %180, %179 : vector<8x128xf32>
    %182 = arith.divf %180, %181 : vector<8x128xf32>
    %183 = vector.extract_strided_slice %176 {offsets = [0, 128], sizes = [8, 128], strides = [1, 1]} : vector<8x512xf32> to vector<8x128xf32>
    %184 = arith.negf %183 : vector<8x128xf32>
    %185 = math.exp %184 : vector<8x128xf32>
    %cst_97 = arith.constant 1.000000e+00 : f32
    %186 = vector.broadcast %cst_97 : f32 to vector<8x128xf32>
    %187 = arith.addf %186, %185 : vector<8x128xf32>
    %188 = arith.divf %186, %187 : vector<8x128xf32>
    %189 = vector.extract_strided_slice %176 {offsets = [0, 256], sizes = [8, 128], strides = [1, 1]} : vector<8x512xf32> to vector<8x128xf32>
    %190 = math.tanh %189 : vector<8x128xf32>
    %191 = vector.extract_strided_slice %176 {offsets = [0, 384], sizes = [8, 128], strides = [1, 1]} : vector<8x512xf32> to vector<8x128xf32>
    %192 = arith.negf %191 : vector<8x128xf32>
    %193 = math.exp %192 : vector<8x128xf32>
    %cst_98 = arith.constant 1.000000e+00 : f32
    %194 = vector.broadcast %cst_98 : f32 to vector<8x128xf32>
    %195 = arith.addf %194, %193 : vector<8x128xf32>
    %196 = arith.divf %194, %195 : vector<8x128xf32>
    %197 = arith.mulf %188, %170 : vector<8x128xf32>
    %198 = arith.mulf %182, %190 : vector<8x128xf32>
    %199 = arith.addf %197, %198 : vector<8x128xf32>
    %200 = math.tanh %199 : vector<8x128xf32>
    %201 = arith.mulf %196, %200 : vector<8x128xf32>
    %c0_99 = arith.constant 0 : index
    %c0_100 = arith.constant 0 : index
    %202 = vector.load %arg13[%c0_99, %c0_100] : memref<8x128xf32, #tpu.memory_space<vmem>>, vector<8x128xf32>
    tpu.vector_store %arg13[%c0_99, %c0_100], %199 {strides = array<i32>} : memref<8x128xf32, #tpu.memory_space<vmem>>, vector<8x128xf32>,
    %c0_101 = arith.constant 0 : index
    %c0_102 = arith.constant 0 : index
    %203 = vector.load %arg12[%c0_101, %c0_102] : memref<8x128xf32, #tpu.memory_space<vmem>>, vector<8x128xf32>
    tpu.vector_store %arg12[%c0_101, %c0_102], %201 {strides = array<i32>} : memref<8x128xf32, #tpu.memory_space<vmem>>, vector<8x128xf32>,
    %204 = arith.index_cast %c4_i32 : i32 to index
    %c0_103 = arith.constant 0 : index
    %c0_104 = arith.constant 0 : index
    %205 = vector.load %arg10[%204, %c0_103, %c0_104] : memref<8x8x128xf32, #tpu.memory_space<vmem>>, vector<1x8x128xf32>
    %206 = vector.shape_cast %205 : vector<1x8x128xf32> to vector<8x128xf32>
    %207 = vector.shape_cast %201 : vector<8x128xf32> to vector<1x8x128xf32>
    tpu.vector_store %arg10[%204, %c0_103, %c0_104], %207 {strides = array<i32>} : memref<8x8x128xf32, #tpu.memory_space<vmem>>, vector<1x8x128xf32>,
    %c5_i32 = arith.constant 5 : i32
    %c0_105 = arith.constant 0 : index
    %c0_106 = arith.constant 0 : index
    %208 = vector.load %arg12[%c0_105, %c0_106] : memref<8x128xf32, #tpu.memory_space<vmem>>, vector<8x128xf32>
    %c0_107 = arith.constant 0 : index
    %c0_108 = arith.constant 0 : index
    %209 = vector.load %arg13[%c0_107, %c0_108] : memref<8x128xf32, #tpu.memory_space<vmem>>, vector<8x128xf32>
    %210 = arith.index_cast %c5_i32 : i32 to index
    %c0_109 = arith.constant 0 : index
    %c0_110 = arith.constant 0 : index
    %211 = vector.load %arg11[%210, %c0_109, %c0_110] : memref<8x8x512xf32, #tpu.memory_space<vmem>>, vector<1x8x512xf32>
    %212 = vector.shape_cast %211 : vector<1x8x512xf32> to vector<8x512xf32>
    %c0_111 = arith.constant 0 : index
    %c0_112 = arith.constant 0 : index
    %213 = vector.load %arg2[%c0_111, %c0_112] : memref<128x512xf32, #tpu.memory_space<vmem>>, vector<128x512xf32>
    %cst_113 = arith.constant dense<0.000000e+00> : vector<8x512xf32>
    %214 = tpu.matmul %208, %213, %cst_113 {dimension_numbers = #tpu.dot_dimension_numbers<[1], [0], [0], [1], [0, 0, 1, 1], [], []>} : vector<8x128xf32>, vector<128x512xf32>, vector<8x512xf32> -> vector<8x512xf32>
    %215 = arith.addf %212, %214 : vector<8x512xf32>
    %216 = vector.extract_strided_slice %215 {offsets = [0, 0], sizes = [8, 128], strides = [1, 1]} : vector<8x512xf32> to vector<8x128xf32>
    %217 = arith.negf %216 : vector<8x128xf32>
    %218 = math.exp %217 : vector<8x128xf32>
    %cst_114 = arith.constant 1.000000e+00 : f32
    %219 = vector.broadcast %cst_114 : f32 to vector<8x128xf32>
    %220 = arith.addf %219, %218 : vector<8x128xf32>
    %221 = arith.divf %219, %220 : vector<8x128xf32>
    %222 = vector.extract_strided_slice %215 {offsets = [0, 128], sizes = [8, 128], strides = [1, 1]} : vector<8x512xf32> to vector<8x128xf32>
    %223 = arith.negf %222 : vector<8x128xf32>
    %224 = math.exp %223 : vector<8x128xf32>
    %cst_115 = arith.constant 1.000000e+00 : f32
    %225 = vector.broadcast %cst_115 : f32 to vector<8x128xf32>
    %226 = arith.addf %225, %224 : vector<8x128xf32>
    %227 = arith.divf %225, %226 : vector<8x128xf32>
    %228 = vector.extract_strided_slice %215 {offsets = [0, 256], sizes = [8, 128], strides = [1, 1]} : vector<8x512xf32> to vector<8x128xf32>
    %229 = math.tanh %228 : vector<8x128xf32>
    %230 = vector.extract_strided_slice %215 {offsets = [0, 384], sizes = [8, 128], strides = [1, 1]} : vector<8x512xf32> to vector<8x128xf32>
    %231 = arith.negf %230 : vector<8x128xf32>
    %232 = math.exp %231 : vector<8x128xf32>
    %cst_116 = arith.constant 1.000000e+00 : f32
    %233 = vector.broadcast %cst_116 : f32 to vector<8x128xf32>
    %234 = arith.addf %233, %232 : vector<8x128xf32>
    %235 = arith.divf %233, %234 : vector<8x128xf32>
    %236 = arith.mulf %227, %209 : vector<8x128xf32>
    %237 = arith.mulf %221, %229 : vector<8x128xf32>
    %238 = arith.addf %236, %237 : vector<8x128xf32>
    %239 = math.tanh %238 : vector<8x128xf32>
    %240 = arith.mulf %235, %239 : vector<8x128xf32>
    %c0_117 = arith.constant 0 : index
    %c0_118 = arith.constant 0 : index
    %241 = vector.load %arg13[%c0_117, %c0_118] : memref<8x128xf32, #tpu.memory_space<vmem>>, vector<8x128xf32>
    tpu.vector_store %arg13[%c0_117, %c0_118], %238 {strides = array<i32>} : memref<8x128xf32, #tpu.memory_space<vmem>>, vector<8x128xf32>,
    %c0_119 = arith.constant 0 : index
    %c0_120 = arith.constant 0 : index
    %242 = vector.load %arg12[%c0_119, %c0_120] : memref<8x128xf32, #tpu.memory_space<vmem>>, vector<8x128xf32>
    tpu.vector_store %arg12[%c0_119, %c0_120], %240 {strides = array<i32>} : memref<8x128xf32, #tpu.memory_space<vmem>>, vector<8x128xf32>,
    %243 = arith.index_cast %c5_i32 : i32 to index
    %c0_121 = arith.constant 0 : index
    %c0_122 = arith.constant 0 : index
    %244 = vector.load %arg10[%243, %c0_121, %c0_122] : memref<8x8x128xf32, #tpu.memory_space<vmem>>, vector<1x8x128xf32>
    %245 = vector.shape_cast %244 : vector<1x8x128xf32> to vector<8x128xf32>
    %246 = vector.shape_cast %240 : vector<8x128xf32> to vector<1x8x128xf32>
    tpu.vector_store %arg10[%243, %c0_121, %c0_122], %246 {strides = array<i32>} : memref<8x8x128xf32, #tpu.memory_space<vmem>>, vector<1x8x128xf32>,
    %c6_i32 = arith.constant 6 : i32
    %c0_123 = arith.constant 0 : index
    %c0_124 = arith.constant 0 : index
    %247 = vector.load %arg12[%c0_123, %c0_124] : memref<8x128xf32, #tpu.memory_space<vmem>>, vector<8x128xf32>
    %c0_125 = arith.constant 0 : index
    %c0_126 = arith.constant 0 : index
    %248 = vector.load %arg13[%c0_125, %c0_126] : memref<8x128xf32, #tpu.memory_space<vmem>>, vector<8x128xf32>
    %249 = arith.index_cast %c6_i32 : i32 to index
    %c0_127 = arith.constant 0 : index
    %c0_128 = arith.constant 0 : index
    %250 = vector.load %arg11[%249, %c0_127, %c0_128] : memref<8x8x512xf32, #tpu.memory_space<vmem>>, vector<1x8x512xf32>
    %251 = vector.shape_cast %250 : vector<1x8x512xf32> to vector<8x512xf32>
    %c0_129 = arith.constant 0 : index
    %c0_130 = arith.constant 0 : index
    %252 = vector.load %arg2[%c0_129, %c0_130] : memref<128x512xf32, #tpu.memory_space<vmem>>, vector<128x512xf32>
    %cst_131 = arith.constant dense<0.000000e+00> : vector<8x512xf32>
    %253 = tpu.matmul %247, %252, %cst_131 {dimension_numbers = #tpu.dot_dimension_numbers<[1], [0], [0], [1], [0, 0, 1, 1], [], []>} : vector<8x128xf32>, vector<128x512xf32>, vector<8x512xf32> -> vector<8x512xf32>
    %254 = arith.addf %251, %253 : vector<8x512xf32>
    %255 = vector.extract_strided_slice %254 {offsets = [0, 0], sizes = [8, 128], strides = [1, 1]} : vector<8x512xf32> to vector<8x128xf32>
    %256 = arith.negf %255 : vector<8x128xf32>
    %257 = math.exp %256 : vector<8x128xf32>
    %cst_132 = arith.constant 1.000000e+00 : f32
    %258 = vector.broadcast %cst_132 : f32 to vector<8x128xf32>
    %259 = arith.addf %258, %257 : vector<8x128xf32>
    %260 = arith.divf %258, %259 : vector<8x128xf32>
    %261 = vector.extract_strided_slice %254 {offsets = [0, 128], sizes = [8, 128], strides = [1, 1]} : vector<8x512xf32> to vector<8x128xf32>
    %262 = arith.negf %261 : vector<8x128xf32>
    %263 = math.exp %262 : vector<8x128xf32>
    %cst_133 = arith.constant 1.000000e+00 : f32
    %264 = vector.broadcast %cst_133 : f32 to vector<8x128xf32>
    %265 = arith.addf %264, %263 : vector<8x128xf32>
    %266 = arith.divf %264, %265 : vector<8x128xf32>
    %267 = vector.extract_strided_slice %254 {offsets = [0, 256], sizes = [8, 128], strides = [1, 1]} : vector<8x512xf32> to vector<8x128xf32>
    %268 = math.tanh %267 : vector<8x128xf32>
    %269 = vector.extract_strided_slice %254 {offsets = [0, 384], sizes = [8, 128], strides = [1, 1]} : vector<8x512xf32> to vector<8x128xf32>
    %270 = arith.negf %269 : vector<8x128xf32>
    %271 = math.exp %270 : vector<8x128xf32>
    %cst_134 = arith.constant 1.000000e+00 : f32
    %272 = vector.broadcast %cst_134 : f32 to vector<8x128xf32>
    %273 = arith.addf %272, %271 : vector<8x128xf32>
    %274 = arith.divf %272, %273 : vector<8x128xf32>
    %275 = arith.mulf %266, %248 : vector<8x128xf32>
    %276 = arith.mulf %260, %268 : vector<8x128xf32>
    %277 = arith.addf %275, %276 : vector<8x128xf32>
    %278 = math.tanh %277 : vector<8x128xf32>
    %279 = arith.mulf %274, %278 : vector<8x128xf32>
    %c0_135 = arith.constant 0 : index
    %c0_136 = arith.constant 0 : index
    %280 = vector.load %arg13[%c0_135, %c0_136] : memref<8x128xf32, #tpu.memory_space<vmem>>, vector<8x128xf32>
    tpu.vector_store %arg13[%c0_135, %c0_136], %277 {strides = array<i32>} : memref<8x128xf32, #tpu.memory_space<vmem>>, vector<8x128xf32>,
    %c0_137 = arith.constant 0 : index
    %c0_138 = arith.constant 0 : index
    %281 = vector.load %arg12[%c0_137, %c0_138] : memref<8x128xf32, #tpu.memory_space<vmem>>, vector<8x128xf32>
    tpu.vector_store %arg12[%c0_137, %c0_138], %279 {strides = array<i32>} : memref<8x128xf32, #tpu.memory_space<vmem>>, vector<8x128xf32>,
    %282 = arith.index_cast %c6_i32 : i32 to index
    %c0_139 = arith.constant 0 : index
    %c0_140 = arith.constant 0 : index
    %283 = vector.load %arg10[%282, %c0_139, %c0_140] : memref<8x8x128xf32, #tpu.memory_space<vmem>>, vector<1x8x128xf32>
    %284 = vector.shape_cast %283 : vector<1x8x128xf32> to vector<8x128xf32>
    %285 = vector.shape_cast %279 : vector<8x128xf32> to vector<1x8x128xf32>
    tpu.vector_store %arg10[%282, %c0_139, %c0_140], %285 {strides = array<i32>} : memref<8x8x128xf32, #tpu.memory_space<vmem>>, vector<1x8x128xf32>,
    %c7_i32 = arith.constant 7 : i32
    %c0_141 = arith.constant 0 : index
    %c0_142 = arith.constant 0 : index
    %286 = vector.load %arg12[%c0_141, %c0_142] : memref<8x128xf32, #tpu.memory_space<vmem>>, vector<8x128xf32>
    %c0_143 = arith.constant 0 : index
    %c0_144 = arith.constant 0 : index
    %287 = vector.load %arg13[%c0_143, %c0_144] : memref<8x128xf32, #tpu.memory_space<vmem>>, vector<8x128xf32>
    %288 = arith.index_cast %c7_i32 : i32 to index
    %c0_145 = arith.constant 0 : index
    %c0_146 = arith.constant 0 : index
    %289 = vector.load %arg11[%288, %c0_145, %c0_146] : memref<8x8x512xf32, #tpu.memory_space<vmem>>, vector<1x8x512xf32>
    %290 = vector.shape_cast %289 : vector<1x8x512xf32> to vector<8x512xf32>
    %c0_147 = arith.constant 0 : index
    %c0_148 = arith.constant 0 : index
    %291 = vector.load %arg2[%c0_147, %c0_148] : memref<128x512xf32, #tpu.memory_space<vmem>>, vector<128x512xf32>
    %cst_149 = arith.constant dense<0.000000e+00> : vector<8x512xf32>
    %292 = tpu.matmul %286, %291, %cst_149 {dimension_numbers = #tpu.dot_dimension_numbers<[1], [0], [0], [1], [0, 0, 1, 1], [], []>} : vector<8x128xf32>, vector<128x512xf32>, vector<8x512xf32> -> vector<8x512xf32>
    %293 = arith.addf %290, %292 : vector<8x512xf32>
    %294 = vector.extract_strided_slice %293 {offsets = [0, 0], sizes = [8, 128], strides = [1, 1]} : vector<8x512xf32> to vector<8x128xf32>
    %295 = arith.negf %294 : vector<8x128xf32>
    %296 = math.exp %295 : vector<8x128xf32>
    %cst_150 = arith.constant 1.000000e+00 : f32
    %297 = vector.broadcast %cst_150 : f32 to vector<8x128xf32>
    %298 = arith.addf %297, %296 : vector<8x128xf32>
    %299 = arith.divf %297, %298 : vector<8x128xf32>
    %300 = vector.extract_strided_slice %293 {offsets = [0, 128], sizes = [8, 128], strides = [1, 1]} : vector<8x512xf32> to vector<8x128xf32>
    %301 = arith.negf %300 : vector<8x128xf32>
    %302 = math.exp %301 : vector<8x128xf32>
    %cst_151 = arith.constant 1.000000e+00 : f32
    %303 = vector.broadcast %cst_151 : f32 to vector<8x128xf32>
    %304 = arith.addf %303, %302 : vector<8x128xf32>
    %305 = arith.divf %303, %304 : vector<8x128xf32>
    %306 = vector.extract_strided_slice %293 {offsets = [0, 256], sizes = [8, 128], strides = [1, 1]} : vector<8x512xf32> to vector<8x128xf32>
    %307 = math.tanh %306 : vector<8x128xf32>
    %308 = vector.extract_strided_slice %293 {offsets = [0, 384], sizes = [8, 128], strides = [1, 1]} : vector<8x512xf32> to vector<8x128xf32>
    %309 = arith.negf %308 : vector<8x128xf32>
    %310 = math.exp %309 : vector<8x128xf32>
    %cst_152 = arith.constant 1.000000e+00 : f32
    %311 = vector.broadcast %cst_152 : f32 to vector<8x128xf32>
    %312 = arith.addf %311, %310 : vector<8x128xf32>
    %313 = arith.divf %311, %312 : vector<8x128xf32>
    %314 = arith.mulf %305, %287 : vector<8x128xf32>
    %315 = arith.mulf %299, %307 : vector<8x128xf32>
    %316 = arith.addf %314, %315 : vector<8x128xf32>
    %317 = math.tanh %316 : vector<8x128xf32>
    %318 = arith.mulf %313, %317 : vector<8x128xf32>
    %c0_153 = arith.constant 0 : index
    %c0_154 = arith.constant 0 : index
    %319 = vector.load %arg13[%c0_153, %c0_154] : memref<8x128xf32, #tpu.memory_space<vmem>>, vector<8x128xf32>
    tpu.vector_store %arg13[%c0_153, %c0_154], %316 {strides = array<i32>} : memref<8x128xf32, #tpu.memory_space<vmem>>, vector<8x128xf32>,
    %c0_155 = arith.constant 0 : index
    %c0_156 = arith.constant 0 : index
    %320 = vector.load %arg12[%c0_155, %c0_156] : memref<8x128xf32, #tpu.memory_space<vmem>>, vector<8x128xf32>
    tpu.vector_store %arg12[%c0_155, %c0_156], %318 {strides = array<i32>} : memref<8x128xf32, #tpu.memory_space<vmem>>, vector<8x128xf32>,
    %321 = arith.index_cast %c7_i32 : i32 to index
    %c0_157 = arith.constant 0 : index
    %c0_158 = arith.constant 0 : index
    %322 = vector.load %arg10[%321, %c0_157, %c0_158] : memref<8x8x128xf32, #tpu.memory_space<vmem>>, vector<1x8x128xf32>
    %323 = vector.shape_cast %322 : vector<1x8x128xf32> to vector<8x128xf32>
    %324 = vector.shape_cast %318 : vector<8x128xf32> to vector<1x8x128xf32>
    tpu.vector_store %arg10[%321, %c0_157, %c0_158], %324 {strides = array<i32>} : memref<8x8x128xf32, #tpu.memory_space<vmem>>, vector<1x8x128xf32>,
    %c8_i32 = arith.constant 8 : i32
    %c0_159 = arith.constant 0 : index
    %c0_160 = arith.constant 0 : index
    %c0_161 = arith.constant 0 : index
    %325 = vector.load %arg10[%c0_159, %c0_160, %c0_161] : memref<8x8x128xf32, #tpu.memory_space<vmem>>, vector<8x8x128xf32>
    %326 = vector.shape_cast %325 : vector<8x8x128xf32> to vector<64x128xf32>
    %c0_162 = arith.constant 0 : index
    %c0_163 = arith.constant 0 : index
    %327 = vector.load %arg4[%c0_162, %c0_163] : memref<128x512xf32, #tpu.memory_space<vmem>>, vector<128x512xf32>
    %cst_164 = arith.constant dense<0.000000e+00> : vector<64x512xf32>
    %328 = tpu.matmul %326, %327, %cst_164 {dimension_numbers = #tpu.dot_dimension_numbers<[1], [0], [0], [1], [0, 0, 1, 1], [], []>} : vector<64x128xf32>, vector<128x512xf32>, vector<64x512xf32> -> vector<64x512xf32>
    %c0_165 = arith.constant 0 : index
    %c0_166 = arith.constant 0 : index
    %329 = vector.load %arg6[%c0_165, %c0_166] : memref<1x512xf32, #tpu.memory_space<vmem>>, vector<1x512xf32>
    %330 = vector.broadcast %329 : vector<1x512xf32> to vector<64x512xf32>
    %331 = arith.addf %328, %330 : vector<64x512xf32>
    %332 = vector.shape_cast %331 : vector<64x512xf32> to vector<8x8x512xf32>
    %c0_167 = arith.constant 0 : index
    %c0_168 = arith.constant 0 : index
    %c0_169 = arith.constant 0 : index
    %333 = vector.load %arg11[%c0_167, %c0_168, %c0_169] : memref<8x8x512xf32, #tpu.memory_space<vmem>>, vector<8x8x512xf32>
    tpu.vector_store %arg11[%c0_167, %c0_168, %c0_169], %332 {strides = array<i32>} : memref<8x8x512xf32, #tpu.memory_space<vmem>>, vector<8x8x512xf32>,
    %cst_170 = arith.constant 0.000000e+00 : f32
    %334 = vector.broadcast %cst_170 : f32 to vector<8x128xf32>
    %c0_171 = arith.constant 0 : index
    %c0_172 = arith.constant 0 : index
    %335 = vector.load %arg12[%c0_171, %c0_172] : memref<8x128xf32, #tpu.memory_space<vmem>>, vector<8x128xf32>
    tpu.vector_store %arg12[%c0_171, %c0_172], %334 {strides = array<i32>} : memref<8x128xf32, #tpu.memory_space<vmem>>, vector<8x128xf32>,
    %cst_173 = arith.constant 0.000000e+00 : f32
    %336 = vector.broadcast %cst_173 : f32 to vector<8x128xf32>
    %c0_174 = arith.constant 0 : index
    %c0_175 = arith.constant 0 : index
    %337 = vector.load %arg13[%c0_174, %c0_175] : memref<8x128xf32, #tpu.memory_space<vmem>>, vector<8x128xf32>
    tpu.vector_store %arg13[%c0_174, %c0_175], %336 {strides = array<i32>} : memref<8x128xf32, #tpu.memory_space<vmem>>, vector<8x128xf32>,
    %c0_i32_176 = arith.constant 0 : i32
    %c0_177 = arith.constant 0 : index
    %c0_178 = arith.constant 0 : index
    %338 = vector.load %arg12[%c0_177, %c0_178] : memref<8x128xf32, #tpu.memory_space<vmem>>, vector<8x128xf32>
    %c0_179 = arith.constant 0 : index
    %c0_180 = arith.constant 0 : index
    %339 = vector.load %arg13[%c0_179, %c0_180] : memref<8x128xf32, #tpu.memory_space<vmem>>, vector<8x128xf32>
    %340 = arith.index_cast %c0_i32_176 : i32 to index
    %c0_181 = arith.constant 0 : index
    %c0_182 = arith.constant 0 : index
    %341 = vector.load %arg11[%340, %c0_181, %c0_182] : memref<8x8x512xf32, #tpu.memory_space<vmem>>, vector<1x8x512xf32>
    %342 = vector.shape_cast %341 : vector<1x8x512xf32> to vector<8x512xf32>
    %c0_183 = arith.constant 0 : index
    %c0_184 = arith.constant 0 : index
    %343 = vector.load %arg5[%c0_183, %c0_184] : memref<128x512xf32, #tpu.memory_space<vmem>>, vector<128x512xf32>
    %cst_185 = arith.constant dense<0.000000e+00> : vector<8x512xf32>
    %344 = tpu.matmul %338, %343, %cst_185 {dimension_numbers = #tpu.dot_dimension_numbers<[1], [0], [0], [1], [0, 0, 1, 1], [], []>} : vector<8x128xf32>, vector<128x512xf32>, vector<8x512xf32> -> vector<8x512xf32>
    %345 = arith.addf %342, %344 : vector<8x512xf32>
    %346 = vector.extract_strided_slice %345 {offsets = [0, 0], sizes = [8, 128], strides = [1, 1]} : vector<8x512xf32> to vector<8x128xf32>
    %347 = arith.negf %346 : vector<8x128xf32>
    %348 = math.exp %347 : vector<8x128xf32>
    %cst_186 = arith.constant 1.000000e+00 : f32
    %349 = vector.broadcast %cst_186 : f32 to vector<8x128xf32>
    %350 = arith.addf %349, %348 : vector<8x128xf32>
    %351 = arith.divf %349, %350 : vector<8x128xf32>
    %352 = vector.extract_strided_slice %345 {offsets = [0, 128], sizes = [8, 128], strides = [1, 1]} : vector<8x512xf32> to vector<8x128xf32>
    %353 = arith.negf %352 : vector<8x128xf32>
    %354 = math.exp %353 : vector<8x128xf32>
    %cst_187 = arith.constant 1.000000e+00 : f32
    %355 = vector.broadcast %cst_187 : f32 to vector<8x128xf32>
    %356 = arith.addf %355, %354 : vector<8x128xf32>
    %357 = arith.divf %355, %356 : vector<8x128xf32>
    %358 = vector.extract_strided_slice %345 {offsets = [0, 256], sizes = [8, 128], strides = [1, 1]} : vector<8x512xf32> to vector<8x128xf32>
    %359 = math.tanh %358 : vector<8x128xf32>
    %360 = vector.extract_strided_slice %345 {offsets = [0, 384], sizes = [8, 128], strides = [1, 1]} : vector<8x512xf32> to vector<8x128xf32>
    %361 = arith.negf %360 : vector<8x128xf32>
    %362 = math.exp %361 : vector<8x128xf32>
    %cst_188 = arith.constant 1.000000e+00 : f32
    %363 = vector.broadcast %cst_188 : f32 to vector<8x128xf32>
    %364 = arith.addf %363, %362 : vector<8x128xf32>
    %365 = arith.divf %363, %364 : vector<8x128xf32>
    %366 = arith.mulf %357, %339 : vector<8x128xf32>
    %367 = arith.mulf %351, %359 : vector<8x128xf32>
    %368 = arith.addf %366, %367 : vector<8x128xf32>
    %369 = math.tanh %368 : vector<8x128xf32>
    %370 = arith.mulf %365, %369 : vector<8x128xf32>
    %c0_189 = arith.constant 0 : index
    %c0_190 = arith.constant 0 : index
    %371 = vector.load %arg13[%c0_189, %c0_190] : memref<8x128xf32, #tpu.memory_space<vmem>>, vector<8x128xf32>
    tpu.vector_store %arg13[%c0_189, %c0_190], %368 {strides = array<i32>} : memref<8x128xf32, #tpu.memory_space<vmem>>, vector<8x128xf32>,
    %c0_191 = arith.constant 0 : index
    %c0_192 = arith.constant 0 : index
    %372 = vector.load %arg12[%c0_191, %c0_192] : memref<8x128xf32, #tpu.memory_space<vmem>>, vector<8x128xf32>
    tpu.vector_store %arg12[%c0_191, %c0_192], %370 {strides = array<i32>} : memref<8x128xf32, #tpu.memory_space<vmem>>, vector<8x128xf32>,
    %c1_i32_193 = arith.constant 1 : i32
    %c0_194 = arith.constant 0 : index
    %c0_195 = arith.constant 0 : index
    %373 = vector.load %arg12[%c0_194, %c0_195] : memref<8x128xf32, #tpu.memory_space<vmem>>, vector<8x128xf32>
    %c0_196 = arith.constant 0 : index
    %c0_197 = arith.constant 0 : index
    %374 = vector.load %arg13[%c0_196, %c0_197] : memref<8x128xf32, #tpu.memory_space<vmem>>, vector<8x128xf32>
    %375 = arith.index_cast %c1_i32_193 : i32 to index
    %c0_198 = arith.constant 0 : index
    %c0_199 = arith.constant 0 : index
    %376 = vector.load %arg11[%375, %c0_198, %c0_199] : memref<8x8x512xf32, #tpu.memory_space<vmem>>, vector<1x8x512xf32>
    %377 = vector.shape_cast %376 : vector<1x8x512xf32> to vector<8x512xf32>
    %c0_200 = arith.constant 0 : index
    %c0_201 = arith.constant 0 : index
    %378 = vector.load %arg5[%c0_200, %c0_201] : memref<128x512xf32, #tpu.memory_space<vmem>>, vector<128x512xf32>
    %cst_202 = arith.constant dense<0.000000e+00> : vector<8x512xf32>
    %379 = tpu.matmul %373, %378, %cst_202 {dimension_numbers = #tpu.dot_dimension_numbers<[1], [0], [0], [1], [0, 0, 1, 1], [], []>} : vector<8x128xf32>, vector<128x512xf32>, vector<8x512xf32> -> vector<8x512xf32>
    %380 = arith.addf %377, %379 : vector<8x512xf32>
    %381 = vector.extract_strided_slice %380 {offsets = [0, 0], sizes = [8, 128], strides = [1, 1]} : vector<8x512xf32> to vector<8x128xf32>
    %382 = arith.negf %381 : vector<8x128xf32>
    %383 = math.exp %382 : vector<8x128xf32>
    %cst_203 = arith.constant 1.000000e+00 : f32
    %384 = vector.broadcast %cst_203 : f32 to vector<8x128xf32>
    %385 = arith.addf %384, %383 : vector<8x128xf32>
    %386 = arith.divf %384, %385 : vector<8x128xf32>
    %387 = vector.extract_strided_slice %380 {offsets = [0, 128], sizes = [8, 128], strides = [1, 1]} : vector<8x512xf32> to vector<8x128xf32>
    %388 = arith.negf %387 : vector<8x128xf32>
    %389 = math.exp %388 : vector<8x128xf32>
    %cst_204 = arith.constant 1.000000e+00 : f32
    %390 = vector.broadcast %cst_204 : f32 to vector<8x128xf32>
    %391 = arith.addf %390, %389 : vector<8x128xf32>
    %392 = arith.divf %390, %391 : vector<8x128xf32>
    %393 = vector.extract_strided_slice %380 {offsets = [0, 256], sizes = [8, 128], strides = [1, 1]} : vector<8x512xf32> to vector<8x128xf32>
    %394 = math.tanh %393 : vector<8x128xf32>
    %395 = vector.extract_strided_slice %380 {offsets = [0, 384], sizes = [8, 128], strides = [1, 1]} : vector<8x512xf32> to vector<8x128xf32>
    %396 = arith.negf %395 : vector<8x128xf32>
    %397 = math.exp %396 : vector<8x128xf32>
    %cst_205 = arith.constant 1.000000e+00 : f32
    %398 = vector.broadcast %cst_205 : f32 to vector<8x128xf32>
    %399 = arith.addf %398, %397 : vector<8x128xf32>
    %400 = arith.divf %398, %399 : vector<8x128xf32>
    %401 = arith.mulf %392, %374 : vector<8x128xf32>
    %402 = arith.mulf %386, %394 : vector<8x128xf32>
    %403 = arith.addf %401, %402 : vector<8x128xf32>
    %404 = math.tanh %403 : vector<8x128xf32>
    %405 = arith.mulf %400, %404 : vector<8x128xf32>
    %c0_206 = arith.constant 0 : index
    %c0_207 = arith.constant 0 : index
    %406 = vector.load %arg13[%c0_206, %c0_207] : memref<8x128xf32, #tpu.memory_space<vmem>>, vector<8x128xf32>
    tpu.vector_store %arg13[%c0_206, %c0_207], %403 {strides = array<i32>} : memref<8x128xf32, #tpu.memory_space<vmem>>, vector<8x128xf32>,
    %c0_208 = arith.constant 0 : index
    %c0_209 = arith.constant 0 : index
    %407 = vector.load %arg12[%c0_208, %c0_209] : memref<8x128xf32, #tpu.memory_space<vmem>>, vector<8x128xf32>
    tpu.vector_store %arg12[%c0_208, %c0_209], %405 {strides = array<i32>} : memref<8x128xf32, #tpu.memory_space<vmem>>, vector<8x128xf32>,
    %c2_i32_210 = arith.constant 2 : i32
    %c0_211 = arith.constant 0 : index
    %c0_212 = arith.constant 0 : index
    %408 = vector.load %arg12[%c0_211, %c0_212] : memref<8x128xf32, #tpu.memory_space<vmem>>, vector<8x128xf32>
    %c0_213 = arith.constant 0 : index
    %c0_214 = arith.constant 0 : index
    %409 = vector.load %arg13[%c0_213, %c0_214] : memref<8x128xf32, #tpu.memory_space<vmem>>, vector<8x128xf32>
    %410 = arith.index_cast %c2_i32_210 : i32 to index
    %c0_215 = arith.constant 0 : index
    %c0_216 = arith.constant 0 : index
    %411 = vector.load %arg11[%410, %c0_215, %c0_216] : memref<8x8x512xf32, #tpu.memory_space<vmem>>, vector<1x8x512xf32>
    %412 = vector.shape_cast %411 : vector<1x8x512xf32> to vector<8x512xf32>
    %c0_217 = arith.constant 0 : index
    %c0_218 = arith.constant 0 : index
    %413 = vector.load %arg5[%c0_217, %c0_218] : memref<128x512xf32, #tpu.memory_space<vmem>>, vector<128x512xf32>
    %cst_219 = arith.constant dense<0.000000e+00> : vector<8x512xf32>
    %414 = tpu.matmul %408, %413, %cst_219 {dimension_numbers = #tpu.dot_dimension_numbers<[1], [0], [0], [1], [0, 0, 1, 1], [], []>} : vector<8x128xf32>, vector<128x512xf32>, vector<8x512xf32> -> vector<8x512xf32>
    %415 = arith.addf %412, %414 : vector<8x512xf32>
    %416 = vector.extract_strided_slice %415 {offsets = [0, 0], sizes = [8, 128], strides = [1, 1]} : vector<8x512xf32> to vector<8x128xf32>
    %417 = arith.negf %416 : vector<8x128xf32>
    %418 = math.exp %417 : vector<8x128xf32>
    %cst_220 = arith.constant 1.000000e+00 : f32
    %419 = vector.broadcast %cst_220 : f32 to vector<8x128xf32>
    %420 = arith.addf %419, %418 : vector<8x128xf32>
    %421 = arith.divf %419, %420 : vector<8x128xf32>
    %422 = vector.extract_strided_slice %415 {offsets = [0, 128], sizes = [8, 128], strides = [1, 1]} : vector<8x512xf32> to vector<8x128xf32>
    %423 = arith.negf %422 : vector<8x128xf32>
    %424 = math.exp %423 : vector<8x128xf32>
    %cst_221 = arith.constant 1.000000e+00 : f32
    %425 = vector.broadcast %cst_221 : f32 to vector<8x128xf32>
    %426 = arith.addf %425, %424 : vector<8x128xf32>
    %427 = arith.divf %425, %426 : vector<8x128xf32>
    %428 = vector.extract_strided_slice %415 {offsets = [0, 256], sizes = [8, 128], strides = [1, 1]} : vector<8x512xf32> to vector<8x128xf32>
    %429 = math.tanh %428 : vector<8x128xf32>
    %430 = vector.extract_strided_slice %415 {offsets = [0, 384], sizes = [8, 128], strides = [1, 1]} : vector<8x512xf32> to vector<8x128xf32>
    %431 = arith.negf %430 : vector<8x128xf32>
    %432 = math.exp %431 : vector<8x128xf32>
    %cst_222 = arith.constant 1.000000e+00 : f32
    %433 = vector.broadcast %cst_222 : f32 to vector<8x128xf32>
    %434 = arith.addf %433, %432 : vector<8x128xf32>
    %435 = arith.divf %433, %434 : vector<8x128xf32>
    %436 = arith.mulf %427, %409 : vector<8x128xf32>
    %437 = arith.mulf %421, %429 : vector<8x128xf32>
    %438 = arith.addf %436, %437 : vector<8x128xf32>
    %439 = math.tanh %438 : vector<8x128xf32>
    %440 = arith.mulf %435, %439 : vector<8x128xf32>
    %c0_223 = arith.constant 0 : index
    %c0_224 = arith.constant 0 : index
    %441 = vector.load %arg13[%c0_223, %c0_224] : memref<8x128xf32, #tpu.memory_space<vmem>>, vector<8x128xf32>
    tpu.vector_store %arg13[%c0_223, %c0_224], %438 {strides = array<i32>} : memref<8x128xf32, #tpu.memory_space<vmem>>, vector<8x128xf32>,
    %c0_225 = arith.constant 0 : index
    %c0_226 = arith.constant 0 : index
    %442 = vector.load %arg12[%c0_225, %c0_226] : memref<8x128xf32, #tpu.memory_space<vmem>>, vector<8x128xf32>
    tpu.vector_store %arg12[%c0_225, %c0_226], %440 {strides = array<i32>} : memref<8x128xf32, #tpu.memory_space<vmem>>, vector<8x128xf32>,
    %c3_i32_227 = arith.constant 3 : i32
    %c0_228 = arith.constant 0 : index
    %c0_229 = arith.constant 0 : index
    %443 = vector.load %arg12[%c0_228, %c0_229] : memref<8x128xf32, #tpu.memory_space<vmem>>, vector<8x128xf32>
    %c0_230 = arith.constant 0 : index
    %c0_231 = arith.constant 0 : index
    %444 = vector.load %arg13[%c0_230, %c0_231] : memref<8x128xf32, #tpu.memory_space<vmem>>, vector<8x128xf32>
    %445 = arith.index_cast %c3_i32_227 : i32 to index
    %c0_232 = arith.constant 0 : index
    %c0_233 = arith.constant 0 : index
    %446 = vector.load %arg11[%445, %c0_232, %c0_233] : memref<8x8x512xf32, #tpu.memory_space<vmem>>, vector<1x8x512xf32>
    %447 = vector.shape_cast %446 : vector<1x8x512xf32> to vector<8x512xf32>
    %c0_234 = arith.constant 0 : index
    %c0_235 = arith.constant 0 : index
    %448 = vector.load %arg5[%c0_234, %c0_235] : memref<128x512xf32, #tpu.memory_space<vmem>>, vector<128x512xf32>
    %cst_236 = arith.constant dense<0.000000e+00> : vector<8x512xf32>
    %449 = tpu.matmul %443, %448, %cst_236 {dimension_numbers = #tpu.dot_dimension_numbers<[1], [0], [0], [1], [0, 0, 1, 1], [], []>} : vector<8x128xf32>, vector<128x512xf32>, vector<8x512xf32> -> vector<8x512xf32>
    %450 = arith.addf %447, %449 : vector<8x512xf32>
    %451 = vector.extract_strided_slice %450 {offsets = [0, 0], sizes = [8, 128], strides = [1, 1]} : vector<8x512xf32> to vector<8x128xf32>
    %452 = arith.negf %451 : vector<8x128xf32>
    %453 = math.exp %452 : vector<8x128xf32>
    %cst_237 = arith.constant 1.000000e+00 : f32
    %454 = vector.broadcast %cst_237 : f32 to vector<8x128xf32>
    %455 = arith.addf %454, %453 : vector<8x128xf32>
    %456 = arith.divf %454, %455 : vector<8x128xf32>
    %457 = vector.extract_strided_slice %450 {offsets = [0, 128], sizes = [8, 128], strides = [1, 1]} : vector<8x512xf32> to vector<8x128xf32>
    %458 = arith.negf %457 : vector<8x128xf32>
    %459 = math.exp %458 : vector<8x128xf32>
    %cst_238 = arith.constant 1.000000e+00 : f32
    %460 = vector.broadcast %cst_238 : f32 to vector<8x128xf32>
    %461 = arith.addf %460, %459 : vector<8x128xf32>
    %462 = arith.divf %460, %461 : vector<8x128xf32>
    %463 = vector.extract_strided_slice %450 {offsets = [0, 256], sizes = [8, 128], strides = [1, 1]} : vector<8x512xf32> to vector<8x128xf32>
    %464 = math.tanh %463 : vector<8x128xf32>
    %465 = vector.extract_strided_slice %450 {offsets = [0, 384], sizes = [8, 128], strides = [1, 1]} : vector<8x512xf32> to vector<8x128xf32>
    %466 = arith.negf %465 : vector<8x128xf32>
    %467 = math.exp %466 : vector<8x128xf32>
    %cst_239 = arith.constant 1.000000e+00 : f32
    %468 = vector.broadcast %cst_239 : f32 to vector<8x128xf32>
    %469 = arith.addf %468, %467 : vector<8x128xf32>
    %470 = arith.divf %468, %469 : vector<8x128xf32>
    %471 = arith.mulf %462, %444 : vector<8x128xf32>
    %472 = arith.mulf %456, %464 : vector<8x128xf32>
    %473 = arith.addf %471, %472 : vector<8x128xf32>
    %474 = math.tanh %473 : vector<8x128xf32>
    %475 = arith.mulf %470, %474 : vector<8x128xf32>
    %c0_240 = arith.constant 0 : index
    %c0_241 = arith.constant 0 : index
    %476 = vector.load %arg13[%c0_240, %c0_241] : memref<8x128xf32, #tpu.memory_space<vmem>>, vector<8x128xf32>
    tpu.vector_store %arg13[%c0_240, %c0_241], %473 {strides = array<i32>} : memref<8x128xf32, #tpu.memory_space<vmem>>, vector<8x128xf32>,
    %c0_242 = arith.constant 0 : index
    %c0_243 = arith.constant 0 : index
    %477 = vector.load %arg12[%c0_242, %c0_243] : memref<8x128xf32, #tpu.memory_space<vmem>>, vector<8x128xf32>
    tpu.vector_store %arg12[%c0_242, %c0_243], %475 {strides = array<i32>} : memref<8x128xf32, #tpu.memory_space<vmem>>, vector<8x128xf32>,
    %c4_i32_244 = arith.constant 4 : i32
    %c0_245 = arith.constant 0 : index
    %c0_246 = arith.constant 0 : index
    %478 = vector.load %arg12[%c0_245, %c0_246] : memref<8x128xf32, #tpu.memory_space<vmem>>, vector<8x128xf32>
    %c0_247 = arith.constant 0 : index
    %c0_248 = arith.constant 0 : index
    %479 = vector.load %arg13[%c0_247, %c0_248] : memref<8x128xf32, #tpu.memory_space<vmem>>, vector<8x128xf32>
    %480 = arith.index_cast %c4_i32_244 : i32 to index
    %c0_249 = arith.constant 0 : index
    %c0_250 = arith.constant 0 : index
    %481 = vector.load %arg11[%480, %c0_249, %c0_250] : memref<8x8x512xf32, #tpu.memory_space<vmem>>, vector<1x8x512xf32>
    %482 = vector.shape_cast %481 : vector<1x8x512xf32> to vector<8x512xf32>
    %c0_251 = arith.constant 0 : index
    %c0_252 = arith.constant 0 : index
    %483 = vector.load %arg5[%c0_251, %c0_252] : memref<128x512xf32, #tpu.memory_space<vmem>>, vector<128x512xf32>
    %cst_253 = arith.constant dense<0.000000e+00> : vector<8x512xf32>
    %484 = tpu.matmul %478, %483, %cst_253 {dimension_numbers = #tpu.dot_dimension_numbers<[1], [0], [0], [1], [0, 0, 1, 1], [], []>} : vector<8x128xf32>, vector<128x512xf32>, vector<8x512xf32> -> vector<8x512xf32>
    %485 = arith.addf %482, %484 : vector<8x512xf32>
    %486 = vector.extract_strided_slice %485 {offsets = [0, 0], sizes = [8, 128], strides = [1, 1]} : vector<8x512xf32> to vector<8x128xf32>
    %487 = arith.negf %486 : vector<8x128xf32>
    %488 = math.exp %487 : vector<8x128xf32>
    %cst_254 = arith.constant 1.000000e+00 : f32
    %489 = vector.broadcast %cst_254 : f32 to vector<8x128xf32>
    %490 = arith.addf %489, %488 : vector<8x128xf32>
    %491 = arith.divf %489, %490 : vector<8x128xf32>
    %492 = vector.extract_strided_slice %485 {offsets = [0, 128], sizes = [8, 128], strides = [1, 1]} : vector<8x512xf32> to vector<8x128xf32>
    %493 = arith.negf %492 : vector<8x128xf32>
    %494 = math.exp %493 : vector<8x128xf32>
    %cst_255 = arith.constant 1.000000e+00 : f32
    %495 = vector.broadcast %cst_255 : f32 to vector<8x128xf32>
    %496 = arith.addf %495, %494 : vector<8x128xf32>
    %497 = arith.divf %495, %496 : vector<8x128xf32>
    %498 = vector.extract_strided_slice %485 {offsets = [0, 256], sizes = [8, 128], strides = [1, 1]} : vector<8x512xf32> to vector<8x128xf32>
    %499 = math.tanh %498 : vector<8x128xf32>
    %500 = vector.extract_strided_slice %485 {offsets = [0, 384], sizes = [8, 128], strides = [1, 1]} : vector<8x512xf32> to vector<8x128xf32>
    %501 = arith.negf %500 : vector<8x128xf32>
    %502 = math.exp %501 : vector<8x128xf32>
    %cst_256 = arith.constant 1.000000e+00 : f32
    %503 = vector.broadcast %cst_256 : f32 to vector<8x128xf32>
    %504 = arith.addf %503, %502 : vector<8x128xf32>
    %505 = arith.divf %503, %504 : vector<8x128xf32>
    %506 = arith.mulf %497, %479 : vector<8x128xf32>
    %507 = arith.mulf %491, %499 : vector<8x128xf32>
    %508 = arith.addf %506, %507 : vector<8x128xf32>
    %509 = math.tanh %508 : vector<8x128xf32>
    %510 = arith.mulf %505, %509 : vector<8x128xf32>
    %c0_257 = arith.constant 0 : index
    %c0_258 = arith.constant 0 : index
    %511 = vector.load %arg13[%c0_257, %c0_258] : memref<8x128xf32, #tpu.memory_space<vmem>>, vector<8x128xf32>
    tpu.vector_store %arg13[%c0_257, %c0_258], %508 {strides = array<i32>} : memref<8x128xf32, #tpu.memory_space<vmem>>, vector<8x128xf32>,
    %c0_259 = arith.constant 0 : index
    %c0_260 = arith.constant 0 : index
    %512 = vector.load %arg12[%c0_259, %c0_260] : memref<8x128xf32, #tpu.memory_space<vmem>>, vector<8x128xf32>
    tpu.vector_store %arg12[%c0_259, %c0_260], %510 {strides = array<i32>} : memref<8x128xf32, #tpu.memory_space<vmem>>, vector<8x128xf32>,
    %c5_i32_261 = arith.constant 5 : i32
    %c0_262 = arith.constant 0 : index
    %c0_263 = arith.constant 0 : index
    %513 = vector.load %arg12[%c0_262, %c0_263] : memref<8x128xf32, #tpu.memory_space<vmem>>, vector<8x128xf32>
    %c0_264 = arith.constant 0 : index
    %c0_265 = arith.constant 0 : index
    %514 = vector.load %arg13[%c0_264, %c0_265] : memref<8x128xf32, #tpu.memory_space<vmem>>, vector<8x128xf32>
    %515 = arith.index_cast %c5_i32_261 : i32 to index
    %c0_266 = arith.constant 0 : index
    %c0_267 = arith.constant 0 : index
    %516 = vector.load %arg11[%515, %c0_266, %c0_267] : memref<8x8x512xf32, #tpu.memory_space<vmem>>, vector<1x8x512xf32>
    %517 = vector.shape_cast %516 : vector<1x8x512xf32> to vector<8x512xf32>
    %c0_268 = arith.constant 0 : index
    %c0_269 = arith.constant 0 : index
    %518 = vector.load %arg5[%c0_268, %c0_269] : memref<128x512xf32, #tpu.memory_space<vmem>>, vector<128x512xf32>
    %cst_270 = arith.constant dense<0.000000e+00> : vector<8x512xf32>
    %519 = tpu.matmul %513, %518, %cst_270 {dimension_numbers = #tpu.dot_dimension_numbers<[1], [0], [0], [1], [0, 0, 1, 1], [], []>} : vector<8x128xf32>, vector<128x512xf32>, vector<8x512xf32> -> vector<8x512xf32>
    %520 = arith.addf %517, %519 : vector<8x512xf32>
    %521 = vector.extract_strided_slice %520 {offsets = [0, 0], sizes = [8, 128], strides = [1, 1]} : vector<8x512xf32> to vector<8x128xf32>
    %522 = arith.negf %521 : vector<8x128xf32>
    %523 = math.exp %522 : vector<8x128xf32>
    %cst_271 = arith.constant 1.000000e+00 : f32
    %524 = vector.broadcast %cst_271 : f32 to vector<8x128xf32>
    %525 = arith.addf %524, %523 : vector<8x128xf32>
    %526 = arith.divf %524, %525 : vector<8x128xf32>
    %527 = vector.extract_strided_slice %520 {offsets = [0, 128], sizes = [8, 128], strides = [1, 1]} : vector<8x512xf32> to vector<8x128xf32>
    %528 = arith.negf %527 : vector<8x128xf32>
    %529 = math.exp %528 : vector<8x128xf32>
    %cst_272 = arith.constant 1.000000e+00 : f32
    %530 = vector.broadcast %cst_272 : f32 to vector<8x128xf32>
    %531 = arith.addf %530, %529 : vector<8x128xf32>
    %532 = arith.divf %530, %531 : vector<8x128xf32>
    %533 = vector.extract_strided_slice %520 {offsets = [0, 256], sizes = [8, 128], strides = [1, 1]} : vector<8x512xf32> to vector<8x128xf32>
    %534 = math.tanh %533 : vector<8x128xf32>
    %535 = vector.extract_strided_slice %520 {offsets = [0, 384], sizes = [8, 128], strides = [1, 1]} : vector<8x512xf32> to vector<8x128xf32>
    %536 = arith.negf %535 : vector<8x128xf32>
    %537 = math.exp %536 : vector<8x128xf32>
    %cst_273 = arith.constant 1.000000e+00 : f32
    %538 = vector.broadcast %cst_273 : f32 to vector<8x128xf32>
    %539 = arith.addf %538, %537 : vector<8x128xf32>
    %540 = arith.divf %538, %539 : vector<8x128xf32>
    %541 = arith.mulf %532, %514 : vector<8x128xf32>
    %542 = arith.mulf %526, %534 : vector<8x128xf32>
    %543 = arith.addf %541, %542 : vector<8x128xf32>
    %544 = math.tanh %543 : vector<8x128xf32>
    %545 = arith.mulf %540, %544 : vector<8x128xf32>
    %c0_274 = arith.constant 0 : index
    %c0_275 = arith.constant 0 : index
    %546 = vector.load %arg13[%c0_274, %c0_275] : memref<8x128xf32, #tpu.memory_space<vmem>>, vector<8x128xf32>
    tpu.vector_store %arg13[%c0_274, %c0_275], %543 {strides = array<i32>} : memref<8x128xf32, #tpu.memory_space<vmem>>, vector<8x128xf32>,
    %c0_276 = arith.constant 0 : index
    %c0_277 = arith.constant 0 : index
    %547 = vector.load %arg12[%c0_276, %c0_277] : memref<8x128xf32, #tpu.memory_space<vmem>>, vector<8x128xf32>
    tpu.vector_store %arg12[%c0_276, %c0_277], %545 {strides = array<i32>} : memref<8x128xf32, #tpu.memory_space<vmem>>, vector<8x128xf32>,
    %c6_i32_278 = arith.constant 6 : i32
    %c0_279 = arith.constant 0 : index
    %c0_280 = arith.constant 0 : index
    %548 = vector.load %arg12[%c0_279, %c0_280] : memref<8x128xf32, #tpu.memory_space<vmem>>, vector<8x128xf32>
    %c0_281 = arith.constant 0 : index
    %c0_282 = arith.constant 0 : index
    %549 = vector.load %arg13[%c0_281, %c0_282] : memref<8x128xf32, #tpu.memory_space<vmem>>, vector<8x128xf32>
    %550 = arith.index_cast %c6_i32_278 : i32 to index
    %c0_283 = arith.constant 0 : index
    %c0_284 = arith.constant 0 : index
    %551 = vector.load %arg11[%550, %c0_283, %c0_284] : memref<8x8x512xf32, #tpu.memory_space<vmem>>, vector<1x8x512xf32>
    %552 = vector.shape_cast %551 : vector<1x8x512xf32> to vector<8x512xf32>
    %c0_285 = arith.constant 0 : index
    %c0_286 = arith.constant 0 : index
    %553 = vector.load %arg5[%c0_285, %c0_286] : memref<128x512xf32, #tpu.memory_space<vmem>>, vector<128x512xf32>
    %cst_287 = arith.constant dense<0.000000e+00> : vector<8x512xf32>
    %554 = tpu.matmul %548, %553, %cst_287 {dimension_numbers = #tpu.dot_dimension_numbers<[1], [0], [0], [1], [0, 0, 1, 1], [], []>} : vector<8x128xf32>, vector<128x512xf32>, vector<8x512xf32> -> vector<8x512xf32>
    %555 = arith.addf %552, %554 : vector<8x512xf32>
    %556 = vector.extract_strided_slice %555 {offsets = [0, 0], sizes = [8, 128], strides = [1, 1]} : vector<8x512xf32> to vector<8x128xf32>
    %557 = arith.negf %556 : vector<8x128xf32>
    %558 = math.exp %557 : vector<8x128xf32>
    %cst_288 = arith.constant 1.000000e+00 : f32
    %559 = vector.broadcast %cst_288 : f32 to vector<8x128xf32>
    %560 = arith.addf %559, %558 : vector<8x128xf32>
    %561 = arith.divf %559, %560 : vector<8x128xf32>
    %562 = vector.extract_strided_slice %555 {offsets = [0, 128], sizes = [8, 128], strides = [1, 1]} : vector<8x512xf32> to vector<8x128xf32>
    %563 = arith.negf %562 : vector<8x128xf32>
    %564 = math.exp %563 : vector<8x128xf32>
    %cst_289 = arith.constant 1.000000e+00 : f32
    %565 = vector.broadcast %cst_289 : f32 to vector<8x128xf32>
    %566 = arith.addf %565, %564 : vector<8x128xf32>
    %567 = arith.divf %565, %566 : vector<8x128xf32>
    %568 = vector.extract_strided_slice %555 {offsets = [0, 256], sizes = [8, 128], strides = [1, 1]} : vector<8x512xf32> to vector<8x128xf32>
    %569 = math.tanh %568 : vector<8x128xf32>
    %570 = vector.extract_strided_slice %555 {offsets = [0, 384], sizes = [8, 128], strides = [1, 1]} : vector<8x512xf32> to vector<8x128xf32>
    %571 = arith.negf %570 : vector<8x128xf32>
    %572 = math.exp %571 : vector<8x128xf32>
    %cst_290 = arith.constant 1.000000e+00 : f32
    %573 = vector.broadcast %cst_290 : f32 to vector<8x128xf32>
    %574 = arith.addf %573, %572 : vector<8x128xf32>
    %575 = arith.divf %573, %574 : vector<8x128xf32>
    %576 = arith.mulf %567, %549 : vector<8x128xf32>
    %577 = arith.mulf %561, %569 : vector<8x128xf32>
    %578 = arith.addf %576, %577 : vector<8x128xf32>
    %579 = math.tanh %578 : vector<8x128xf32>
    %580 = arith.mulf %575, %579 : vector<8x128xf32>
    %c0_291 = arith.constant 0 : index
    %c0_292 = arith.constant 0 : index
    %581 = vector.load %arg13[%c0_291, %c0_292] : memref<8x128xf32, #tpu.memory_space<vmem>>, vector<8x128xf32>
    tpu.vector_store %arg13[%c0_291, %c0_292], %578 {strides = array<i32>} : memref<8x128xf32, #tpu.memory_space<vmem>>, vector<8x128xf32>,
    %c0_293 = arith.constant 0 : index
    %c0_294 = arith.constant 0 : index
    %582 = vector.load %arg12[%c0_293, %c0_294] : memref<8x128xf32, #tpu.memory_space<vmem>>, vector<8x128xf32>
    tpu.vector_store %arg12[%c0_293, %c0_294], %580 {strides = array<i32>} : memref<8x128xf32, #tpu.memory_space<vmem>>, vector<8x128xf32>,
    %c7_i32_295 = arith.constant 7 : i32
    %c0_296 = arith.constant 0 : index
    %c0_297 = arith.constant 0 : index
    %583 = vector.load %arg12[%c0_296, %c0_297] : memref<8x128xf32, #tpu.memory_space<vmem>>, vector<8x128xf32>
    %c0_298 = arith.constant 0 : index
    %c0_299 = arith.constant 0 : index
    %584 = vector.load %arg13[%c0_298, %c0_299] : memref<8x128xf32, #tpu.memory_space<vmem>>, vector<8x128xf32>
    %585 = arith.index_cast %c7_i32_295 : i32 to index
    %c0_300 = arith.constant 0 : index
    %c0_301 = arith.constant 0 : index
    %586 = vector.load %arg11[%585, %c0_300, %c0_301] : memref<8x8x512xf32, #tpu.memory_space<vmem>>, vector<1x8x512xf32>
    %587 = vector.shape_cast %586 : vector<1x8x512xf32> to vector<8x512xf32>
    %c0_302 = arith.constant 0 : index
    %c0_303 = arith.constant 0 : index
    %588 = vector.load %arg5[%c0_302, %c0_303] : memref<128x512xf32, #tpu.memory_space<vmem>>, vector<128x512xf32>
    %cst_304 = arith.constant dense<0.000000e+00> : vector<8x512xf32>
    %589 = tpu.matmul %583, %588, %cst_304 {dimension_numbers = #tpu.dot_dimension_numbers<[1], [0], [0], [1], [0, 0, 1, 1], [], []>} : vector<8x128xf32>, vector<128x512xf32>, vector<8x512xf32> -> vector<8x512xf32>
    %590 = arith.addf %587, %589 : vector<8x512xf32>
    %591 = vector.extract_strided_slice %590 {offsets = [0, 0], sizes = [8, 128], strides = [1, 1]} : vector<8x512xf32> to vector<8x128xf32>
    %592 = arith.negf %591 : vector<8x128xf32>
    %593 = math.exp %592 : vector<8x128xf32>
    %cst_305 = arith.constant 1.000000e+00 : f32
    %594 = vector.broadcast %cst_305 : f32 to vector<8x128xf32>
    %595 = arith.addf %594, %593 : vector<8x128xf32>
    %596 = arith.divf %594, %595 : vector<8x128xf32>
    %597 = vector.extract_strided_slice %590 {offsets = [0, 128], sizes = [8, 128], strides = [1, 1]} : vector<8x512xf32> to vector<8x128xf32>
    %598 = arith.negf %597 : vector<8x128xf32>
    %599 = math.exp %598 : vector<8x128xf32>
    %cst_306 = arith.constant 1.000000e+00 : f32
    %600 = vector.broadcast %cst_306 : f32 to vector<8x128xf32>
    %601 = arith.addf %600, %599 : vector<8x128xf32>
    %602 = arith.divf %600, %601 : vector<8x128xf32>
    %603 = vector.extract_strided_slice %590 {offsets = [0, 256], sizes = [8, 128], strides = [1, 1]} : vector<8x512xf32> to vector<8x128xf32>
    %604 = math.tanh %603 : vector<8x128xf32>
    %605 = vector.extract_strided_slice %590 {offsets = [0, 384], sizes = [8, 128], strides = [1, 1]} : vector<8x512xf32> to vector<8x128xf32>
    %606 = arith.negf %605 : vector<8x128xf32>
    %607 = math.exp %606 : vector<8x128xf32>
    %cst_307 = arith.constant 1.000000e+00 : f32
    %608 = vector.broadcast %cst_307 : f32 to vector<8x128xf32>
    %609 = arith.addf %608, %607 : vector<8x128xf32>
    %610 = arith.divf %608, %609 : vector<8x128xf32>
    %611 = arith.mulf %602, %584 : vector<8x128xf32>
    %612 = arith.mulf %596, %604 : vector<8x128xf32>
    %613 = arith.addf %611, %612 : vector<8x128xf32>
    %614 = math.tanh %613 : vector<8x128xf32>
    %615 = arith.mulf %610, %614 : vector<8x128xf32>
    %c0_308 = arith.constant 0 : index
    %c0_309 = arith.constant 0 : index
    %616 = vector.load %arg13[%c0_308, %c0_309] : memref<8x128xf32, #tpu.memory_space<vmem>>, vector<8x128xf32>
    tpu.vector_store %arg13[%c0_308, %c0_309], %613 {strides = array<i32>} : memref<8x128xf32, #tpu.memory_space<vmem>>, vector<8x128xf32>,
    %c0_310 = arith.constant 0 : index
    %c0_311 = arith.constant 0 : index
    %617 = vector.load %arg12[%c0_310, %c0_311] : memref<8x128xf32, #tpu.memory_space<vmem>>, vector<8x128xf32>
    tpu.vector_store %arg12[%c0_310, %c0_311], %615 {strides = array<i32>} : memref<8x128xf32, #tpu.memory_space<vmem>>, vector<8x128xf32>,
    %c8_i32_312 = arith.constant 8 : i32
    %c0_313 = arith.constant 0 : index
    %c0_314 = arith.constant 0 : index
    %618 = vector.load %arg12[%c0_313, %c0_314] : memref<8x128xf32, #tpu.memory_space<vmem>>, vector<8x128xf32>
    %c0_315 = arith.constant 0 : index
    %c0_316 = arith.constant 0 : index
    %619 = vector.load %arg7[%c0_315, %c0_316] : memref<128x128xf32, #tpu.memory_space<vmem>>, vector<128x128xf32>
    %cst_317 = arith.constant dense<0.000000e+00> : vector<8x128xf32>
    %620 = tpu.matmul %618, %619, %cst_317 {dimension_numbers = #tpu.dot_dimension_numbers<[1], [0], [0], [1], [0, 0, 1, 1], [], []>} : vector<8x128xf32>, vector<128x128xf32>, vector<8x128xf32> -> vector<8x128xf32>
    %c0_318 = arith.constant 0 : index
    %c0_319 = arith.constant 0 : index
    %621 = vector.load %arg8[%c0_318, %c0_319] : memref<1x128xf32, #tpu.memory_space<vmem>>, vector<1x128xf32>
    %622 = vector.broadcast %621 : vector<1x128xf32> to vector<8x128xf32>
    %623 = arith.addf %620, %622 : vector<8x128xf32>
    %c0_320 = arith.constant 0 : index
    %c0_321 = arith.constant 0 : index
    %624 = vector.load %arg9[%c0_320, %c0_321] : memref<8x128xf32, #tpu.memory_space<vmem>>, vector<8x128xf32>
    tpu.vector_store %arg9[%c0_320, %c0_321], %623 {strides = array<i32>} : memref<8x128xf32, #tpu.memory_space<vmem>>, vector<8x128xf32>,
    return
  }
}

</mosaic_0001>

<llo_original>
// kernel: tpu_custom_call.1
$region0: #{tpu_custom_call.1}
  #allocation0 [shape = 'u32[]', space=smem, size = 0x4, offset = 0x4, fixed_abs, tag = 'smem constant byte address 0x4 - core index']
  #allocation1 [shape = 'u32[72,128]{1,0:T(1,128)}', space=vmem, size = 0x9000, scoped, tag = 'internal scratch']
  #allocation2 [shape = 'f32[8,8,128]{2,1,0:T(8,128)}', space=vmem, size = 0x8000, scoped, tag = 'scratch operand']
  #allocation3 [shape = 'f32[8,8,512]{2,1,0:T(8,128)}', space=vmem, size = 0x20000, scoped, tag = 'scratch operand']
  #allocation4 [shape = 'f32[8,128]{1,0:T(8,128)}', space=vmem, size = 0x1000, scoped, tag = 'scratch operand']
  #allocation5 [shape = 'f32[8,128]{1,0:T(8,128)}', space=vmem, size = 0x1000, scoped, tag = 'scratch operand']
  %s0 = inlined_call_operand.hbm [shape: f32[8,8,128], index: 0, kind: input, shape index: {}]
  %s1 = inlined_call_operand.hbm [shape: f32[128,512], index: 1, kind: input, shape index: {}]
  %s2 = inlined_call_operand.hbm [shape: f32[128,512], index: 2, kind: input, shape index: {}]
  %s3 = inlined_call_operand.hbm [shape: f32[1,512], index: 3, kind: input, shape index: {}]
  %s4 = inlined_call_operand.hbm [shape: f32[128,512], index: 4, kind: input, shape index: {}]
  %s5 = inlined_call_operand.hbm [shape: f32[128,512], index: 5, kind: input, shape index: {}]
  %s6 = inlined_call_operand.vmem [shape: f32[1,512], index: 6, kind: input, shape index: {}]
  %s7 = inlined_call_operand.hbm [shape: f32[128,128], index: 7, kind: input, shape index: {}]
  %s8 = inlined_call_operand.vmem [shape: f32[1,128], index: 8, kind: input, shape index: {}]
  %s9 = inlined_call_operand.hbm [shape: f32[8,128], index: 9, kind: output, shape index: {}]
  %s10 = sld [smem:[#allocation0]]
  $region74: #{tpu_custom_call.1} parent=0
    _
  %s12 = ssub.s32 1, %s10
  %s13 = scalar_select 0, %s12, %s10
  $region1: #{tpu_custom_call.1} parent=0
    #allocation6 [shape = 'u8[32768]{0}', space=vmem, size = 0x8000, scoped, tag = 'input window, operand 0, single buffered']
    #allocation7 [shape = 's32[1]{0}', space=sflag, size = 0x4, scoped, tag = 'scoped memory for tpu_custom_call.1']
    #allocation8 [shape = 's32[1]{0}', space=sflag, size = 0x4, scoped, tag = 'scoped memory for tpu_custom_call.1']
    #allocation9 [shape = 'u8[262144]{0}', space=vmem, size = 0x40000, scoped, tag = 'input window, operand 1, single buffered']
    #allocation10 [shape = 's32[1]{0}', space=sflag, size = 0x4, scoped, tag = 'scoped memory for tpu_custom_call.1']
    #allocation11 [shape = 'u8[262144]{0}', space=vmem, size = 0x40000, scoped, tag = 'input window, operand 2, single buffered']
    #allocation12 [shape = 'u8[2048]{0}', space=vmem, size = 0x800, scoped, tag = 'input window, operand 3, single buffered']
    #allocation13 [shape = 's32[1]{0}', space=sflag, size = 0x4, scoped, tag = 'scoped memory for tpu_custom_call.1']
    #allocation14 [shape = 'u8[262144]{0}', space=vmem, size = 0x40000, scoped, tag = 'input window, operand 4, single buffered']
    #allocation15 [shape = 'u8[262144]{0}', space=vmem, size = 0x40000, scoped, tag = 'input window, operand 5, single buffered']
    #allocation16 [shape = 's32[1]{0}', space=sflag, size = 0x4, scoped, tag = 'scoped memory for tpu_custom_call.1']
    #allocation17 [shape = 'u8[65536]{0}', space=vmem, size = 0x10000, scoped, tag = 'input window, operand 7, single buffered']
    #allocation18 [shape = 'u8[4096]{0}', space=vmem, size = 0x1000, scoped, tag = 'output window, operand 0, single buffered']
    %14 = vsyncpa [#allocation7], 0
    %15 = vsyncpa [#allocation10], 0
    %16 = vsyncpa [#allocation13], 0
    %17 = vsyncpa [#allocation16], 0
    %18 = vsyncpa [#allocation8], 0
    // Predicated region
    $region2: #{tpu_custom_call.1} parent=1 // pred_check
      _
    $region3: #{tpu_custom_call.1} parent=1 // pred_check_branch
      %20 = sbr.rel (0) target = $region5
    $region4: #{tpu_custom_call.1} parent=1 // pred_region
      %22 = vsyncadd [#allocation7], 0
      %s23 = sshll.u32 %s0, 4
      %s24 = int_to_ptr.hbm [resolvable:$true] %s23
      %s25 = sshll.u32 [#allocation6], 4
      %s26 = int_to_ptr.vmem [resolvable:$true] %s25
      %31 = dma.hbm_to_vmem [thread:$0]  %s24, 1024, %s26, [#allocation7], 128, 128, 8
    $region5: #{tpu_custom_call.1} parent=1 // pred_fallthru
      _
    // Predicated region
    $region6: #{tpu_custom_call.1} parent=1 // pred_check
      _
    $region7: #{tpu_custom_call.1} parent=1 // pred_check_branch
      %33 = sbr.rel (0) target = $region9
    $region8: #{tpu_custom_call.1} parent=1 // pred_region
      %35 = vsyncadd [#allocation10], 0
      %s36 = sshll.u32 %s1, 4
      %s37 = int_to_ptr.hbm [resolvable:$true] %s36
      %s38 = sshll.u32 [#allocation9], 4
      %s39 = int_to_ptr.vmem [resolvable:$true] %s38
      %44 = dma.hbm_to_vmem [thread:$0]  %s37, 8192, %s39, [#allocation10], 512, 512, 32
    $region9: #{tpu_custom_call.1} parent=1 // pred_fallthru
      _
    // Predicated region
    $region10: #{tpu_custom_call.1} parent=1 // pred_check
      _
    $region11: #{tpu_custom_call.1} parent=1 // pred_check_branch
      %46 = sbr.rel (0) target = $region13
    $region12: #{tpu_custom_call.1} parent=1 // pred_region
      %48 = vsyncadd [#allocation10], 0
      %s49 = sshll.u32 %s2, 4
      %s50 = int_to_ptr.hbm [resolvable:$true] %s49
      %s51 = sshll.u32 [#allocation11], 4
      %s52 = int_to_ptr.vmem [resolvable:$true] %s51
      %57 = dma.hbm_to_vmem [thread:$0]  %s50, 8192, %s52, [#allocation10], 512, 512, 32
    $region13: #{tpu_custom_call.1} parent=1 // pred_fallthru
      _
    // Predicated region
    $region14: #{tpu_custom_call.1} parent=1 // pred_check
      _
    $region15: #{tpu_custom_call.1} parent=1 // pred_check_branch
      %59 = sbr.rel (0) target = $region17
    $region16: #{tpu_custom_call.1} parent=1 // pred_region
      %61 = vsyncadd [#allocation13], 0
      %s63 = sshll.u32 %s3, 4
      %s64 = int_to_ptr.hbm [resolvable:$true] %s63
      %s65 = sshll.u32 [#allocation12], 4
      %s66 = int_to_ptr.vmem [resolvable:$true] %s65
      %68 = dma.hbm_to_vmem [thread:$0]  %s64, 64, %s66, [#allocation13]
    $region17: #{tpu_custom_call.1} parent=1 // pred_fallthru
      _
    // Predicated region
    $region18: #{tpu_custom_call.1} parent=1 // pred_check
      _
    $region19: #{tpu_custom_call.1} parent=1 // pred_check_branch
      %70 = sbr.rel (0) target = $region21
    $region20: #{tpu_custom_call.1} parent=1 // pred_region
      %72 = vsyncadd [#allocation13], 0
      %s73 = sshll.u32 %s4, 4
      %s74 = int_to_ptr.hbm [resolvable:$true] %s73
      %s75 = sshll.u32 [#allocation14], 4
      %s76 = int_to_ptr.vmem [resolvable:$true] %s75
      %81 = dma.hbm_to_vmem [thread:$0]  %s74, 8192, %s76, [#allocation13], 512, 512, 32
    $region21: #{tpu_custom_call.1} parent=1 // pred_fallthru
      _
    // Predicated region
    $region22: #{tpu_custom_call.1} parent=1 // pred_check
      _
    $region23: #{tpu_custom_call.1} parent=1 // pred_check_branch
      %83 = sbr.rel (0) target = $region25
    $region24: #{tpu_custom_call.1} parent=1 // pred_region
      %85 = vsyncadd [#allocation16], 0
      %s86 = sshll.u32 %s5, 4
      %s87 = int_to_ptr.hbm [resolvable:$true] %s86
      %s88 = sshll.u32 [#allocation15], 4
      %s89 = int_to_ptr.vmem [resolvable:$true] %s88
      %94 = dma.hbm_to_vmem [thread:$0]  %s87, 8192, %s89, [#allocation16], 512, 512, 32
    $region25: #{tpu_custom_call.1} parent=1 // pred_fallthru
      _
    // Predicated region
    $region26: #{tpu_custom_call.1} parent=1 // pred_check
      _
    $region27: #{tpu_custom_call.1} parent=1 // pred_check_branch
      %96 = sbr.rel (0) target = $region29
    $region28: #{tpu_custom_call.1} parent=1 // pred_region
      _
    $region29: #{tpu_custom_call.1} parent=1 // pred_fallthru
      _
    // Predicated region
    $region30: #{tpu_custom_call.1} parent=1 // pred_check
      _
    $region31: #{tpu_custom_call.1} parent=1 // pred_check_branch
      %98 = sbr.rel (0) target = $region33
    $region32: #{tpu_custom_call.1} parent=1 // pred_region
      %100 = vsyncadd [#allocation16], 0
      %s101 = sshll.u32 %s7, 4
      %s102 = int_to_ptr.hbm [resolvable:$true] %s101
      %s103 = sshll.u32 [#allocation17], 4
      %s104 = int_to_ptr.vmem [resolvable:$true] %s103
      %109 = dma.hbm_to_vmem [thread:$0]  %s102, 2048, %s104, [#allocation16], 128, 128, 8
    $region33: #{tpu_custom_call.1} parent=1 // pred_fallthru
      _
    // Predicated region
    $region34: #{tpu_custom_call.1} parent=1 // pred_check
      _
    $region35: #{tpu_custom_call.1} parent=1 // pred_check_branch
      %111 = sbr.rel (0) target = $region37
    $region36: #{tpu_custom_call.1} parent=1 // pred_region
      _
    $region37: #{tpu_custom_call.1} parent=1 // pred_fallthru
      _
    // Predicated region
    $region38: #{tpu_custom_call.1} parent=1 // pred_check
      _
    $region39: #{tpu_custom_call.1} parent=1 // pred_check_branch
      %113 = sbr.rel (0) target = $region41
    $region40: #{tpu_custom_call.1} parent=1 // pred_region
      %115 = dma.done [#allocation7], 1024
    $region41: #{tpu_custom_call.1} parent=1 // pred_fallthru
      _
    // Predicated region
    $region42: #{tpu_custom_call.1} parent=1 // pred_check
      _
    $region43: #{tpu_custom_call.1} parent=1 // pred_check_branch
      %117 = sbr.rel (0) target = $region45
    $region44: #{tpu_custom_call.1} parent=1 // pred_region
      %119 = dma.done [#allocation10], 8192
    $region45: #{tpu_custom_call.1} parent=1 // pred_fallthru
      _
    // Predicated region
    $region46: #{tpu_custom_call.1} parent=1 // pred_check
      _
    $region47: #{tpu_custom_call.1} parent=1 // pred_check_branch
      %121 = sbr.rel (0) target = $region49
    $region48: #{tpu_custom_call.1} parent=1 // pred_region
      %123 = dma.done [#allocation10], 8192
    $region49: #{tpu_custom_call.1} parent=1 // pred_fallthru
      _
    // Predicated region
    $region50: #{tpu_custom_call.1} parent=1 // pred_check
      _
    $region51: #{tpu_custom_call.1} parent=1 // pred_check_branch
      %125 = sbr.rel (0) target = $region53
    $region52: #{tpu_custom_call.1} parent=1 // pred_region
      %127 = dma.done [#allocation13], 64
    $region53: #{tpu_custom_call.1} parent=1 // pred_fallthru
      _
    // Predicated region
    $region54: #{tpu_custom_call.1} parent=1 // pred_check
      _
    $region55: #{tpu_custom_call.1} parent=1 // pred_check_branch
      %129 = sbr.rel (0) target = $region57
    $region56: #{tpu_custom_call.1} parent=1 // pred_region
      %131 = dma.done [#allocation13], 8192
    $region57: #{tpu_custom_call.1} parent=1 // pred_fallthru
      _
    // Predicated region
    $region58: #{tpu_custom_call.1} parent=1 // pred_check
      _
    $region59: #{tpu_custom_call.1} parent=1 // pred_check_branch
      %133 = sbr.rel (0) target = $region61
    $region60: #{tpu_custom_call.1} parent=1 // pred_region
      %135 = dma.done [#allocation16], 8192
    $region61: #{tpu_custom_call.1} parent=1 // pred_fallthru
      _
    // Predicated region
    $region62: #{tpu_custom_call.1} parent=1 // pred_check
      _
    $region63: #{tpu_custom_call.1} parent=1 // pred_check_branch
      %137 = sbr.rel (0) target = $region65
    $region64: #{tpu_custom_call.1} parent=1 // pred_region
      %139 = dma.done [#allocation16], 2048
    $region65: #{tpu_custom_call.1} parent=1 // pred_fallthru
      _
    %v140 = vld [vmem:[#allocation6] sm:$0xff]
    %v141 = vld [vmem:[#allocation6 + $0x8] sm:$0xff]
    %v142 = vld [vmem:[#allocation6 + $0x10] sm:$0xff]
    %v143 = vld [vmem:[#allocation6 + $0x18] sm:$0xff]
    %v144 = vld [vmem:[#allocation6 + $0x20] sm:$0xff]
    %v145 = vld [vmem:[#allocation6 + $0x28] sm:$0xff]
    %v146 = vld [vmem:[#allocation6 + $0x30] sm:$0xff]
    %v147 = vld [vmem:[#allocation6 + $0x38] sm:$0xff]
    %v148 = vld [vmem:[#allocation9] sm:$0xff]
    %v149 = vld [vmem:[#allocation9 + $0x8] sm:$0xff]
    %v150 = vld [vmem:[#allocation9 + $0x10] sm:$0xff]
    %v151 = vld [vmem:[#allocation9 + $0x18] sm:$0xff]
    %v152 = vld [vmem:[#allocation9 + $0x20] sm:$0xff]
    %v153 = vld [vmem:[#allocation9 + $0x28] sm:$0xff]
    %v154 = vld [vmem:[#allocation9 + $0x30] sm:$0xff]
    %v155 = vld [vmem:[#allocation9 + $0x38] sm:$0xff]
    %v156 = vld [vmem:[#allocation9 + $0x40] sm:$0xff]
    %v157 = vld [vmem:[#allocation9 + $0x48] sm:$0xff]
    %v158 = vld [vmem:[#allocation9 + $0x50] sm:$0xff]
    %v159 = vld [vmem:[#allocation9 + $0x58] sm:$0xff]
    %v160 = vld [vmem:[#allocation9 + $0x60] sm:$0xff]
    %v161 = vld [vmem:[#allocation9 + $0x68] sm:$0xff]
    %v162 = vld [vmem:[#allocation9 + $0x70] sm:$0xff]
    %v163 = vld [vmem:[#allocation9 + $0x78] sm:$0xff]
    %v164 = vld [vmem:[#allocation9 + $0x80] sm:$0xff]
    %v165 = vld [vmem:[#allocation9 + $0x88] sm:$0xff]
    %v166 = vld [vmem:[#allocation9 + $0x90] sm:$0xff]
    %v167 = vld [vmem:[#allocation9 + $0x98] sm:$0xff]
    %v168 = vld [vmem:[#allocation9 + $0xa0] sm:$0xff]
    %v169 = vld [vmem:[#allocation9 + $0xa8] sm:$0xff]
    %v170 = vld [vmem:[#allocation9 + $0xb0] sm:$0xff]
    %v171 = vld [vmem:[#allocation9 + $0xb8] sm:$0xff]
    %v172 = vld [vmem:[#allocation9 + $0xc0] sm:$0xff]
    %v173 = vld [vmem:[#allocation9 + $0xc8] sm:$0xff]
    %v174 = vld [vmem:[#allocation9 + $0xd0] sm:$0xff]
    %v175 = vld [vmem:[#allocation9 + $0xd8] sm:$0xff]
    %v176 = vld [vmem:[#allocation9 + $0xe0] sm:$0xff]
    %v177 = vld [vmem:[#allocation9 + $0xe8] sm:$0xff]
    %v178 = vld [vmem:[#allocation9 + $0xf0] sm:$0xff]
    %v179 = vld [vmem:[#allocation9 + $0xf8] sm:$0xff]
    %v180 = vld [vmem:[#allocation9 + $0x100] sm:$0xff]
    %v181 = vld [vmem:[#allocation9 + $0x108] sm:$0xff]
    %v182 = vld [vmem:[#allocation9 + $0x110] sm:$0xff]
    %v183 = vld [vmem:[#allocation9 + $0x118] sm:$0xff]
    %v184 = vld [vmem:[#allocation9 + $0x120] sm:$0xff]
    %v185 = vld [vmem:[#allocation9 + $0x128] sm:$0xff]
    %v186 = vld [vmem:[#allocation9 + $0x130] sm:$0xff]
    %v187 = vld [vmem:[#allocation9 + $0x138] sm:$0xff]
    %v188 = vld [vmem:[#allocation9 + $0x140] sm:$0xff]
    %v189 = vld [vmem:[#allocation9 + $0x148] sm:$0xff]
    %v190 = vld [vmem:[#allocation9 + $0x150] sm:$0xff]
    %v191 = vld [vmem:[#allocation9 + $0x158] sm:$0xff]
    %v192 = vld [vmem:[#allocation9 + $0x160] sm:$0xff]
    %v193 = vld [vmem:[#allocation9 + $0x168] sm:$0xff]
    %v194 = vld [vmem:[#allocation9 + $0x170] sm:$0xff]
    %v195 = vld [vmem:[#allocation9 + $0x178] sm:$0xff]
    %v196 = vld [vmem:[#allocation9 + $0x180] sm:$0xff]
    %v197 = vld [vmem:[#allocation9 + $0x188] sm:$0xff]
    %v198 = vld [vmem:[#allocation9 + $0x190] sm:$0xff]
    %v199 = vld [vmem:[#allocation9 + $0x198] sm:$0xff]
    %v200 = vld [vmem:[#allocation9 + $0x1a0] sm:$0xff]
    %v201 = vld [vmem:[#allocation9 + $0x1a8] sm:$0xff]
    %v202 = vld [vmem:[#allocation9 + $0x1b0] sm:$0xff]
    %v203 = vld [vmem:[#allocation9 + $0x1b8] sm:$0xff]
    %v204 = vld [vmem:[#allocation9 + $0x1c0] sm:$0xff]
    %v205 = vld [vmem:[#allocation9 + $0x1c8] sm:$0xff]
    %v206 = vld [vmem:[#allocation9 + $0x1d0] sm:$0xff]
    %v207 = vld [vmem:[#allocation9 + $0x1d8] sm:$0xff]
    %v208 = vld [vmem:[#allocation9 + $0x1e0] sm:$0xff]
    %v209 = vld [vmem:[#allocation9 + $0x1e8] sm:$0xff]
    %v210 = vld [vmem:[#allocation9 + $0x1f0] sm:$0xff]
    %v211 = vld [vmem:[#allocation9 + $0x1f8] sm:$0xff]
    %v212 = vld [vmem:[#allocation12] sm:$0xf]
    %v214 = vperm.slane %v212, 0
    %v215 = vperm.slane %v212, 1
    %v216 = vperm.slane %v212, 2
    %v217 = vperm.slane %v212, 3
    %222 = vmatpush.msra.mxu0 %v208
    %223 = vmatpush.msra.mxu0 %v204
    %224 = vmatpush.msra.mxu0 %v200
    %225 = vmatpush.msra.mxu0 %v196
    %226 = vmatpush.msra.mxu0 %v192
    %227 = vmatpush.msra.mxu0 %v188
    %228 = vmatpush.msra.mxu0 %v184
    %229 = vmatpush.msra.mxu0 %v180
    %230 = vmatpush.msra.mxu0 %v176
    %231 = vmatpush.msra.mxu0 %v172
    %232 = vmatpush.msra.mxu0 %v168
    %233 = vmatpush.msra.mxu0 %v164
    %234 = vmatpush.msra.mxu0 %v160
    %235 = vmatpush.msra.mxu0 %v156
    %236 = vmatpush.msra.mxu0 %v152
    %237 = vmatpush.msra.mxu0 %v148
    %238 = vmatmul.f32.gmra.mxu0 %v140
    %v239 = vpop.f32.mrf.mxu0
    %v240 = vadd.f32 %v214, %v239
    %241 = vmatmul.f32.gmra.mxu0 %v141
    %v242 = vpop.f32.mrf.mxu0
    %v243 = vadd.f32 %v214, %v242
    %244 = vmatmul.f32.gmra.mxu0 %v142
    %v245 = vpop.f32.mrf.mxu0
    %v246 = vadd.f32 %v214, %v245
    %247 = vmatmul.f32.gmra.mxu0 %v143
    %v248 = vpop.f32.mrf.mxu0
    %v249 = vadd.f32 %v214, %v248
    %250 = vmatmul.f32.gmra.mxu0 %v144
    %v251 = vpop.f32.mrf.mxu0
    %v252 = vadd.f32 %v214, %v251
    %253 = vmatmul.f32.gmra.mxu0 %v145
    %v254 = vpop.f32.mrf.mxu0
    %v255 = vadd.f32 %v214, %v254
    %256 = vmatmul.f32.gmra.mxu0 %v146
    %v257 = vpop.f32.mrf.mxu0
    %v258 = vadd.f32 %v214, %v257
    %259 = vmatmul.f32.gmra.mxu0 %v147
    %v260 = vpop.f32.mrf.mxu0
    %v261 = vadd.f32 %v214, %v260
    %262 = vdwg.mxu0
    %263 = vmatpush.msra.mxu0 %v209
    %264 = vmatpush.msra.mxu0 %v205
    %265 = vmatpush.msra.mxu0 %v201
    %266 = vmatpush.msra.mxu0 %v197
    %267 = vmatpush.msra.mxu0 %v193
    %268 = vmatpush.msra.mxu0 %v189
    %269 = vmatpush.msra.mxu0 %v185
    %270 = vmatpush.msra.mxu0 %v181
    %271 = vmatpush.msra.mxu0 %v177
    %272 = vmatpush.msra.mxu0 %v173
    %273 = vmatpush.msra.mxu0 %v169
    %274 = vmatpush.msra.mxu0 %v165
    %275 = vmatpush.msra.mxu0 %v161
    %276 = vmatpush.msra.mxu0 %v157
    %277 = vmatpush.msra.mxu0 %v153
    %278 = vmatpush.msra.mxu0 %v149
    %279 = vmatmul.f32.gmra.mxu0 %v140
    %v280 = vpop.f32.mrf.mxu0
    %v281 = vadd.f32 %v215, %v280
    %282 = vmatmul.f32.gmra.mxu0 %v141
    %v283 = vpop.f32.mrf.mxu0
    %v284 = vadd.f32 %v215, %v283
    %285 = vmatmul.f32.gmra.mxu0 %v142
    %v286 = vpop.f32.mrf.mxu0
    %v287 = vadd.f32 %v215, %v286
    %288 = vmatmul.f32.gmra.mxu0 %v143
    %v289 = vpop.f32.mrf.mxu0
    %v290 = vadd.f32 %v215, %v289
    %291 = vmatmul.f32.gmra.mxu0 %v144
    %v292 = vpop.f32.mrf.mxu0
    %v293 = vadd.f32 %v215, %v292
    %294 = vmatmul.f32.gmra.mxu0 %v145
    %v295 = vpop.f32.mrf.mxu0
    %v296 = vadd.f32 %v215, %v295
    %297 = vmatmul.f32.gmra.mxu0 %v146
    %v298 = vpop.f32.mrf.mxu0
    %v299 = vadd.f32 %v215, %v298
    %300 = vmatmul.f32.gmra.mxu0 %v147
    %v301 = vpop.f32.mrf.mxu0
    %v302 = vadd.f32 %v215, %v301
    %303 = vdwg.mxu0
    %304 = vmatpush.msra.mxu0 %v210
    %305 = vmatpush.msra.mxu0 %v206
    %306 = vmatpush.msra.mxu0 %v202
    %307 = vmatpush.msra.mxu0 %v198
    %308 = vmatpush.msra.mxu0 %v194
    %309 = vmatpush.msra.mxu0 %v190
    %310 = vmatpush.msra.mxu0 %v186
    %311 = vmatpush.msra.mxu0 %v182
    %312 = vmatpush.msra.mxu0 %v178
    %313 = vmatpush.msra.mxu0 %v174
    %314 = vmatpush.msra.mxu0 %v170
    %315 = vmatpush.msra.mxu0 %v166
    %316 = vmatpush.msra.mxu0 %v162
    %317 = vmatpush.msra.mxu0 %v158
    %318 = vmatpush.msra.mxu0 %v154
    %319 = vmatpush.msra.mxu0 %v150
    %320 = vmatmul.f32.gmra.mxu0 %v140
    %v321 = vpop.f32.mrf.mxu0
    %v322 = vadd.f32 %v216, %v321
    %323 = vmatmul.f32.gmra.mxu0 %v141
    %v324 = vpop.f32.mrf.mxu0
    %v325 = vadd.f32 %v216, %v324
    %326 = vmatmul.f32.gmra.mxu0 %v142
    %v327 = vpop.f32.mrf.mxu0
    %v328 = vadd.f32 %v216, %v327
    %329 = vmatmul.f32.gmra.mxu0 %v143
    %v330 = vpop.f32.mrf.mxu0
    %v331 = vadd.f32 %v216, %v330
    %332 = vmatmul.f32.gmra.mxu0 %v144
    %v333 = vpop.f32.mrf.mxu0
    %v334 = vadd.f32 %v216, %v333
    %335 = vmatmul.f32.gmra.mxu0 %v145
    %v336 = vpop.f32.mrf.mxu0
    %v337 = vadd.f32 %v216, %v336
    %338 = vmatmul.f32.gmra.mxu0 %v146
    %v339 = vpop.f32.mrf.mxu0
    %v340 = vadd.f32 %v216, %v339
    %341 = vmatmul.f32.gmra.mxu0 %v147
    %v342 = vpop.f32.mrf.mxu0
    %v343 = vadd.f32 %v216, %v342
    %344 = vdwg.mxu0
    %345 = vmatpush.msra.mxu0 %v211
    %346 = vmatpush.msra.mxu0 %v207
    %347 = vmatpush.msra.mxu0 %v203
    %348 = vmatpush.msra.mxu0 %v199
    %349 = vmatpush.msra.mxu0 %v195
    %350 = vmatpush.msra.mxu0 %v191
    %351 = vmatpush.msra.mxu0 %v187
    %352 = vmatpush.msra.mxu0 %v183
    %353 = vmatpush.msra.mxu0 %v179
    %354 = vmatpush.msra.mxu0 %v175
    %355 = vmatpush.msra.mxu0 %v171
    %356 = vmatpush.msra.mxu0 %v167
    %357 = vmatpush.msra.mxu0 %v163
    %358 = vmatpush.msra.mxu0 %v159
    %359 = vmatpush.msra.mxu0 %v155
    %360 = vmatpush.msra.mxu0 %v151
    %361 = vmatmul.f32.gmra.mxu0 %v140
    %v362 = vpop.f32.mrf.mxu0
    %v363 = vadd.f32 %v217, %v362
    %364 = vmatmul.f32.gmra.mxu0 %v141
    %v365 = vpop.f32.mrf.mxu0
    %v366 = vadd.f32 %v217, %v365
    %367 = vmatmul.f32.gmra.mxu0 %v142
    %v368 = vpop.f32.mrf.mxu0
    %v369 = vadd.f32 %v217, %v368
    %370 = vmatmul.f32.gmra.mxu0 %v143
    %v371 = vpop.f32.mrf.mxu0
    %v372 = vadd.f32 %v217, %v371
    %373 = vmatmul.f32.gmra.mxu0 %v144
    %v374 = vpop.f32.mrf.mxu0
    %v375 = vadd.f32 %v217, %v374
    %376 = vmatmul.f32.gmra.mxu0 %v145
    %v377 = vpop.f32.mrf.mxu0
    %v378 = vadd.f32 %v217, %v377
    %379 = vmatmul.f32.gmra.mxu0 %v146
    %v380 = vpop.f32.mrf.mxu0
    %v381 = vadd.f32 %v217, %v380
    %382 = vmatmul.f32.gmra.mxu0 %v147
    %v383 = vpop.f32.mrf.mxu0
    %v384 = vadd.f32 %v217, %v383
    %385 = vdwg.mxu0
    %386 = vst [vmem:[#allocation3] sm:$0xff] %v240
    %387 = vst [vmem:[#allocation3 + $0x8] sm:$0xff] %v281
    %388 = vst [vmem:[#allocation3 + $0x10] sm:$0xff] %v322
    %389 = vst [vmem:[#allocation3 + $0x18] sm:$0xff] %v363
    %390 = vst [vmem:[#allocation3 + $0x20] sm:$0xff] %v243
    %391 = vst [vmem:[#allocation3 + $0x28] sm:$0xff] %v284
    %392 = vst [vmem:[#allocation3 + $0x30] sm:$0xff] %v325
    %393 = vst [vmem:[#allocation3 + $0x38] sm:$0xff] %v366
    %394 = vst [vmem:[#allocation3 + $0x40] sm:$0xff] %v246
    %395 = vst [vmem:[#allocation3 + $0x48] sm:$0xff] %v287
    %396 = vst [vmem:[#allocation3 + $0x50] sm:$0xff] %v328
    %397 = vst [vmem:[#allocation3 + $0x58] sm:$0xff] %v369
    %398 = vst [vmem:[#allocation3 + $0x60] sm:$0xff] %v249
    %399 = vst [vmem:[#allocation3 + $0x68] sm:$0xff] %v290
    %400 = vst [vmem:[#allocation3 + $0x70] sm:$0xff] %v331
    %401 = vst [vmem:[#allocation3 + $0x78] sm:$0xff] %v372
    %402 = vst [vmem:[#allocation3 + $0x80] sm:$0xff] %v252
    %403 = vst [vmem:[#allocation3 + $0x88] sm:$0xff] %v293
    %404 = vst [vmem:[#allocation3 + $0x90] sm:$0xff] %v334
    %405 = vst [vmem:[#allocation3 + $0x98] sm:$0xff] %v375
    %406 = vst [vmem:[#allocation3 + $0xa0] sm:$0xff] %v255
    %407 = vst [vmem:[#allocation3 + $0xa8] sm:$0xff] %v296
    %408 = vst [vmem:[#allocation3 + $0xb0] sm:$0xff] %v337
    %409 = vst [vmem:[#allocation3 + $0xb8] sm:$0xff] %v378
    %410 = vst [vmem:[#allocation3 + $0xc0] sm:$0xff] %v258
    %411 = vst [vmem:[#allocation3 + $0xc8] sm:$0xff] %v299
    %412 = vst [vmem:[#allocation3 + $0xd0] sm:$0xff] %v340
    %413 = vst [vmem:[#allocation3 + $0xd8] sm:$0xff] %v381
    %414 = vst [vmem:[#allocation3 + $0xe0] sm:$0xff] %v261
    %415 = vst [vmem:[#allocation3 + $0xe8] sm:$0xff] %v302
    %416 = vst [vmem:[#allocation3 + $0xf0] sm:$0xff] %v343
    %417 = vst [vmem:[#allocation3 + $0xf8] sm:$0xff] %v384
    %418 = vst [vmem:[#allocation4] sm:$0xff] 0.0
    %419 = vst [vmem:[#allocation5] sm:$0xff] 0.0
    %v420 = vld [vmem:[#allocation4] sm:$0xff]
    %v421 = vld [vmem:[#allocation5] sm:$0xff]
    %v422 = vld [vmem:[#allocation3] sm:$0xff]
    %v423 = vld [vmem:[#allocation3 + $0x8] sm:$0xff]
    %v424 = vld [vmem:[#allocation3 + $0x10] sm:$0xff]
    %v425 = vld [vmem:[#allocation3 + $0x18] sm:$0xff]
    %v426 = vld [vmem:[#allocation11] sm:$0xff]
    %v427 = vld [vmem:[#allocation11 + $0x8] sm:$0xff]
    %v428 = vld [vmem:[#allocation11 + $0x10] sm:$0xff]
    %v429 = vld [vmem:[#allocation11 + $0x18] sm:$0xff]
    %v430 = vld [vmem:[#allocation11 + $0x20] sm:$0xff]
    %v431 = vld [vmem:[#allocation11 + $0x28] sm:$0xff]
    %v432 = vld [vmem:[#allocation11 + $0x30] sm:$0xff]
    %v433 = vld [vmem:[#allocation11 + $0x38] sm:$0xff]
    %v434 = vld [vmem:[#allocation11 + $0x40] sm:$0xff]
    %v435 = vld [vmem:[#allocation11 + $0x48] sm:$0xff]
    %v436 = vld [vmem:[#allocation11 + $0x50] sm:$0xff]
    %v437 = vld [vmem:[#allocation11 + $0x58] sm:$0xff]
    %v438 = vld [vmem:[#allocation11 + $0x60] sm:$0xff]
    %v439 = vld [vmem:[#allocation11 + $0x68] sm:$0xff]
    %v440 = vld [vmem:[#allocation11 + $0x70] sm:$0xff]
    %v441 = vld [vmem:[#allocation11 + $0x78] sm:$0xff]
    %v442 = vld [vmem:[#allocation11 + $0x80] sm:$0xff]
    %v443 = vld [vmem:[#allocation11 + $0x88] sm:$0xff]
    %v444 = vld [vmem:[#allocation11 + $0x90] sm:$0xff]
    %v445 = vld [vmem:[#allocation11 + $0x98] sm:$0xff]
    %v446 = vld [vmem:[#allocation11 + $0xa0] sm:$0xff]
    %v447 = vld [vmem:[#allocation11 + $0xa8] sm:$0xff]
    %v448 = vld [vmem:[#allocation11 + $0xb0] sm:$0xff]
    %v449 = vld [vmem:[#allocation11 + $0xb8] sm:$0xff]
    %v450 = vld [vmem:[#allocation11 + $0xc0] sm:$0xff]
    %v451 = vld [vmem:[#allocation11 + $0xc8] sm:$0xff]
    %v452 = vld [vmem:[#allocation11 + $0xd0] sm:$0xff]
    %v453 = vld [vmem:[#allocation11 + $0xd8] sm:$0xff]
    %v454 = vld [vmem:[#allocation11 + $0xe0] sm:$0xff]
    %v455 = vld [vmem:[#allocation11 + $0xe8] sm:$0xff]
    %v456 = vld [vmem:[#allocation11 + $0xf0] sm:$0xff]
    %v457 = vld [vmem:[#allocation11 + $0xf8] sm:$0xff]
    %v458 = vld [vmem:[#allocation11 + $0x100] sm:$0xff]
    %v459 = vld [vmem:[#allocation11 + $0x108] sm:$0xff]
    %v460 = vld [vmem:[#allocation11 + $0x110] sm:$0xff]
    %v461 = vld [vmem:[#allocation11 + $0x118] sm:$0xff]
    %v462 = vld [vmem:[#allocation11 + $0x120] sm:$0xff]
    %v463 = vld [vmem:[#allocation11 + $0x128] sm:$0xff]
    %v464 = vld [vmem:[#allocation11 + $0x130] sm:$0xff]
    %v465 = vld [vmem:[#allocation11 + $0x138] sm:$0xff]
    %v466 = vld [vmem:[#allocation11 + $0x140] sm:$0xff]
    %v467 = vld [vmem:[#allocation11 + $0x148] sm:$0xff]
    %v468 = vld [vmem:[#allocation11 + $0x150] sm:$0xff]
    %v469 = vld [vmem:[#allocation11 + $0x158] sm:$0xff]
    %v470 = vld [vmem:[#allocation11 + $0x160] sm:$0xff]
    %v471 = vld [vmem:[#allocation11 + $0x168] sm:$0xff]
    %v472 = vld [vmem:[#allocation11 + $0x170] sm:$0xff]
    %v473 = vld [vmem:[#allocation11 + $0x178] sm:$0xff]
    %v474 = vld [vmem:[#allocation11 + $0x180] sm:$0xff]
    %v475 = vld [vmem:[#allocation11 + $0x188] sm:$0xff]
    %v476 = vld [vmem:[#allocation11 + $0x190] sm:$0xff]
    %v477 = vld [vmem:[#allocation11 + $0x198] sm:$0xff]
    %v478 = vld [vmem:[#allocation11 + $0x1a0] sm:$0xff]
    %v479 = vld [vmem:[#allocation11 + $0x1a8] sm:$0xff]
    %v480 = vld [vmem:[#allocation11 + $0x1b0] sm:$0xff]
    %v481 = vld [vmem:[#allocation11 + $0x1b8] sm:$0xff]
    %v482 = vld [vmem:[#allocation11 + $0x1c0] sm:$0xff]
    %v483 = vld [vmem:[#allocation11 + $0x1c8] sm:$0xff]
    %v484 = vld [vmem:[#allocation11 + $0x1d0] sm:$0xff]
    %v485 = vld [vmem:[#allocation11 + $0x1d8] sm:$0xff]
    %v486 = vld [vmem:[#allocation11 + $0x1e0] sm:$0xff]
    %v487 = vld [vmem:[#allocation11 + $0x1e8] sm:$0xff]
    %v488 = vld [vmem:[#allocation11 + $0x1f0] sm:$0xff]
    %v489 = vld [vmem:[#allocation11 + $0x1f8] sm:$0xff]
    %490 = vmatpush.msra.mxu0 %v486
    %491 = vmatpush.msra.mxu0 %v482
    %492 = vmatpush.msra.mxu0 %v478
    %493 = vmatpush.msra.mxu0 %v474
    %494 = vmatpush.msra.mxu0 %v470
    %495 = vmatpush.msra.mxu0 %v466
    %496 = vmatpush.msra.mxu0 %v462
    %497 = vmatpush.msra.mxu0 %v458
    %498 = vmatpush.msra.mxu0 %v454
    %499 = vmatpush.msra.mxu0 %v450
    %500 = vmatpush.msra.mxu0 %v446
    %501 = vmatpush.msra.mxu0 %v442
    %502 = vmatpush.msra.mxu0 %v438
    %503 = vmatpush.msra.mxu0 %v434
    %504 = vmatpush.msra.mxu0 %v430
    %505 = vmatpush.msra.mxu0 %v426
    %506 = vmatmul.f32.gmra.mxu0 %v420
    %v507 = vpop.f32.mrf.mxu0
    %v508 = vadd.f32 0.0, %v507
    %509 = vdwg.mxu0
    %510 = vmatpush.msra.mxu0 %v487
    %511 = vmatpush.msra.mxu0 %v483
    %512 = vmatpush.msra.mxu0 %v479
    %513 = vmatpush.msra.mxu0 %v475
    %514 = vmatpush.msra.mxu0 %v471
    %515 = vmatpush.msra.mxu0 %v467
    %516 = vmatpush.msra.mxu0 %v463
    %517 = vmatpush.msra.mxu0 %v459
    %518 = vmatpush.msra.mxu0 %v455
    %519 = vmatpush.msra.mxu0 %v451
    %520 = vmatpush.msra.mxu0 %v447
    %521 = vmatpush.msra.mxu0 %v443
    %522 = vmatpush.msra.mxu0 %v439
    %523 = vmatpush.msra.mxu0 %v435
    %524 = vmatpush.msra.mxu0 %v431
    %525 = vmatpush.msra.mxu0 %v427
    %526 = vmatmul.f32.gmra.mxu0 %v420
    %v527 = vpop.f32.mrf.mxu0
    %v528 = vadd.f32 0.0, %v527
    %529 = vdwg.mxu0
    %530 = vmatpush.msra.mxu0 %v488
    %531 = vmatpush.msra.mxu0 %v484
    %532 = vmatpush.msra.mxu0 %v480
    %533 = vmatpush.msra.mxu0 %v476
    %534 = vmatpush.msra.mxu0 %v472
    %535 = vmatpush.msra.mxu0 %v468
    %536 = vmatpush.msra.mxu0 %v464
    %537 = vmatpush.msra.mxu0 %v460
    %538 = vmatpush.msra.mxu0 %v456
    %539 = vmatpush.msra.mxu0 %v452
    %540 = vmatpush.msra.mxu0 %v448
    %541 = vmatpush.msra.mxu0 %v444
    %542 = vmatpush.msra.mxu0 %v440
    %543 = vmatpush.msra.mxu0 %v436
    %544 = vmatpush.msra.mxu0 %v432
    %545 = vmatpush.msra.mxu0 %v428
    %546 = vmatmul.f32.gmra.mxu0 %v420
    %v547 = vpop.f32.mrf.mxu0
    %v548 = vadd.f32 0.0, %v547
    %549 = vdwg.mxu0
    %550 = vmatpush.msra.mxu0 %v489
    %551 = vmatpush.msra.mxu0 %v485
    %552 = vmatpush.msra.mxu0 %v481
    %553 = vmatpush.msra.mxu0 %v477
    %554 = vmatpush.msra.mxu0 %v473
    %555 = vmatpush.msra.mxu0 %v469
    %556 = vmatpush.msra.mxu0 %v465
    %557 = vmatpush.msra.mxu0 %v461
    %558 = vmatpush.msra.mxu0 %v457
    %559 = vmatpush.msra.mxu0 %v453
    %560 = vmatpush.msra.mxu0 %v449
    %561 = vmatpush.msra.mxu0 %v445
    %562 = vmatpush.msra.mxu0 %v441
    %563 = vmatpush.msra.mxu0 %v437
    %564 = vmatpush.msra.mxu0 %v433
    %565 = vmatpush.msra.mxu0 %v429
    %566 = vmatmul.f32.gmra.mxu0 %v420
    %v567 = vpop.f32.mrf.mxu0
    %v568 = vadd.f32 0.0, %v567
    %569 = vdwg.mxu0
    %v570 = vadd.f32 %v422, %v508
    %v571 = vadd.f32 %v423, %v528
    %v572 = vadd.f32 %v424, %v548
    %v573 = vadd.f32 %v425, %v568
    %v574 = vxor.u32 %v570, 2147483648
    %v575 = vmul.f32 %v574, 1.442695
    %v576 = vpow.pop %v575
    %v577 = vadd.f32 %v576, 1.0
    %v578 = vrcp.pop %v577
    %v579 = vmul.f32 %v577, %v578
    %v580 = vsub.f32 1.0, %v579
    %v581 = vmul.f32 %v578, %v580
    %v582 = vadd.f32 %v578, %v581
    %vm583 = vweird.f32 %v577
    %vm584 = vweird.f32 %v578
    %vm585 = vmor %vm583, %vm584
    %v586 = vsel %vm585, %v578, %v582
    %v587 = vand.u32 2147483647, %v577
    %vm588 = vcmp.eq.f32.partialorder %v587, 8.507059e+37
    %v589 = vand.u32 %v577, 2147483648
    %v590 = vor.u32 1.1754944e-38, %v589
    %v591 = vsel %vm588, %v590, %v586
    %v592 = vmul.f32 1.0, %v591
    %v593 = vxor.u32 %v571, 2147483648
    %v594 = vmul.f32 %v593, 1.442695
    %v595 = vpow.pop %v594
    %v596 = vadd.f32 %v595, 1.0
    %v597 = vrcp.pop %v596
    %v598 = vmul.f32 %v596, %v597
    %v599 = vsub.f32 1.0, %v598
    %v600 = vmul.f32 %v597, %v599
    %v601 = vadd.f32 %v597, %v600
    %vm602 = vweird.f32 %v596
    %vm603 = vweird.f32 %v597
    %vm604 = vmor %vm602, %vm603
    %v605 = vsel %vm604, %v597, %v601
    %v606 = vand.u32 2147483647, %v596
    %vm607 = vcmp.eq.f32.partialorder %v606, 8.507059e+37
    %v608 = vand.u32 %v596, 2147483648
    %v609 = vor.u32 1.1754944e-38, %v608
    %v610 = vsel %vm607, %v609, %v605
    %v611 = vmul.f32 1.0, %v610
    %v612 = vtanh.pop %v572
    %v613 = vxor.u32 %v573, 2147483648
    %v614 = vmul.f32 %v613, 1.442695
    %v615 = vpow.pop %v614
    %v616 = vadd.f32 %v615, 1.0
    %v617 = vrcp.pop %v616
    %v618 = vmul.f32 %v616, %v617
    %v619 = vsub.f32 1.0, %v618
    %v620 = vmul.f32 %v617, %v619
    %v621 = vadd.f32 %v617, %v620
    %vm622 = vweird.f32 %v616
    %vm623 = vweird.f32 %v617
    %vm624 = vmor %vm622, %vm623
    %v625 = vsel %vm624, %v617, %v621
    %v626 = vand.u32 2147483647, %v616
    %vm627 = vcmp.eq.f32.partialorder %v626, 8.507059e+37
    %v628 = vand.u32 %v616, 2147483648
    %v629 = vor.u32 1.1754944e-38, %v628
    %v630 = vsel %vm627, %v629, %v625
    %v631 = vmul.f32 1.0, %v630
    %v632 = vmul.f32 %v611, %v421
    %v633 = vmul.f32 %v592, %v612
    %v634 = vadd.f32 %v632, %v633
    %v635 = vtanh.pop %v634
    %v636 = vmul.f32 %v631, %v635
    %637 = vst [vmem:[#allocation5] sm:$0xff] %v634
    %638 = vst [vmem:[#allocation4] sm:$0xff] %v636
    %639 = vst [vmem:[#allocation2] sm:$0xff] %v636
    %v640 = vld [vmem:[#allocation4] sm:$0xff]
    %v641 = vld [vmem:[#allocation5] sm:$0xff]
    %s642 = scalar_lea.vmem [#allocation3], 32
    %v643 = vld [vmem:[%s642] sm:$0xff]
    %v644 = vld [vmem:[%s642 + $0x8] sm:$0xff]
    %v645 = vld [vmem:[%s642 + $0x10] sm:$0xff]
    %v646 = vld [vmem:[%s642 + $0x18] sm:$0xff]
    %v647 = vld [vmem:[#allocation11] sm:$0xff]
    %v648 = vld [vmem:[#allocation11 + $0x8] sm:$0xff]
    %v649 = vld [vmem:[#allocation11 + $0x10] sm:$0xff]
    %v650 = vld [vmem:[#allocation11 + $0x18] sm:$0xff]
    %v651 = vld [vmem:[#allocation11 + $0x20] sm:$0xff]
    %v652 = vld [vmem:[#allocation11 + $0x28] sm:$0xff]
    %v653 = vld [vmem:[#allocation11 + $0x30] sm:$0xff]
    %v654 = vld [vmem:[#allocation11 + $0x38] sm:$0xff]
    %v655 = vld [vmem:[#allocation11 + $0x40] sm:$0xff]
    %v656 = vld [vmem:[#allocation11 + $0x48] sm:$0xff]
    %v657 = vld [vmem:[#allocation11 + $0x50] sm:$0xff]
    %v658 = vld [vmem:[#allocation11 + $0x58] sm:$0xff]
    %v659 = vld [vmem:[#allocation11 + $0x60] sm:$0xff]
    %v660 = vld [vmem:[#allocation11 + $0x68] sm:$0xff]
    %v661 = vld [vmem:[#allocation11 + $0x70] sm:$0xff]
    %v662 = vld [vmem:[#allocation11 + $0x78] sm:$0xff]
    %v663 = vld [vmem:[#allocation11 + $0x80] sm:$0xff]
    %v664 = vld [vmem:[#allocation11 + $0x88] sm:$0xff]
    %v665 = vld [vmem:[#allocation11 + $0x90] sm:$0xff]
    %v666 = vld [vmem:[#allocation11 + $0x98] sm:$0xff]
    %v667 = vld [vmem:[#allocation11 + $0xa0] sm:$0xff]
    %v668 = vld [vmem:[#allocation11 + $0xa8] sm:$0xff]
    %v669 = vld [vmem:[#allocation11 + $0xb0] sm:$0xff]
    %v670 = vld [vmem:[#allocation11 + $0xb8] sm:$0xff]
    %v671 = vld [vmem:[#allocation11 + $0xc0] sm:$0xff]
    %v672 = vld [vmem:[#allocation11 + $0xc8] sm:$0xff]
    %v673 = vld [vmem:[#allocation11 + $0xd0] sm:$0xff]
    %v674 = vld [vmem:[#allocation11 + $0xd8] sm:$0xff]
    %v675 = vld [vmem:[#allocation11 + $0xe0] sm:$0xff]
    %v676 = vld [vmem:[#allocation11 + $0xe8] sm:$0xff]
    %v677 = vld [vmem:[#allocation11 + $0xf0] sm:$0xff]
    %v678 = vld [vmem:[#allocation11 + $0xf8] sm:$0xff]
    %v679 = vld [vmem:[#allocation11 + $0x100] sm:$0xff]
    %v680 = vld [vmem:[#allocation11 + $0x108] sm:$0xff]
    %v681 = vld [vmem:[#allocation11 + $0x110] sm:$0xff]
    %v682 = vld [vmem:[#allocation11 + $0x118] sm:$0xff]
    %v683 = vld [vmem:[#allocation11 + $0x120] sm:$0xff]
    %v684 = vld [vmem:[#allocation11 + $0x128] sm:$0xff]
    %v685 = vld [vmem:[#allocation11 + $0x130] sm:$0xff]
    %v686 = vld [vmem:[#allocation11 + $0x138] sm:$0xff]
    %v687 = vld [vmem:[#allocation11 + $0x140] sm:$0xff]
    %v688 = vld [vmem:[#allocation11 + $0x148] sm:$0xff]
    %v689 = vld [vmem:[#allocation11 + $0x150] sm:$0xff]
    %v690 = vld [vmem:[#allocation11 + $0x158] sm:$0xff]
    %v691 = vld [vmem:[#allocation11 + $0x160] sm:$0xff]
    %v692 = vld [vmem:[#allocation11 + $0x168] sm:$0xff]
    %v693 = vld [vmem:[#allocation11 + $0x170] sm:$0xff]
    %v694 = vld [vmem:[#allocation11 + $0x178] sm:$0xff]
    %v695 = vld [vmem:[#allocation11 + $0x180] sm:$0xff]
    %v696 = vld [vmem:[#allocation11 + $0x188] sm:$0xff]
    %v697 = vld [vmem:[#allocation11 + $0x190] sm:$0xff]
    %v698 = vld [vmem:[#allocation11 + $0x198] sm:$0xff]
    %v699 = vld [vmem:[#allocation11 + $0x1a0] sm:$0xff]
    %v700 = vld [vmem:[#allocation11 + $0x1a8] sm:$0xff]
    %v701 = vld [vmem:[#allocation11 + $0x1b0] sm:$0xff]
    %v702 = vld [vmem:[#allocation11 + $0x1b8] sm:$0xff]
    %v703 = vld [vmem:[#allocation11 + $0x1c0] sm:$0xff]
    %v704 = vld [vmem:[#allocation11 + $0x1c8] sm:$0xff]
    %v705 = vld [vmem:[#allocation11 + $0x1d0] sm:$0xff]
    %v706 = vld [vmem:[#allocation11 + $0x1d8] sm:$0xff]
    %v707 = vld [vmem:[#allocation11 + $0x1e0] sm:$0xff]
    %v708 = vld [vmem:[#allocation11 + $0x1e8] sm:$0xff]
    %v709 = vld [vmem:[#allocation11 + $0x1f0] sm:$0xff]
    %v710 = vld [vmem:[#allocation11 + $0x1f8] sm:$0xff]
    %711 = vmatpush.msra.mxu0 %v707
    %712 = vmatpush.msra.mxu0 %v703
    %713 = vmatpush.msra.mxu0 %v699
    %714 = vmatpush.msra.mxu0 %v695
    %715 = vmatpush.msra.mxu0 %v691
    %716 = vmatpush.msra.mxu0 %v687
    %717 = vmatpush.msra.mxu0 %v683
    %718 = vmatpush.msra.mxu0 %v679
    %719 = vmatpush.msra.mxu0 %v675
    %720 = vmatpush.msra.mxu0 %v671
    %721 = vmatpush.msra.mxu0 %v667
    %722 = vmatpush.msra.mxu0 %v663
    %723 = vmatpush.msra.mxu0 %v659
    %724 = vmatpush.msra.mxu0 %v655
    %725 = vmatpush.msra.mxu0 %v651
    %726 = vmatpush.msra.mxu0 %v647
    %727 = vmatmul.f32.gmra.mxu0 %v640
    %v728 = vpop.f32.mrf.mxu0
    %v729 = vadd.f32 0.0, %v728
    %730 = vdwg.mxu0
    %731 = vmatpush.msra.mxu0 %v708
    %732 = vmatpush.msra.mxu0 %v704
    %733 = vmatpush.msra.mxu0 %v700
    %734 = vmatpush.msra.mxu0 %v696
    %735 = vmatpush.msra.mxu0 %v692
    %736 = vmatpush.msra.mxu0 %v688
    %737 = vmatpush.msra.mxu0 %v684
    %738 = vmatpush.msra.mxu0 %v680
    %739 = vmatpush.msra.mxu0 %v676
    %740 = vmatpush.msra.mxu0 %v672
    %741 = vmatpush.msra.mxu0 %v668
    %742 = vmatpush.msra.mxu0 %v664
    %743 = vmatpush.msra.mxu0 %v660
    %744 = vmatpush.msra.mxu0 %v656
    %745 = vmatpush.msra.mxu0 %v652
    %746 = vmatpush.msra.mxu0 %v648
    %747 = vmatmul.f32.gmra.mxu0 %v640
    %v748 = vpop.f32.mrf.mxu0
    %v749 = vadd.f32 0.0, %v748
    %750 = vdwg.mxu0
    %751 = vmatpush.msra.mxu0 %v709
    %752 = vmatpush.msra.mxu0 %v705
    %753 = vmatpush.msra.mxu0 %v701
    %754 = vmatpush.msra.mxu0 %v697
    %755 = vmatpush.msra.mxu0 %v693
    %756 = vmatpush.msra.mxu0 %v689
    %757 = vmatpush.msra.mxu0 %v685
    %758 = vmatpush.msra.mxu0 %v681
    %759 = vmatpush.msra.mxu0 %v677
    %760 = vmatpush.msra.mxu0 %v673
    %761 = vmatpush.msra.mxu0 %v669
    %762 = vmatpush.msra.mxu0 %v665
    %763 = vmatpush.msra.mxu0 %v661
    %764 = vmatpush.msra.mxu0 %v657
    %765 = vmatpush.msra.mxu0 %v653
    %766 = vmatpush.msra.mxu0 %v649
    %767 = vmatmul.f32.gmra.mxu0 %v640
    %v768 = vpop.f32.mrf.mxu0
    %v769 = vadd.f32 0.0, %v768
    %770 = vdwg.mxu0
    %771 = vmatpush.msra.mxu0 %v710
    %772 = vmatpush.msra.mxu0 %v706
    %773 = vmatpush.msra.mxu0 %v702
    %774 = vmatpush.msra.mxu0 %v698
    %775 = vmatpush.msra.mxu0 %v694
    %776 = vmatpush.msra.mxu0 %v690
    %777 = vmatpush.msra.mxu0 %v686
    %778 = vmatpush.msra.mxu0 %v682
    %779 = vmatpush.msra.mxu0 %v678
    %780 = vmatpush.msra.mxu0 %v674
    %781 = vmatpush.msra.mxu0 %v670
    %782 = vmatpush.msra.mxu0 %v666
    %783 = vmatpush.msra.mxu0 %v662
    %784 = vmatpush.msra.mxu0 %v658
    %785 = vmatpush.msra.mxu0 %v654
    %786 = vmatpush.msra.mxu0 %v650
    %787 = vmatmul.f32.gmra.mxu0 %v640
    %v788 = vpop.f32.mrf.mxu0
    %v789 = vadd.f32 0.0, %v788
    %790 = vdwg.mxu0
    %v791 = vadd.f32 %v643, %v729
    %v792 = vadd.f32 %v644, %v749
    %v793 = vadd.f32 %v645, %v769
    %v794 = vadd.f32 %v646, %v789
    %v795 = vxor.u32 %v791, 2147483648
    %v796 = vmul.f32 %v795, 1.442695
    %v797 = vpow.pop %v796
    %v798 = vadd.f32 %v797, 1.0
    %v799 = vrcp.pop %v798
    %v800 = vmul.f32 %v798, %v799
    %v801 = vsub.f32 1.0, %v800
    %v802 = vmul.f32 %v799, %v801
    %v803 = vadd.f32 %v799, %v802
    %vm804 = vweird.f32 %v798
    %vm805 = vweird.f32 %v799
    %vm806 = vmor %vm804, %vm805
    %v807 = vsel %vm806, %v799, %v803
    %v808 = vand.u32 2147483647, %v798
    %vm809 = vcmp.eq.f32.partialorder %v808, 8.507059e+37
    %v810 = vand.u32 %v798, 2147483648
    %v811 = vor.u32 1.1754944e-38, %v810
    %v812 = vsel %vm809, %v811, %v807
    %v813 = vmul.f32 1.0, %v812
    %v814 = vxor.u32 %v792, 2147483648
    %v815 = vmul.f32 %v814, 1.442695
    %v816 = vpow.pop %v815
    %v817 = vadd.f32 %v816, 1.0
    %v818 = vrcp.pop %v817
    %v819 = vmul.f32 %v817, %v818
    %v820 = vsub.f32 1.0, %v819
    %v821 = vmul.f32 %v818, %v820
    %v822 = vadd.f32 %v818, %v821
    %vm823 = vweird.f32 %v817
    %vm824 = vweird.f32 %v818
    %vm825 = vmor %vm823, %vm824
    %v826 = vsel %vm825, %v818, %v822
    %v827 = vand.u32 2147483647, %v817
    %vm828 = vcmp.eq.f32.partialorder %v827, 8.507059e+37
    %v829 = vand.u32 %v817, 2147483648
    %v830 = vor.u32 1.1754944e-38, %v829
    %v831 = vsel %vm828, %v830, %v826
    %v832 = vmul.f32 1.0, %v831
    %v833 = vtanh.pop %v793
    %v834 = vxor.u32 %v794, 2147483648
    %v835 = vmul.f32 %v834, 1.442695
    %v836 = vpow.pop %v835
    %v837 = vadd.f32 %v836, 1.0
    %v838 = vrcp.pop %v837
    %v839 = vmul.f32 %v837, %v838
    %v840 = vsub.f32 1.0, %v839
    %v841 = vmul.f32 %v838, %v840
    %v842 = vadd.f32 %v838, %v841
    %vm843 = vweird.f32 %v837
    %vm844 = vweird.f32 %v838
    %vm845 = vmor %vm843, %vm844
    %v846 = vsel %vm845, %v838, %v842
    %v847 = vand.u32 2147483647, %v837
    %vm848 = vcmp.eq.f32.partialorder %v847, 8.507059e+37
    %v849 = vand.u32 %v837, 2147483648
    %v850 = vor.u32 1.1754944e-38, %v849
    %v851 = vsel %vm848, %v850, %v846
    %v852 = vmul.f32 1.0, %v851
    %v853 = vmul.f32 %v832, %v641
    %v854 = vmul.f32 %v813, %v833
    %v855 = vadd.f32 %v853, %v854
    %v856 = vtanh.pop %v855
    %v857 = vmul.f32 %v852, %v856
    %858 = vst [vmem:[#allocation5] sm:$0xff] %v855
    %859 = vst [vmem:[#allocation4] sm:$0xff] %v857
    %s860 = scalar_lea.vmem [#allocation2], 8
    %861 = vst [vmem:[%s860] sm:$0xff] %v857
    %v862 = vld [vmem:[#allocation4] sm:$0xff]
    %v863 = vld [vmem:[#allocation5] sm:$0xff]
    %s864 = scalar_lea.vmem [#allocation3], 64
    %v865 = vld [vmem:[%s864] sm:$0xff]
    %v866 = vld [vmem:[%s864 + $0x8] sm:$0xff]
    %v867 = vld [vmem:[%s864 + $0x10] sm:$0xff]
    %v868 = vld [vmem:[%s864 + $0x18] sm:$0xff]
    %v869 = vld [vmem:[#allocation11] sm:$0xff]
    %v870 = vld [vmem:[#allocation11 + $0x8] sm:$0xff]
    %v871 = vld [vmem:[#allocation11 + $0x10] sm:$0xff]
    %v872 = vld [vmem:[#allocation11 + $0x18] sm:$0xff]
    %v873 = vld [vmem:[#allocation11 + $0x20] sm:$0xff]
    %v874 = vld [vmem:[#allocation11 + $0x28] sm:$0xff]
    %v875 = vld [vmem:[#allocation11 + $0x30] sm:$0xff]
    %v876 = vld [vmem:[#allocation11 + $0x38] sm:$0xff]
    %v877 = vld [vmem:[#allocation11 + $0x40] sm:$0xff]
    %v878 = vld [vmem:[#allocation11 + $0x48] sm:$0xff]
    %v879 = vld [vmem:[#allocation11 + $0x50] sm:$0xff]
    %v880 = vld [vmem:[#allocation11 + $0x58] sm:$0xff]
    %v881 = vld [vmem:[#allocation11 + $0x60] sm:$0xff]
    %v882 = vld [vmem:[#allocation11 + $0x68] sm:$0xff]
    %v883 = vld [vmem:[#allocation11 + $0x70] sm:$0xff]
    %v884 = vld [vmem:[#allocation11 + $0x78] sm:$0xff]
    %v885 = vld [vmem:[#allocation11 + $0x80] sm:$0xff]
    %v886 = vld [vmem:[#allocation11 + $0x88] sm:$0xff]
    %v887 = vld [vmem:[#allocation11 + $0x90] sm:$0xff]
    %v888 = vld [vmem:[#allocation11 + $0x98] sm:$0xff]
    %v889 = vld [vmem:[#allocation11 + $0xa0] sm:$0xff]
    %v890 = vld [vmem:[#allocation11 + $0xa8] sm:$0xff]
    %v891 = vld [vmem:[#allocation11 + $0xb0] sm:$0xff]
    %v892 = vld [vmem:[#allocation11 + $0xb8] sm:$0xff]
    %v893 = vld [vmem:[#allocation11 + $0xc0] sm:$0xff]
    %v894 = vld [vmem:[#allocation11 + $0xc8] sm:$0xff]
    %v895 = vld [vmem:[#allocation11 + $0xd0] sm:$0xff]
    %v896 = vld [vmem:[#allocation11 + $0xd8] sm:$0xff]
    %v897 = vld [vmem:[#allocation11 + $0xe0] sm:$0xff]
    %v898 = vld [vmem:[#allocation11 + $0xe8] sm:$0xff]
    %v899 = vld [vmem:[#allocation11 + $0xf0] sm:$0xff]
    %v900 = vld [vmem:[#allocation11 + $0xf8] sm:$0xff]
    %v901 = vld [vmem:[#allocation11 + $0x100] sm:$0xff]
    %v902 = vld [vmem:[#allocation11 + $0x108] sm:$0xff]
    %v903 = vld [vmem:[#allocation11 + $0x110] sm:$0xff]
    %v904 = vld [vmem:[#allocation11 + $0x118] sm:$0xff]
    %v905 = vld [vmem:[#allocation11 + $0x120] sm:$0xff]
    %v906 = vld [vmem:[#allocation11 + $0x128] sm:$0xff]
    %v907 = vld [vmem:[#allocation11 + $0x130] sm:$0xff]
    %v908 = vld [vmem:[#allocation11 + $0x138] sm:$0xff]
    %v909 = vld [vmem:[#allocation11 + $0x140] sm:$0xff]
    %v910 = vld [vmem:[#allocation11 + $0x148] sm:$0xff]
    %v911 = vld [vmem:[#allocation11 + $0x150] sm:$0xff]
    %v912 = vld [vmem:[#allocation11 + $0x158] sm:$0xff]
    %v913 = vld [vmem:[#allocation11 + $0x160] sm:$0xff]
    %v914 = vld [vmem:[#allocation11 + $0x168] sm:$0xff]
    %v915 = vld [vmem:[#allocation11 + $0x170] sm:$0xff]
    %v916 = vld [vmem:[#allocation11 + $0x178] sm:$0xff]
    %v917 = vld [vmem:[#allocation11 + $0x180] sm:$0xff]
    %v918 = vld [vmem:[#allocation11 + $0x188] sm:$0xff]
    %v919 = vld [vmem:[#allocation11 + $0x190] sm:$0xff]
    %v920 = vld [vmem:[#allocation11 + $0x198] sm:$0xff]
    %v921 = vld [vmem:[#allocation11 + $0x1a0] sm:$0xff]
    %v922 = vld [vmem:[#allocation11 + $0x1a8] sm:$0xff]
    %v923 = vld [vmem:[#allocation11 + $0x1b0] sm:$0xff]
    %v924 = vld [vmem:[#allocation11 + $0x1b8] sm:$0xff]
    %v925 = vld [vmem:[#allocation11 + $0x1c0] sm:$0xff]
    %v926 = vld [vmem:[#allocation11 + $0x1c8] sm:$0xff]
    %v927 = vld [vmem:[#allocation11 + $0x1d0] sm:$0xff]
    %v928 = vld [vmem:[#allocation11 + $0x1d8] sm:$0xff]
    %v929 = vld [vmem:[#allocation11 + $0x1e0] sm:$0xff]
    %v930 = vld [vmem:[#allocation11 + $0x1e8] sm:$0xff]
    %v931 = vld [vmem:[#allocation11 + $0x1f0] sm:$0xff]
    %v932 = vld [vmem:[#allocation11 + $0x1f8] sm:$0xff]
    %933 = vmatpush.msra.mxu0 %v929
    %934 = vmatpush.msra.mxu0 %v925
    %935 = vmatpush.msra.mxu0 %v921
    %936 = vmatpush.msra.mxu0 %v917
    %937 = vmatpush.msra.mxu0 %v913
    %938 = vmatpush.msra.mxu0 %v909
    %939 = vmatpush.msra.mxu0 %v905
    %940 = vmatpush.msra.mxu0 %v901
    %941 = vmatpush.msra.mxu0 %v897
    %942 = vmatpush.msra.mxu0 %v893
    %943 = vmatpush.msra.mxu0 %v889
    %944 = vmatpush.msra.mxu0 %v885
    %945 = vmatpush.msra.mxu0 %v881
    %946 = vmatpush.msra.mxu0 %v877
    %947 = vmatpush.msra.mxu0 %v873
    %948 = vmatpush.msra.mxu0 %v869
    %949 = vmatmul.f32.gmra.mxu0 %v862
    %v950 = vpop.f32.mrf.mxu0
    %v951 = vadd.f32 0.0, %v950
    %952 = vdwg.mxu0
    %953 = vmatpush.msra.mxu0 %v930
    %954 = vmatpush.msra.mxu0 %v926
    %955 = vmatpush.msra.mxu0 %v922
    %956 = vmatpush.msra.mxu0 %v918
    %957 = vmatpush.msra.mxu0 %v914
    %958 = vmatpush.msra.mxu0 %v910
    %959 = vmatpush.msra.mxu0 %v906
    %960 = vmatpush.msra.mxu0 %v902
    %961 = vmatpush.msra.mxu0 %v898
    %962 = vmatpush.msra.mxu0 %v894
    %963 = vmatpush.msra.mxu0 %v890
    %964 = vmatpush.msra.mxu0 %v886
    %965 = vmatpush.msra.mxu0 %v882
    %966 = vmatpush.msra.mxu0 %v878
    %967 = vmatpush.msra.mxu0 %v874
    %968 = vmatpush.msra.mxu0 %v870
    %969 = vmatmul.f32.gmra.mxu0 %v862
    %v970 = vpop.f32.mrf.mxu0
    %v971 = vadd.f32 0.0, %v970
    %972 = vdwg.mxu0
    %973 = vmatpush.msra.mxu0 %v931
    %974 = vmatpush.msra.mxu0 %v927
    %975 = vmatpush.msra.mxu0 %v923
    %976 = vmatpush.msra.mxu0 %v919
    %977 = vmatpush.msra.mxu0 %v915
    %978 = vmatpush.msra.mxu0 %v911
    %979 = vmatpush.msra.mxu0 %v907
    %980 = vmatpush.msra.mxu0 %v903
    %981 = vmatpush.msra.mxu0 %v899
    %982 = vmatpush.msra.mxu0 %v895
    %983 = vmatpush.msra.mxu0 %v891
    %984 = vmatpush.msra.mxu0 %v887
    %985 = vmatpush.msra.mxu0 %v883
    %986 = vmatpush.msra.mxu0 %v879
    %987 = vmatpush.msra.mxu0 %v875
    %988 = vmatpush.msra.mxu0 %v871
    %989 = vmatmul.f32.gmra.mxu0 %v862
    %v990 = vpop.f32.mrf.mxu0
    %v991 = vadd.f32 0.0, %v990
    %992 = vdwg.mxu0
    %993 = vmatpush.msra.mxu0 %v932
    %994 = vmatpush.msra.mxu0 %v928
    %995 = vmatpush.msra.mxu0 %v924
    %996 = vmatpush.msra.mxu0 %v920
    %997 = vmatpush.msra.mxu0 %v916
    %998 = vmatpush.msra.mxu0 %v912
    %999 = vmatpush.msra.mxu0 %v908
    %1000 = vmatpush.msra.mxu0 %v904
    %1001 = vmatpush.msra.mxu0 %v900
    %1002 = vmatpush.msra.mxu0 %v896
    %1003 = vmatpush.msra.mxu0 %v892
    %1004 = vmatpush.msra.mxu0 %v888
    %1005 = vmatpush.msra.mxu0 %v884
    %1006 = vmatpush.msra.mxu0 %v880
    %1007 = vmatpush.msra.mxu0 %v876
    %1008 = vmatpush.msra.mxu0 %v872
    %1009 = vmatmul.f32.gmra.mxu0 %v862
    %v1010 = vpop.f32.mrf.mxu0
    %v1011 = vadd.f32 0.0, %v1010
    %1012 = vdwg.mxu0
    %v1013 = vadd.f32 %v865, %v951
    %v1014 = vadd.f32 %v866, %v971
    %v1015 = vadd.f32 %v867, %v991
    %v1016 = vadd.f32 %v868, %v1011
    %v1017 = vxor.u32 %v1013, 2147483648
    %v1018 = vmul.f32 %v1017, 1.442695
    %v1019 = vpow.pop %v1018
    %v1020 = vadd.f32 %v1019, 1.0
    %v1021 = vrcp.pop %v1020
    %v1022 = vmul.f32 %v1020, %v1021
    %v1023 = vsub.f32 1.0, %v1022
    %v1024 = vmul.f32 %v1021, %v1023
    %v1025 = vadd.f32 %v1021, %v1024
    %vm1026 = vweird.f32 %v1020
    %vm1027 = vweird.f32 %v1021
    %vm1028 = vmor %vm1026, %vm1027
    %v1029 = vsel %vm1028, %v1021, %v1025
    %v1030 = vand.u32 2147483647, %v1020
    %vm1031 = vcmp.eq.f32.partialorder %v1030, 8.507059e+37
    %v1032 = vand.u32 %v1020, 2147483648
    %v1033 = vor.u32 1.1754944e-38, %v1032
    %v1034 = vsel %vm1031, %v1033, %v1029
    %v1035 = vmul.f32 1.0, %v1034
    %v1036 = vxor.u32 %v1014, 2147483648
    %v1037 = vmul.f32 %v1036, 1.442695
    %v1038 = vpow.pop %v1037
    %v1039 = vadd.f32 %v1038, 1.0
    %v1040 = vrcp.pop %v1039
    %v1041 = vmul.f32 %v1039, %v1040
    %v1042 = vsub.f32 1.0, %v1041
    %v1043 = vmul.f32 %v1040, %v1042
    %v1044 = vadd.f32 %v1040, %v1043
    %vm1045 = vweird.f32 %v1039
    %vm1046 = vweird.f32 %v1040
    %vm1047 = vmor %vm1045, %vm1046
    %v1048 = vsel %vm1047, %v1040, %v1044
    %v1049 = vand.u32 2147483647, %v1039
    %vm1050 = vcmp.eq.f32.partialorder %v1049, 8.507059e+37
    %v1051 = vand.u32 %v1039, 2147483648
    %v1052 = vor.u32 1.1754944e-38, %v1051
    %v1053 = vsel %vm1050, %v1052, %v1048
    %v1054 = vmul.f32 1.0, %v1053
    %v1055 = vtanh.pop %v1015
    %v1056 = vxor.u32 %v1016, 2147483648
    %v1057 = vmul.f32 %v1056, 1.442695
    %v1058 = vpow.pop %v1057
    %v1059 = vadd.f32 %v1058, 1.0
    %v1060 = vrcp.pop %v1059
    %v1061 = vmul.f32 %v1059, %v1060
    %v1062 = vsub.f32 1.0, %v1061
    %v1063 = vmul.f32 %v1060, %v1062
    %v1064 = vadd.f32 %v1060, %v1063
    %vm1065 = vweird.f32 %v1059
    %vm1066 = vweird.f32 %v1060
    %vm1067 = vmor %vm1065, %vm1066
    %v1068 = vsel %vm1067, %v1060, %v1064
    %v1069 = vand.u32 2147483647, %v1059
    %vm1070 = vcmp.eq.f32.partialorder %v1069, 8.507059e+37
    %v1071 = vand.u32 %v1059, 2147483648
    %v1072 = vor.u32 1.1754944e-38, %v1071
    %v1073 = vsel %vm1070, %v1072, %v1068
    %v1074 = vmul.f32 1.0, %v1073
    %v1075 = vmul.f32 %v1054, %v863
    %v1076 = vmul.f32 %v1035, %v1055
    %v1077 = vadd.f32 %v1075, %v1076
    %v1078 = vtanh.pop %v1077
    %v1079 = vmul.f32 %v1074, %v1078
    %1080 = vst [vmem:[#allocation5] sm:$0xff] %v1077
    %1081 = vst [vmem:[#allocation4] sm:$0xff] %v1079
    %s1082 = scalar_lea.vmem [#allocation2], 16
    %1083 = vst [vmem:[%s1082] sm:$0xff] %v1079
    %v1084 = vld [vmem:[#allocation4] sm:$0xff]
    %v1085 = vld [vmem:[#allocation5] sm:$0xff]
    %s1086 = scalar_lea.vmem [#allocation3], 96
    %v1087 = vld [vmem:[%s1086] sm:$0xff]
    %v1088 = vld [vmem:[%s1086 + $0x8] sm:$0xff]
    %v1089 = vld [vmem:[%s1086 + $0x10] sm:$0xff]
    %v1090 = vld [vmem:[%s1086 + $0x18] sm:$0xff]
    %v1091 = vld [vmem:[#allocation11] sm:$0xff]
    %v1092 = vld [vmem:[#allocation11 + $0x8] sm:$0xff]
    %v1093 = vld [vmem:[#allocation11 + $0x10] sm:$0xff]
    %v1094 = vld [vmem:[#allocation11 + $0x18] sm:$0xff]
    %v1095 = vld [vmem:[#allocation11 + $0x20] sm:$0xff]
    %v1096 = vld [vmem:[#allocation11 + $0x28] sm:$0xff]
    %v1097 = vld [vmem:[#allocation11 + $0x30] sm:$0xff]
    %v1098 = vld [vmem:[#allocation11 + $0x38] sm:$0xff]
    %v1099 = vld [vmem:[#allocation11 + $0x40] sm:$0xff]
    %v1100 = vld [vmem:[#allocation11 + $0x48] sm:$0xff]
    %v1101 = vld [vmem:[#allocation11 + $0x50] sm:$0xff]
    %v1102 = vld [vmem:[#allocation11 + $0x58] sm:$0xff]
    %v1103 = vld [vmem:[#allocation11 + $0x60] sm:$0xff]
    %v1104 = vld [vmem:[#allocation11 + $0x68] sm:$0xff]
    %v1105 = vld [vmem:[#allocation11 + $0x70] sm:$0xff]
    %v1106 = vld [vmem:[#allocation11 + $0x78] sm:$0xff]
    %v1107 = vld [vmem:[#allocation11 + $0x80] sm:$0xff]
    %v1108 = vld [vmem:[#allocation11 + $0x88] sm:$0xff]
    %v1109 = vld [vmem:[#allocation11 + $0x90] sm:$0xff]
    %v1110 = vld [vmem:[#allocation11 + $0x98] sm:$0xff]
    %v1111 = vld [vmem:[#allocation11 + $0xa0] sm:$0xff]
    %v1112 = vld [vmem:[#allocation11 + $0xa8] sm:$0xff]
    %v1113 = vld [vmem:[#allocation11 + $0xb0] sm:$0xff]
    %v1114 = vld [vmem:[#allocation11 + $0xb8] sm:$0xff]
    %v1115 = vld [vmem:[#allocation11 + $0xc0] sm:$0xff]
    %v1116 = vld [vmem:[#allocation11 + $0xc8] sm:$0xff]
    %v1117 = vld [vmem:[#allocation11 + $0xd0] sm:$0xff]
    %v1118 = vld [vmem:[#allocation11 + $0xd8] sm:$0xff]
    %v1119 = vld [vmem:[#allocation11 + $0xe0] sm:$0xff]
    %v1120 = vld [vmem:[#allocation11 + $0xe8] sm:$0xff]
    %v1121 = vld [vmem:[#allocation11 + $0xf0] sm:$0xff]
    %v1122 = vld [vmem:[#allocation11 + $0xf8] sm:$0xff]
    %v1123 = vld [vmem:[#allocation11 + $0x100] sm:$0xff]
    %v1124 = vld [vmem:[#allocation11 + $0x108] sm:$0xff]
    %v1125 = vld [vmem:[#allocation11 + $0x110] sm:$0xff]
    %v1126 = vld [vmem:[#allocation11 + $0x118] sm:$0xff]
    %v1127 = vld [vmem:[#allocation11 + $0x120] sm:$0xff]
    %v1128 = vld [vmem:[#allocation11 + $0x128] sm:$0xff]
    %v1129 = vld [vmem:[#allocation11 + $0x130] sm:$0xff]
    %v1130 = vld [vmem:[#allocation11 + $0x138] sm:$0xff]
    %v1131 = vld [vmem:[#allocation11 + $0x140] sm:$0xff]
    %v1132 = vld [vmem:[#allocation11 + $0x148] sm:$0xff]
    %v1133 = vld [vmem:[#allocation11 + $0x150] sm:$0xff]
    %v1134 = vld [vmem:[#allocation11 + $0x158] sm:$0xff]
    %v1135 = vld [vmem:[#allocation11 + $0x160] sm:$0xff]
    %v1136 = vld [vmem:[#allocation11 + $0x168] sm:$0xff]
    %v1137 = vld [vmem:[#allocation11 + $0x170] sm:$0xff]
    %v1138 = vld [vmem:[#allocation11 + $0x178] sm:$0xff]
    %v1139 = vld [vmem:[#allocation11 + $0x180] sm:$0xff]
    %v1140 = vld [vmem:[#allocation11 + $0x188] sm:$0xff]
    %v1141 = vld [vmem:[#allocation11 + $0x190] sm:$0xff]
    %v1142 = vld [vmem:[#allocation11 + $0x198] sm:$0xff]
    %v1143 = vld [vmem:[#allocation11 + $0x1a0] sm:$0xff]
    %v1144 = vld [vmem:[#allocation11 + $0x1a8] sm:$0xff]
    %v1145 = vld [vmem:[#allocation11 + $0x1b0] sm:$0xff]
    %v1146 = vld [vmem:[#allocation11 + $0x1b8] sm:$0xff]
    %v1147 = vld [vmem:[#allocation11 + $0x1c0] sm:$0xff]
    %v1148 = vld [vmem:[#allocation11 + $0x1c8] sm:$0xff]
    %v1149 = vld [vmem:[#allocation11 + $0x1d0] sm:$0xff]
    %v1150 = vld [vmem:[#allocation11 + $0x1d8] sm:$0xff]
    %v1151 = vld [vmem:[#allocation11 + $0x1e0] sm:$0xff]
    %v1152 = vld [vmem:[#allocation11 + $0x1e8] sm:$0xff]
    %v1153 = vld [vmem:[#allocation11 + $0x1f0] sm:$0xff]
    %v1154 = vld [vmem:[#allocation11 + $0x1f8] sm:$0xff]
    %1155 = vmatpush.msra.mxu0 %v1151
    %1156 = vmatpush.msra.mxu0 %v1147
    %1157 = vmatpush.msra.mxu0 %v1143
    %1158 = vmatpush.msra.mxu0 %v1139
    %1159 = vmatpush.msra.mxu0 %v1135
    %1160 = vmatpush.msra.mxu0 %v1131
    %1161 = vmatpush.msra.mxu0 %v1127
    %1162 = vmatpush.msra.mxu0 %v1123
    %1163 = vmatpush.msra.mxu0 %v1119
    %1164 = vmatpush.msra.mxu0 %v1115
    %1165 = vmatpush.msra.mxu0 %v1111
    %1166 = vmatpush.msra.mxu0 %v1107
    %1167 = vmatpush.msra.mxu0 %v1103
    %1168 = vmatpush.msra.mxu0 %v1099
    %1169 = vmatpush.msra.mxu0 %v1095
    %1170 = vmatpush.msra.mxu0 %v1091
    %1171 = vmatmul.f32.gmra.mxu0 %v1084
    %v1172 = vpop.f32.mrf.mxu0
    %v1173 = vadd.f32 0.0, %v1172
    %1174 = vdwg.mxu0
    %1175 = vmatpush.msra.mxu0 %v1152
    %1176 = vmatpush.msra.mxu0 %v1148
    %1177 = vmatpush.msra.mxu0 %v1144
    %1178 = vmatpush.msra.mxu0 %v1140
    %1179 = vmatpush.msra.mxu0 %v1136
    %1180 = vmatpush.msra.mxu0 %v1132
    %1181 = vmatpush.msra.mxu0 %v1128
    %1182 = vmatpush.msra.mxu0 %v1124
    %1183 = vmatpush.msra.mxu0 %v1120
    %1184 = vmatpush.msra.mxu0 %v1116
    %1185 = vmatpush.msra.mxu0 %v1112
    %1186 = vmatpush.msra.mxu0 %v1108
    %1187 = vmatpush.msra.mxu0 %v1104
    %1188 = vmatpush.msra.mxu0 %v1100
    %1189 = vmatpush.msra.mxu0 %v1096
    %1190 = vmatpush.msra.mxu0 %v1092
    %1191 = vmatmul.f32.gmra.mxu0 %v1084
    %v1192 = vpop.f32.mrf.mxu0
    %v1193 = vadd.f32 0.0, %v1192
    %1194 = vdwg.mxu0
    %1195 = vmatpush.msra.mxu0 %v1153
    %1196 = vmatpush.msra.mxu0 %v1149
    %1197 = vmatpush.msra.mxu0 %v1145
    %1198 = vmatpush.msra.mxu0 %v1141
    %1199 = vmatpush.msra.mxu0 %v1137
    %1200 = vmatpush.msra.mxu0 %v1133
    %1201 = vmatpush.msra.mxu0 %v1129
    %1202 = vmatpush.msra.mxu0 %v1125
    %1203 = vmatpush.msra.mxu0 %v1121
    %1204 = vmatpush.msra.mxu0 %v1117
    %1205 = vmatpush.msra.mxu0 %v1113
    %1206 = vmatpush.msra.mxu0 %v1109
    %1207 = vmatpush.msra.mxu0 %v1105
    %1208 = vmatpush.msra.mxu0 %v1101
    %1209 = vmatpush.msra.mxu0 %v1097
    %1210 = vmatpush.msra.mxu0 %v1093
    %1211 = vmatmul.f32.gmra.mxu0 %v1084
    %v1212 = vpop.f32.mrf.mxu0
    %v1213 = vadd.f32 0.0, %v1212
    %1214 = vdwg.mxu0
    %1215 = vmatpush.msra.mxu0 %v1154
    %1216 = vmatpush.msra.mxu0 %v1150
    %1217 = vmatpush.msra.mxu0 %v1146
    %1218 = vmatpush.msra.mxu0 %v1142
    %1219 = vmatpush.msra.mxu0 %v1138
    %1220 = vmatpush.msra.mxu0 %v1134
    %1221 = vmatpush.msra.mxu0 %v1130
    %1222 = vmatpush.msra.mxu0 %v1126
    %1223 = vmatpush.msra.mxu0 %v1122
    %1224 = vmatpush.msra.mxu0 %v1118
    %1225 = vmatpush.msra.mxu0 %v1114
    %1226 = vmatpush.msra.mxu0 %v1110
    %1227 = vmatpush.msra.mxu0 %v1106
    %1228 = vmatpush.msra.mxu0 %v1102
    %1229 = vmatpush.msra.mxu0 %v1098
    %1230 = vmatpush.msra.mxu0 %v1094
    %1231 = vmatmul.f32.gmra.mxu0 %v1084
    %v1232 = vpop.f32.mrf.mxu0
    %v1233 = vadd.f32 0.0, %v1232
    %1234 = vdwg.mxu0
    %v1235 = vadd.f32 %v1087, %v1173
    %v1236 = vadd.f32 %v1088, %v1193
    %v1237 = vadd.f32 %v1089, %v1213
    %v1238 = vadd.f32 %v1090, %v1233
    %v1239 = vxor.u32 %v1235, 2147483648
    %v1240 = vmul.f32 %v1239, 1.442695
    %v1241 = vpow.pop %v1240
    %v1242 = vadd.f32 %v1241, 1.0
    %v1243 = vrcp.pop %v1242
    %v1244 = vmul.f32 %v1242, %v1243
    %v1245 = vsub.f32 1.0, %v1244
    %v1246 = vmul.f32 %v1243, %v1245
    %v1247 = vadd.f32 %v1243, %v1246
    %vm1248 = vweird.f32 %v1242
    %vm1249 = vweird.f32 %v1243
    %vm1250 = vmor %vm1248, %vm1249
    %v1251 = vsel %vm1250, %v1243, %v1247
    %v1252 = vand.u32 2147483647, %v1242
    %vm1253 = vcmp.eq.f32.partialorder %v1252, 8.507059e+37
    %v1254 = vand.u32 %v1242, 2147483648
    %v1255 = vor.u32 1.1754944e-38, %v1254
    %v1256 = vsel %vm1253, %v1255, %v1251
    %v1257 = vmul.f32 1.0, %v1256
    %v1258 = vxor.u32 %v1236, 2147483648
    %v1259 = vmul.f32 %v1258, 1.442695
    %v1260 = vpow.pop %v1259
    %v1261 = vadd.f32 %v1260, 1.0
    %v1262 = vrcp.pop %v1261
    %v1263 = vmul.f32 %v1261, %v1262
    %v1264 = vsub.f32 1.0, %v1263
    %v1265 = vmul.f32 %v1262, %v1264
    %v1266 = vadd.f32 %v1262, %v1265
    %vm1267 = vweird.f32 %v1261
    %vm1268 = vweird.f32 %v1262
    %vm1269 = vmor %vm1267, %vm1268
    %v1270 = vsel %vm1269, %v1262, %v1266
    %v1271 = vand.u32 2147483647, %v1261
    %vm1272 = vcmp.eq.f32.partialorder %v1271, 8.507059e+37
    %v1273 = vand.u32 %v1261, 2147483648
    %v1274 = vor.u32 1.1754944e-38, %v1273
    %v1275 = vsel %vm1272, %v1274, %v1270
    %v1276 = vmul.f32 1.0, %v1275
    %v1277 = vtanh.pop %v1237
    %v1278 = vxor.u32 %v1238, 2147483648
    %v1279 = vmul.f32 %v1278, 1.442695
    %v1280 = vpow.pop %v1279
    %v1281 = vadd.f32 %v1280, 1.0
    %v1282 = vrcp.pop %v1281
    %v1283 = vmul.f32 %v1281, %v1282
    %v1284 = vsub.f32 1.0, %v1283
    %v1285 = vmul.f32 %v1282, %v1284
    %v1286 = vadd.f32 %v1282, %v1285
    %vm1287 = vweird.f32 %v1281
    %vm1288 = vweird.f32 %v1282
    %vm1289 = vmor %vm1287, %vm1288
    %v1290 = vsel %vm1289, %v1282, %v1286
    %v1291 = vand.u32 2147483647, %v1281
    %vm1292 = vcmp.eq.f32.partialorder %v1291, 8.507059e+37
    %v1293 = vand.u32 %v1281, 2147483648
    %v1294 = vor.u32 1.1754944e-38, %v1293
    %v1295 = vsel %vm1292, %v1294, %v1290
    %v1296 = vmul.f32 1.0, %v1295
    %v1297 = vmul.f32 %v1276, %v1085
    %v1298 = vmul.f32 %v1257, %v1277
    %v1299 = vadd.f32 %v1297, %v1298
    %v1300 = vtanh.pop %v1299
    %v1301 = vmul.f32 %v1296, %v1300
    %1302 = vst [vmem:[#allocation5] sm:$0xff] %v1299
    %1303 = vst [vmem:[#allocation4] sm:$0xff] %v1301
    %s1304 = scalar_lea.vmem [#allocation2], 24
    %1305 = vst [vmem:[%s1304] sm:$0xff] %v1301
    %v1306 = vld [vmem:[#allocation4] sm:$0xff]
    %v1307 = vld [vmem:[#allocation5] sm:$0xff]
    %s1308 = scalar_lea.vmem [#allocation3], 128
    %v1309 = vld [vmem:[%s1308] sm:$0xff]
    %v1310 = vld [vmem:[%s1308 + $0x8] sm:$0xff]
    %v1311 = vld [vmem:[%s1308 + $0x10] sm:$0xff]
    %v1312 = vld [vmem:[%s1308 + $0x18] sm:$0xff]
    %v1313 = vld [vmem:[#allocation11] sm:$0xff]
    %v1314 = vld [vmem:[#allocation11 + $0x8] sm:$0xff]
    %v1315 = vld [vmem:[#allocation11 + $0x10] sm:$0xff]
    %v1316 = vld [vmem:[#allocation11 + $0x18] sm:$0xff]
    %v1317 = vld [vmem:[#allocation11 + $0x20] sm:$0xff]
    %v1318 = vld [vmem:[#allocation11 + $0x28] sm:$0xff]
    %v1319 = vld [vmem:[#allocation11 + $0x30] sm:$0xff]
    %v1320 = vld [vmem:[#allocation11 + $0x38] sm:$0xff]
    %v1321 = vld [vmem:[#allocation11 + $0x40] sm:$0xff]
    %v1322 = vld [vmem:[#allocation11 + $0x48] sm:$0xff]
    %v1323 = vld [vmem:[#allocation11 + $0x50] sm:$0xff]
    %v1324 = vld [vmem:[#allocation11 + $0x58] sm:$0xff]
    %v1325 = vld [vmem:[#allocation11 + $0x60] sm:$0xff]
    %v1326 = vld [vmem:[#allocation11 + $0x68] sm:$0xff]
    %v1327 = vld [vmem:[#allocation11 + $0x70] sm:$0xff]
    %v1328 = vld [vmem:[#allocation11 + $0x78] sm:$0xff]
    %v1329 = vld [vmem:[#allocation11 + $0x80] sm:$0xff]
    %v1330 = vld [vmem:[#allocation11 + $0x88] sm:$0xff]
    %v1331 = vld [vmem:[#allocation11 + $0x90] sm:$0xff]
    %v1332 = vld [vmem:[#allocation11 + $0x98] sm:$0xff]
    %v1333 = vld [vmem:[#allocation11 + $0xa0] sm:$0xff]
    %v1334 = vld [vmem:[#allocation11 + $0xa8] sm:$0xff]
    %v1335 = vld [vmem:[#allocation11 + $0xb0] sm:$0xff]
    %v1336 = vld [vmem:[#allocation11 + $0xb8] sm:$0xff]
    %v1337 = vld [vmem:[#allocation11 + $0xc0] sm:$0xff]
    %v1338 = vld [vmem:[#allocation11 + $0xc8] sm:$0xff]
    %v1339 = vld [vmem:[#allocation11 + $0xd0] sm:$0xff]
    %v1340 = vld [vmem:[#allocation11 + $0xd8] sm:$0xff]
    %v1341 = vld [vmem:[#allocation11 + $0xe0] sm:$0xff]
    %v1342 = vld [vmem:[#allocation11 + $0xe8] sm:$0xff]
    %v1343 = vld [vmem:[#allocation11 + $0xf0] sm:$0xff]
    %v1344 = vld [vmem:[#allocation11 + $0xf8] sm:$0xff]
    %v1345 = vld [vmem:[#allocation11 + $0x100] sm:$0xff]
    %v1346 = vld [vmem:[#allocation11 + $0x108] sm:$0xff]
    %v1347 = vld [vmem:[#allocation11 + $0x110] sm:$0xff]
    %v1348 = vld [vmem:[#allocation11 + $0x118] sm:$0xff]
    %v1349 = vld [vmem:[#allocation11 + $0x120] sm:$0xff]
    %v1350 = vld [vmem:[#allocation11 + $0x128] sm:$0xff]
    %v1351 = vld [vmem:[#allocation11 + $0x130] sm:$0xff]
    %v1352 = vld [vmem:[#allocation11 + $0x138] sm:$0xff]
    %v1353 = vld [vmem:[#allocation11 + $0x140] sm:$0xff]
    %v1354 = vld [vmem:[#allocation11 + $0x148] sm:$0xff]
    %v1355 = vld [vmem:[#allocation11 + $0x150] sm:$0xff]
    %v1356 = vld [vmem:[#allocation11 + $0x158] sm:$0xff]
    %v1357 = vld [vmem:[#allocation11 + $0x160] sm:$0xff]
    %v1358 = vld [vmem:[#allocation11 + $0x168] sm:$0xff]
    %v1359 = vld [vmem:[#allocation11 + $0x170] sm:$0xff]
    %v1360 = vld [vmem:[#allocation11 + $0x178] sm:$0xff]
    %v1361 = vld [vmem:[#allocation11 + $0x180] sm:$0xff]
    %v1362 = vld [vmem:[#allocation11 + $0x188] sm:$0xff]
    %v1363 = vld [vmem:[#allocation11 + $0x190] sm:$0xff]
    %v1364 = vld [vmem:[#allocation11 + $0x198] sm:$0xff]
    %v1365 = vld [vmem:[#allocation11 + $0x1a0] sm:$0xff]
    %v1366 = vld [vmem:[#allocation11 + $0x1a8] sm:$0xff]
    %v1367 = vld [vmem:[#allocation11 + $0x1b0] sm:$0xff]
    %v1368 = vld [vmem:[#allocation11 + $0x1b8] sm:$0xff]
    %v1369 = vld [vmem:[#allocation11 + $0x1c0] sm:$0xff]
    %v1370 = vld [vmem:[#allocation11 + $0x1c8] sm:$0xff]
    %v1371 = vld [vmem:[#allocation11 + $0x1d0] sm:$0xff]
    %v1372 = vld [vmem:[#allocation11 + $0x1d8] sm:$0xff]
    %v1373 = vld [vmem:[#allocation11 + $0x1e0] sm:$0xff]
    %v1374 = vld [vmem:[#allocation11 + $0x1e8] sm:$0xff]
    %v1375 = vld [vmem:[#allocation11 + $0x1f0] sm:$0xff]
    %v1376 = vld [vmem:[#allocation11 + $0x1f8] sm:$0xff]
    %1377 = vmatpush.msra.mxu0 %v1373
    %1378 = vmatpush.msra.mxu0 %v1369
    %1379 = vmatpush.msra.mxu0 %v1365
    %1380 = vmatpush.msra.mxu0 %v1361
    %1381 = vmatpush.msra.mxu0 %v1357
    %1382 = vmatpush.msra.mxu0 %v1353
    %1383 = vmatpush.msra.mxu0 %v1349
    %1384 = vmatpush.msra.mxu0 %v1345
    %1385 = vmatpush.msra.mxu0 %v1341
    %1386 = vmatpush.msra.mxu0 %v1337
    %1387 = vmatpush.msra.mxu0 %v1333
    %1388 = vmatpush.msra.mxu0 %v1329
    %1389 = vmatpush.msra.mxu0 %v1325
    %1390 = vmatpush.msra.mxu0 %v1321
    %1391 = vmatpush.msra.mxu0 %v1317
    %1392 = vmatpush.msra.mxu0 %v1313
    %1393 = vmatmul.f32.gmra.mxu0 %v1306
    %v1394 = vpop.f32.mrf.mxu0
    %v1395 = vadd.f32 0.0, %v1394
    %1396 = vdwg.mxu0
    %1397 = vmatpush.msra.mxu0 %v1374
    %1398 = vmatpush.msra.mxu0 %v1370
    %1399 = vmatpush.msra.mxu0 %v1366
    %1400 = vmatpush.msra.mxu0 %v1362
    %1401 = vmatpush.msra.mxu0 %v1358
    %1402 = vmatpush.msra.mxu0 %v1354
    %1403 = vmatpush.msra.mxu0 %v1350
    %1404 = vmatpush.msra.mxu0 %v1346
    %1405 = vmatpush.msra.mxu0 %v1342
    %1406 = vmatpush.msra.mxu0 %v1338
    %1407 = vmatpush.msra.mxu0 %v1334
    %1408 = vmatpush.msra.mxu0 %v1330
    %1409 = vmatpush.msra.mxu0 %v1326
    %1410 = vmatpush.msra.mxu0 %v1322
    %1411 = vmatpush.msra.mxu0 %v1318
    %1412 = vmatpush.msra.mxu0 %v1314
    %1413 = vmatmul.f32.gmra.mxu0 %v1306
    %v1414 = vpop.f32.mrf.mxu0
    %v1415 = vadd.f32 0.0, %v1414
    %1416 = vdwg.mxu0
    %1417 = vmatpush.msra.mxu0 %v1375
    %1418 = vmatpush.msra.mxu0 %v1371
    %1419 = vmatpush.msra.mxu0 %v1367
    %1420 = vmatpush.msra.mxu0 %v1363
    %1421 = vmatpush.msra.mxu0 %v1359
    %1422 = vmatpush.msra.mxu0 %v1355
    %1423 = vmatpush.msra.mxu0 %v1351
    %1424 = vmatpush.msra.mxu0 %v1347
    %1425 = vmatpush.msra.mxu0 %v1343
    %1426 = vmatpush.msra.mxu0 %v1339
    %1427 = vmatpush.msra.mxu0 %v1335
    %1428 = vmatpush.msra.mxu0 %v1331
    %1429 = vmatpush.msra.mxu0 %v1327
    %1430 = vmatpush.msra.mxu0 %v1323
    %1431 = vmatpush.msra.mxu0 %v1319
    %1432 = vmatpush.msra.mxu0 %v1315
    %1433 = vmatmul.f32.gmra.mxu0 %v1306
    %v1434 = vpop.f32.mrf.mxu0
    %v1435 = vadd.f32 0.0, %v1434
    %1436 = vdwg.mxu0
    %1437 = vmatpush.msra.mxu0 %v1376
    %1438 = vmatpush.msra.mxu0 %v1372
    %1439 = vmatpush.msra.mxu0 %v1368
    %1440 = vmatpush.msra.mxu0 %v1364
    %1441 = vmatpush.msra.mxu0 %v1360
    %1442 = vmatpush.msra.mxu0 %v1356
    %1443 = vmatpush.msra.mxu0 %v1352
    %1444 = vmatpush.msra.mxu0 %v1348
    %1445 = vmatpush.msra.mxu0 %v1344
    %1446 = vmatpush.msra.mxu0 %v1340
    %1447 = vmatpush.msra.mxu0 %v1336
    %1448 = vmatpush.msra.mxu0 %v1332
    %1449 = vmatpush.msra.mxu0 %v1328
    %1450 = vmatpush.msra.mxu0 %v1324
    %1451 = vmatpush.msra.mxu0 %v1320
    %1452 = vmatpush.msra.mxu0 %v1316
    %1453 = vmatmul.f32.gmra.mxu0 %v1306
    %v1454 = vpop.f32.mrf.mxu0
    %v1455 = vadd.f32 0.0, %v1454
    %1456 = vdwg.mxu0
    %v1457 = vadd.f32 %v1309, %v1395
    %v1458 = vadd.f32 %v1310, %v1415
    %v1459 = vadd.f32 %v1311, %v1435
    %v1460 = vadd.f32 %v1312, %v1455
    %v1461 = vxor.u32 %v1457, 2147483648
    %v1462 = vmul.f32 %v1461, 1.442695
    %v1463 = vpow.pop %v1462
    %v1464 = vadd.f32 %v1463, 1.0
    %v1465 = vrcp.pop %v1464
    %v1466 = vmul.f32 %v1464, %v1465
    %v1467 = vsub.f32 1.0, %v1466
    %v1468 = vmul.f32 %v1465, %v1467
    %v1469 = vadd.f32 %v1465, %v1468
    %vm1470 = vweird.f32 %v1464
    %vm1471 = vweird.f32 %v1465
    %vm1472 = vmor %vm1470, %vm1471
    %v1473 = vsel %vm1472, %v1465, %v1469
    %v1474 = vand.u32 2147483647, %v1464
    %vm1475 = vcmp.eq.f32.partialorder %v1474, 8.507059e+37
    %v1476 = vand.u32 %v1464, 2147483648
    %v1477 = vor.u32 1.1754944e-38, %v1476
    %v1478 = vsel %vm1475, %v1477, %v1473
    %v1479 = vmul.f32 1.0, %v1478
    %v1480 = vxor.u32 %v1458, 2147483648
    %v1481 = vmul.f32 %v1480, 1.442695
    %v1482 = vpow.pop %v1481
    %v1483 = vadd.f32 %v1482, 1.0
    %v1484 = vrcp.pop %v1483
    %v1485 = vmul.f32 %v1483, %v1484
    %v1486 = vsub.f32 1.0, %v1485
    %v1487 = vmul.f32 %v1484, %v1486
    %v1488 = vadd.f32 %v1484, %v1487
    %vm1489 = vweird.f32 %v1483
    %vm1490 = vweird.f32 %v1484
    %vm1491 = vmor %vm1489, %vm1490
    %v1492 = vsel %vm1491, %v1484, %v1488
    %v1493 = vand.u32 2147483647, %v1483
    %vm1494 = vcmp.eq.f32.partialorder %v1493, 8.507059e+37
    %v1495 = vand.u32 %v1483, 2147483648
    %v1496 = vor.u32 1.1754944e-38, %v1495
    %v1497 = vsel %vm1494, %v1496, %v1492
    %v1498 = vmul.f32 1.0, %v1497
    %v1499 = vtanh.pop %v1459
    %v1500 = vxor.u32 %v1460, 2147483648
    %v1501 = vmul.f32 %v1500, 1.442695
    %v1502 = vpow.pop %v1501
    %v1503 = vadd.f32 %v1502, 1.0
    %v1504 = vrcp.pop %v1503
    %v1505 = vmul.f32 %v1503, %v1504
    %v1506 = vsub.f32 1.0, %v1505
    %v1507 = vmul.f32 %v1504, %v1506
    %v1508 = vadd.f32 %v1504, %v1507
    %vm1509 = vweird.f32 %v1503
    %vm1510 = vweird.f32 %v1504
    %vm1511 = vmor %vm1509, %vm1510
    %v1512 = vsel %vm1511, %v1504, %v1508
    %v1513 = vand.u32 2147483647, %v1503
    %vm1514 = vcmp.eq.f32.partialorder %v1513, 8.507059e+37
    %v1515 = vand.u32 %v1503, 2147483648
    %v1516 = vor.u32 1.1754944e-38, %v1515
    %v1517 = vsel %vm1514, %v1516, %v1512
    %v1518 = vmul.f32 1.0, %v1517
    %v1519 = vmul.f32 %v1498, %v1307
    %v1520 = vmul.f32 %v1479, %v1499
    %v1521 = vadd.f32 %v1519, %v1520
    %v1522 = vtanh.pop %v1521
    %v1523 = vmul.f32 %v1518, %v1522
    %1524 = vst [vmem:[#allocation5] sm:$0xff] %v1521
    %1525 = vst [vmem:[#allocation4] sm:$0xff] %v1523
    %s1526 = scalar_lea.vmem [#allocation2], 32
    %1527 = vst [vmem:[%s1526] sm:$0xff] %v1523
    %v1528 = vld [vmem:[#allocation4] sm:$0xff]
    %v1529 = vld [vmem:[#allocation5] sm:$0xff]
    %s1530 = scalar_lea.vmem [#allocation3], 160
    %v1531 = vld [vmem:[%s1530] sm:$0xff]
    %v1532 = vld [vmem:[%s1530 + $0x8] sm:$0xff]
    %v1533 = vld [vmem:[%s1530 + $0x10] sm:$0xff]
    %v1534 = vld [vmem:[%s1530 + $0x18] sm:$0xff]
    %v1535 = vld [vmem:[#allocation11] sm:$0xff]
    %v1536 = vld [vmem:[#allocation11 + $0x8] sm:$0xff]
    %v1537 = vld [vmem:[#allocation11 + $0x10] sm:$0xff]
    %v1538 = vld [vmem:[#allocation11 + $0x18] sm:$0xff]
    %v1539 = vld [vmem:[#allocation11 + $0x20] sm:$0xff]
    %v1540 = vld [vmem:[#allocation11 + $0x28] sm:$0xff]
    %v1541 = vld [vmem:[#allocation11 + $0x30] sm:$0xff]
    %v1542 = vld [vmem:[#allocation11 + $0x38] sm:$0xff]
    %v1543 = vld [vmem:[#allocation11 + $0x40] sm:$0xff]
    %v1544 = vld [vmem:[#allocation11 + $0x48] sm:$0xff]
    %v1545 = vld [vmem:[#allocation11 + $0x50] sm:$0xff]
    %v1546 = vld [vmem:[#allocation11 + $0x58] sm:$0xff]
    %v1547 = vld [vmem:[#allocation11 + $0x60] sm:$0xff]
    %v1548 = vld [vmem:[#allocation11 + $0x68] sm:$0xff]
    %v1549 = vld [vmem:[#allocation11 + $0x70] sm:$0xff]
    %v1550 = vld [vmem:[#allocation11 + $0x78] sm:$0xff]
    %v1551 = vld [vmem:[#allocation11 + $0x80] sm:$0xff]
    %v1552 = vld [vmem:[#allocation11 + $0x88] sm:$0xff]
    %v1553 = vld [vmem:[#allocation11 + $0x90] sm:$0xff]
    %v1554 = vld [vmem:[#allocation11 + $0x98] sm:$0xff]
    %v1555 = vld [vmem:[#allocation11 + $0xa0] sm:$0xff]
    %v1556 = vld [vmem:[#allocation11 + $0xa8] sm:$0xff]
    %v1557 = vld [vmem:[#allocation11 + $0xb0] sm:$0xff]
    %v1558 = vld [vmem:[#allocation11 + $0xb8] sm:$0xff]
    %v1559 = vld [vmem:[#allocation11 + $0xc0] sm:$0xff]
    %v1560 = vld [vmem:[#allocation11 + $0xc8] sm:$0xff]
    %v1561 = vld [vmem:[#allocation11 + $0xd0] sm:$0xff]
    %v1562 = vld [vmem:[#allocation11 + $0xd8] sm:$0xff]
    %v1563 = vld [vmem:[#allocation11 + $0xe0] sm:$0xff]
    %v1564 = vld [vmem:[#allocation11 + $0xe8] sm:$0xff]
    %v1565 = vld [vmem:[#allocation11 + $0xf0] sm:$0xff]
    %v1566 = vld [vmem:[#allocation11 + $0xf8] sm:$0xff]
    %v1567 = vld [vmem:[#allocation11 + $0x100] sm:$0xff]
    %v1568 = vld [vmem:[#allocation11 + $0x108] sm:$0xff]
    %v1569 = vld [vmem:[#allocation11 + $0x110] sm:$0xff]
    %v1570 = vld [vmem:[#allocation11 + $0x118] sm:$0xff]
    %v1571 = vld [vmem:[#allocation11 + $0x120] sm:$0xff]
    %v1572 = vld [vmem:[#allocation11 + $0x128] sm:$0xff]
    %v1573 = vld [vmem:[#allocation11 + $0x130] sm:$0xff]
    %v1574 = vld [vmem:[#allocation11 + $0x138] sm:$0xff]
    %v1575 = vld [vmem:[#allocation11 + $0x140] sm:$0xff]
    %v1576 = vld [vmem:[#allocation11 + $0x148] sm:$0xff]
    %v1577 = vld [vmem:[#allocation11 + $0x150] sm:$0xff]
    %v1578 = vld [vmem:[#allocation11 + $0x158] sm:$0xff]
    %v1579 = vld [vmem:[#allocation11 + $0x160] sm:$0xff]
    %v1580 = vld [vmem:[#allocation11 + $0x168] sm:$0xff]
    %v1581 = vld [vmem:[#allocation11 + $0x170] sm:$0xff]
    %v1582 = vld [vmem:[#allocation11 + $0x178] sm:$0xff]
    %v1583 = vld [vmem:[#allocation11 + $0x180] sm:$0xff]
    %v1584 = vld [vmem:[#allocation11 + $0x188] sm:$0xff]
    %v1585 = vld [vmem:[#allocation11 + $0x190] sm:$0xff]
    %v1586 = vld [vmem:[#allocation11 + $0x198] sm:$0xff]
    %v1587 = vld [vmem:[#allocation11 + $0x1a0] sm:$0xff]
    %v1588 = vld [vmem:[#allocation11 + $0x1a8] sm:$0xff]
    %v1589 = vld [vmem:[#allocation11 + $0x1b0] sm:$0xff]
    %v1590 = vld [vmem:[#allocation11 + $0x1b8] sm:$0xff]
    %v1591 = vld [vmem:[#allocation11 + $0x1c0] sm:$0xff]
    %v1592 = vld [vmem:[#allocation11 + $0x1c8] sm:$0xff]
    %v1593 = vld [vmem:[#allocation11 + $0x1d0] sm:$0xff]
    %v1594 = vld [vmem:[#allocation11 + $0x1d8] sm:$0xff]
    %v1595 = vld [vmem:[#allocation11 + $0x1e0] sm:$0xff]
    %v1596 = vld [vmem:[#allocation11 + $0x1e8] sm:$0xff]
    %v1597 = vld [vmem:[#allocation11 + $0x1f0] sm:$0xff]
    %v1598 = vld [vmem:[#allocation11 + $0x1f8] sm:$0xff]
    %1599 = vmatpush.msra.mxu0 %v1595
    %1600 = vmatpush.msra.mxu0 %v1591
    %1601 = vmatpush.msra.mxu0 %v1587
    %1602 = vmatpush.msra.mxu0 %v1583
    %1603 = vmatpush.msra.mxu0 %v1579
    %1604 = vmatpush.msra.mxu0 %v1575
    %1605 = vmatpush.msra.mxu0 %v1571
    %1606 = vmatpush.msra.mxu0 %v1567
    %1607 = vmatpush.msra.mxu0 %v1563
    %1608 = vmatpush.msra.mxu0 %v1559
    %1609 = vmatpush.msra.mxu0 %v1555
    %1610 = vmatpush.msra.mxu0 %v1551
    %1611 = vmatpush.msra.mxu0 %v1547
    %1612 = vmatpush.msra.mxu0 %v1543
    %1613 = vmatpush.msra.mxu0 %v1539
    %1614 = vmatpush.msra.mxu0 %v1535
    %1615 = vmatmul.f32.gmra.mxu0 %v1528
    %v1616 = vpop.f32.mrf.mxu0
    %v1617 = vadd.f32 0.0, %v1616
    %1618 = vdwg.mxu0
    %1619 = vmatpush.msra.mxu0 %v1596
    %1620 = vmatpush.msra.mxu0 %v1592
    %1621 = vmatpush.msra.mxu0 %v1588
    %1622 = vmatpush.msra.mxu0 %v1584
    %1623 = vmatpush.msra.mxu0 %v1580
    %1624 = vmatpush.msra.mxu0 %v1576
    %1625 = vmatpush.msra.mxu0 %v1572
    %1626 = vmatpush.msra.mxu0 %v1568
    %1627 = vmatpush.msra.mxu0 %v1564
    %1628 = vmatpush.msra.mxu0 %v1560
    %1629 = vmatpush.msra.mxu0 %v1556
    %1630 = vmatpush.msra.mxu0 %v1552
    %1631 = vmatpush.msra.mxu0 %v1548
    %1632 = vmatpush.msra.mxu0 %v1544
    %1633 = vmatpush.msra.mxu0 %v1540
    %1634 = vmatpush.msra.mxu0 %v1536
    %1635 = vmatmul.f32.gmra.mxu0 %v1528
    %v1636 = vpop.f32.mrf.mxu0
    %v1637 = vadd.f32 0.0, %v1636
    %1638 = vdwg.mxu0
    %1639 = vmatpush.msra.mxu0 %v1597
    %1640 = vmatpush.msra.mxu0 %v1593
    %1641 = vmatpush.msra.mxu0 %v1589
    %1642 = vmatpush.msra.mxu0 %v1585
    %1643 = vmatpush.msra.mxu0 %v1581
    %1644 = vmatpush.msra.mxu0 %v1577
    %1645 = vmatpush.msra.mxu0 %v1573
    %1646 = vmatpush.msra.mxu0 %v1569
    %1647 = vmatpush.msra.mxu0 %v1565
    %1648 = vmatpush.msra.mxu0 %v1561
    %1649 = vmatpush.msra.mxu0 %v1557
    %1650 = vmatpush.msra.mxu0 %v1553
    %1651 = vmatpush.msra.mxu0 %v1549
    %1652 = vmatpush.msra.mxu0 %v1545
    %1653 = vmatpush.msra.mxu0 %v1541
    %1654 = vmatpush.msra.mxu0 %v1537
    %1655 = vmatmul.f32.gmra.mxu0 %v1528
    %v1656 = vpop.f32.mrf.mxu0
    %v1657 = vadd.f32 0.0, %v1656
    %1658 = vdwg.mxu0
    %1659 = vmatpush.msra.mxu0 %v1598
    %1660 = vmatpush.msra.mxu0 %v1594
    %1661 = vmatpush.msra.mxu0 %v1590
    %1662 = vmatpush.msra.mxu0 %v1586
    %1663 = vmatpush.msra.mxu0 %v1582
    %1664 = vmatpush.msra.mxu0 %v1578
    %1665 = vmatpush.msra.mxu0 %v1574
    %1666 = vmatpush.msra.mxu0 %v1570
    %1667 = vmatpush.msra.mxu0 %v1566
    %1668 = vmatpush.msra.mxu0 %v1562
    %1669 = vmatpush.msra.mxu0 %v1558
    %1670 = vmatpush.msra.mxu0 %v1554
    %1671 = vmatpush.msra.mxu0 %v1550
    %1672 = vmatpush.msra.mxu0 %v1546
    %1673 = vmatpush.msra.mxu0 %v1542
    %1674 = vmatpush.msra.mxu0 %v1538
    %1675 = vmatmul.f32.gmra.mxu0 %v1528
    %v1676 = vpop.f32.mrf.mxu0
    %v1677 = vadd.f32 0.0, %v1676
    %1678 = vdwg.mxu0
    %v1679 = vadd.f32 %v1531, %v1617
    %v1680 = vadd.f32 %v1532, %v1637
    %v1681 = vadd.f32 %v1533, %v1657
    %v1682 = vadd.f32 %v1534, %v1677
    %v1683 = vxor.u32 %v1679, 2147483648
    %v1684 = vmul.f32 %v1683, 1.442695
    %v1685 = vpow.pop %v1684
    %v1686 = vadd.f32 %v1685, 1.0
    %v1687 = vrcp.pop %v1686
    %v1688 = vmul.f32 %v1686, %v1687
    %v1689 = vsub.f32 1.0, %v1688
    %v1690 = vmul.f32 %v1687, %v1689
    %v1691 = vadd.f32 %v1687, %v1690
    %vm1692 = vweird.f32 %v1686
    %vm1693 = vweird.f32 %v1687
    %vm1694 = vmor %vm1692, %vm1693
    %v1695 = vsel %vm1694, %v1687, %v1691
    %v1696 = vand.u32 2147483647, %v1686
    %vm1697 = vcmp.eq.f32.partialorder %v1696, 8.507059e+37
    %v1698 = vand.u32 %v1686, 2147483648
    %v1699 = vor.u32 1.1754944e-38, %v1698
    %v1700 = vsel %vm1697, %v1699, %v1695
    %v1701 = vmul.f32 1.0, %v1700
    %v1702 = vxor.u32 %v1680, 2147483648
    %v1703 = vmul.f32 %v1702, 1.442695
    %v1704 = vpow.pop %v1703
    %v1705 = vadd.f32 %v1704, 1.0
    %v1706 = vrcp.pop %v1705
    %v1707 = vmul.f32 %v1705, %v1706
    %v1708 = vsub.f32 1.0, %v1707
    %v1709 = vmul.f32 %v1706, %v1708
    %v1710 = vadd.f32 %v1706, %v1709
    %vm1711 = vweird.f32 %v1705
    %vm1712 = vweird.f32 %v1706
    %vm1713 = vmor %vm1711, %vm1712
    %v1714 = vsel %vm1713, %v1706, %v1710
    %v1715 = vand.u32 2147483647, %v1705
    %vm1716 = vcmp.eq.f32.partialorder %v1715, 8.507059e+37
    %v1717 = vand.u32 %v1705, 2147483648
    %v1718 = vor.u32 1.1754944e-38, %v1717
    %v1719 = vsel %vm1716, %v1718, %v1714
    %v1720 = vmul.f32 1.0, %v1719
    %v1721 = vtanh.pop %v1681
    %v1722 = vxor.u32 %v1682, 2147483648
    %v1723 = vmul.f32 %v1722, 1.442695
    %v1724 = vpow.pop %v1723
    %v1725 = vadd.f32 %v1724, 1.0
    %v1726 = vrcp.pop %v1725
    %v1727 = vmul.f32 %v1725, %v1726
    %v1728 = vsub.f32 1.0, %v1727
    %v1729 = vmul.f32 %v1726, %v1728
    %v1730 = vadd.f32 %v1726, %v1729
    %vm1731 = vweird.f32 %v1725
    %vm1732 = vweird.f32 %v1726
    %vm1733 = vmor %vm1731, %vm1732
    %v1734 = vsel %vm1733, %v1726, %v1730
    %v1735 = vand.u32 2147483647, %v1725
    %vm1736 = vcmp.eq.f32.partialorder %v1735, 8.507059e+37
    %v1737 = vand.u32 %v1725, 2147483648
    %v1738 = vor.u32 1.1754944e-38, %v1737
    %v1739 = vsel %vm1736, %v1738, %v1734
    %v1740 = vmul.f32 1.0, %v1739
    %v1741 = vmul.f32 %v1720, %v1529
    %v1742 = vmul.f32 %v1701, %v1721
    %v1743 = vadd.f32 %v1741, %v1742
    %v1744 = vtanh.pop %v1743
    %v1745 = vmul.f32 %v1740, %v1744
    %1746 = vst [vmem:[#allocation5] sm:$0xff] %v1743
    %1747 = vst [vmem:[#allocation4] sm:$0xff] %v1745
    %s1748 = scalar_lea.vmem [#allocation2], 40
    %1749 = vst [vmem:[%s1748] sm:$0xff] %v1745
    %v1750 = vld [vmem:[#allocation4] sm:$0xff]
    %v1751 = vld [vmem:[#allocation5] sm:$0xff]
    %s1752 = scalar_lea.vmem [#allocation3], 192
    %v1753 = vld [vmem:[%s1752] sm:$0xff]
    %v1754 = vld [vmem:[%s1752 + $0x8] sm:$0xff]
    %v1755 = vld [vmem:[%s1752 + $0x10] sm:$0xff]
    %v1756 = vld [vmem:[%s1752 + $0x18] sm:$0xff]
    %v1757 = vld [vmem:[#allocation11] sm:$0xff]
    %v1758 = vld [vmem:[#allocation11 + $0x8] sm:$0xff]
    %v1759 = vld [vmem:[#allocation11 + $0x10] sm:$0xff]
    %v1760 = vld [vmem:[#allocation11 + $0x18] sm:$0xff]
    %v1761 = vld [vmem:[#allocation11 + $0x20] sm:$0xff]
    %v1762 = vld [vmem:[#allocation11 + $0x28] sm:$0xff]
    %v1763 = vld [vmem:[#allocation11 + $0x30] sm:$0xff]
    %v1764 = vld [vmem:[#allocation11 + $0x38] sm:$0xff]
    %v1765 = vld [vmem:[#allocation11 + $0x40] sm:$0xff]
    %v1766 = vld [vmem:[#allocation11 + $0x48] sm:$0xff]
    %v1767 = vld [vmem:[#allocation11 + $0x50] sm:$0xff]
    %v1768 = vld [vmem:[#allocation11 + $0x58] sm:$0xff]
    %v1769 = vld [vmem:[#allocation11 + $0x60] sm:$0xff]
    %v1770 = vld [vmem:[#allocation11 + $0x68] sm:$0xff]
    %v1771 = vld [vmem:[#allocation11 + $0x70] sm:$0xff]
    %v1772 = vld [vmem:[#allocation11 + $0x78] sm:$0xff]
    %v1773 = vld [vmem:[#allocation11 + $0x80] sm:$0xff]
    %v1774 = vld [vmem:[#allocation11 + $0x88] sm:$0xff]
    %v1775 = vld [vmem:[#allocation11 + $0x90] sm:$0xff]
    %v1776 = vld [vmem:[#allocation11 + $0x98] sm:$0xff]
    %v1777 = vld [vmem:[#allocation11 + $0xa0] sm:$0xff]
    %v1778 = vld [vmem:[#allocation11 + $0xa8] sm:$0xff]
    %v1779 = vld [vmem:[#allocation11 + $0xb0] sm:$0xff]
    %v1780 = vld [vmem:[#allocation11 + $0xb8] sm:$0xff]
    %v1781 = vld [vmem:[#allocation11 + $0xc0] sm:$0xff]
    %v1782 = vld [vmem:[#allocation11 + $0xc8] sm:$0xff]
    %v1783 = vld [vmem:[#allocation11 + $0xd0] sm:$0xff]
    %v1784 = vld [vmem:[#allocation11 + $0xd8] sm:$0xff]
    %v1785 = vld [vmem:[#allocation11 + $0xe0] sm:$0xff]
    %v1786 = vld [vmem:[#allocation11 + $0xe8] sm:$0xff]
    %v1787 = vld [vmem:[#allocation11 + $0xf0] sm:$0xff]
    %v1788 = vld [vmem:[#allocation11 + $0xf8] sm:$0xff]
    %v1789 = vld [vmem:[#allocation11 + $0x100] sm:$0xff]
    %v1790 = vld [vmem:[#allocation11 + $0x108] sm:$0xff]
    %v1791 = vld [vmem:[#allocation11 + $0x110] sm:$0xff]
    %v1792 = vld [vmem:[#allocation11 + $0x118] sm:$0xff]
    %v1793 = vld [vmem:[#allocation11 + $0x120] sm:$0xff]
    %v1794 = vld [vmem:[#allocation11 + $0x128] sm:$0xff]
    %v1795 = vld [vmem:[#allocation11 + $0x130] sm:$0xff]
    %v1796 = vld [vmem:[#allocation11 + $0x138] sm:$0xff]
    %v1797 = vld [vmem:[#allocation11 + $0x140] sm:$0xff]
    %v1798 = vld [vmem:[#allocation11 + $0x148] sm:$0xff]
    %v1799 = vld [vmem:[#allocation11 + $0x150] sm:$0xff]
    %v1800 = vld [vmem:[#allocation11 + $0x158] sm:$0xff]
    %v1801 = vld [vmem:[#allocation11 + $0x160] sm:$0xff]
    %v1802 = vld [vmem:[#allocation11 + $0x168] sm:$0xff]
    %v1803 = vld [vmem:[#allocation11 + $0x170] sm:$0xff]
    %v1804 = vld [vmem:[#allocation11 + $0x178] sm:$0xff]
    %v1805 = vld [vmem:[#allocation11 + $0x180] sm:$0xff]
    %v1806 = vld [vmem:[#allocation11 + $0x188] sm:$0xff]
    %v1807 = vld [vmem:[#allocation11 + $0x190] sm:$0xff]
    %v1808 = vld [vmem:[#allocation11 + $0x198] sm:$0xff]
    %v1809 = vld [vmem:[#allocation11 + $0x1a0] sm:$0xff]
    %v1810 = vld [vmem:[#allocation11 + $0x1a8] sm:$0xff]
    %v1811 = vld [vmem:[#allocation11 + $0x1b0] sm:$0xff]
    %v1812 = vld [vmem:[#allocation11 + $0x1b8] sm:$0xff]
    %v1813 = vld [vmem:[#allocation11 + $0x1c0] sm:$0xff]
    %v1814 = vld [vmem:[#allocation11 + $0x1c8] sm:$0xff]
    %v1815 = vld [vmem:[#allocation11 + $0x1d0] sm:$0xff]
    %v1816 = vld [vmem:[#allocation11 + $0x1d8] sm:$0xff]
    %v1817 = vld [vmem:[#allocation11 + $0x1e0] sm:$0xff]
    %v1818 = vld [vmem:[#allocation11 + $0x1e8] sm:$0xff]
    %v1819 = vld [vmem:[#allocation11 + $0x1f0] sm:$0xff]
    %v1820 = vld [vmem:[#allocation11 + $0x1f8] sm:$0xff]
    %1821 = vmatpush.msra.mxu0 %v1817
    %1822 = vmatpush.msra.mxu0 %v1813
    %1823 = vmatpush.msra.mxu0 %v1809
    %1824 = vmatpush.msra.mxu0 %v1805
    %1825 = vmatpush.msra.mxu0 %v1801
    %1826 = vmatpush.msra.mxu0 %v1797
    %1827 = vmatpush.msra.mxu0 %v1793
    %1828 = vmatpush.msra.mxu0 %v1789
    %1829 = vmatpush.msra.mxu0 %v1785
    %1830 = vmatpush.msra.mxu0 %v1781
    %1831 = vmatpush.msra.mxu0 %v1777
    %1832 = vmatpush.msra.mxu0 %v1773
    %1833 = vmatpush.msra.mxu0 %v1769
    %1834 = vmatpush.msra.mxu0 %v1765
    %1835 = vmatpush.msra.mxu0 %v1761
    %1836 = vmatpush.msra.mxu0 %v1757
    %1837 = vmatmul.f32.gmra.mxu0 %v1750
    %v1838 = vpop.f32.mrf.mxu0
    %v1839 = vadd.f32 0.0, %v1838
    %1840 = vdwg.mxu0
    %1841 = vmatpush.msra.mxu0 %v1818
    %1842 = vmatpush.msra.mxu0 %v1814
    %1843 = vmatpush.msra.mxu0 %v1810
    %1844 = vmatpush.msra.mxu0 %v1806
    %1845 = vmatpush.msra.mxu0 %v1802
    %1846 = vmatpush.msra.mxu0 %v1798
    %1847 = vmatpush.msra.mxu0 %v1794
    %1848 = vmatpush.msra.mxu0 %v1790
    %1849 = vmatpush.msra.mxu0 %v1786
    %1850 = vmatpush.msra.mxu0 %v1782
    %1851 = vmatpush.msra.mxu0 %v1778
    %1852 = vmatpush.msra.mxu0 %v1774
    %1853 = vmatpush.msra.mxu0 %v1770
    %1854 = vmatpush.msra.mxu0 %v1766
    %1855 = vmatpush.msra.mxu0 %v1762
    %1856 = vmatpush.msra.mxu0 %v1758
    %1857 = vmatmul.f32.gmra.mxu0 %v1750
    %v1858 = vpop.f32.mrf.mxu0
    %v1859 = vadd.f32 0.0, %v1858
    %1860 = vdwg.mxu0
    %1861 = vmatpush.msra.mxu0 %v1819
    %1862 = vmatpush.msra.mxu0 %v1815
    %1863 = vmatpush.msra.mxu0 %v1811
    %1864 = vmatpush.msra.mxu0 %v1807
    %1865 = vmatpush.msra.mxu0 %v1803
    %1866 = vmatpush.msra.mxu0 %v1799
    %1867 = vmatpush.msra.mxu0 %v1795
    %1868 = vmatpush.msra.mxu0 %v1791
    %1869 = vmatpush.msra.mxu0 %v1787
    %1870 = vmatpush.msra.mxu0 %v1783
    %1871 = vmatpush.msra.mxu0 %v1779
    %1872 = vmatpush.msra.mxu0 %v1775
    %1873 = vmatpush.msra.mxu0 %v1771
    %1874 = vmatpush.msra.mxu0 %v1767
    %1875 = vmatpush.msra.mxu0 %v1763
    %1876 = vmatpush.msra.mxu0 %v1759
    %1877 = vmatmul.f32.gmra.mxu0 %v1750
    %v1878 = vpop.f32.mrf.mxu0
    %v1879 = vadd.f32 0.0, %v1878
    %1880 = vdwg.mxu0
    %1881 = vmatpush.msra.mxu0 %v1820
    %1882 = vmatpush.msra.mxu0 %v1816
    %1883 = vmatpush.msra.mxu0 %v1812
    %1884 = vmatpush.msra.mxu0 %v1808
    %1885 = vmatpush.msra.mxu0 %v1804
    %1886 = vmatpush.msra.mxu0 %v1800
    %1887 = vmatpush.msra.mxu0 %v1796
    %1888 = vmatpush.msra.mxu0 %v1792
    %1889 = vmatpush.msra.mxu0 %v1788
    %1890 = vmatpush.msra.mxu0 %v1784
    %1891 = vmatpush.msra.mxu0 %v1780
    %1892 = vmatpush.msra.mxu0 %v1776
    %1893 = vmatpush.msra.mxu0 %v1772
    %1894 = vmatpush.msra.mxu0 %v1768
    %1895 = vmatpush.msra.mxu0 %v1764
    %1896 = vmatpush.msra.mxu0 %v1760
    %1897 = vmatmul.f32.gmra.mxu0 %v1750
    %v1898 = vpop.f32.mrf.mxu0
    %v1899 = vadd.f32 0.0, %v1898
    %1900 = vdwg.mxu0
    %v1901 = vadd.f32 %v1753, %v1839
    %v1902 = vadd.f32 %v1754, %v1859
    %v1903 = vadd.f32 %v1755, %v1879
    %v1904 = vadd.f32 %v1756, %v1899
    %v1905 = vxor.u32 %v1901, 2147483648
    %v1906 = vmul.f32 %v1905, 1.442695
    %v1907 = vpow.pop %v1906
    %v1908 = vadd.f32 %v1907, 1.0
    %v1909 = vrcp.pop %v1908
    %v1910 = vmul.f32 %v1908, %v1909
    %v1911 = vsub.f32 1.0, %v1910
    %v1912 = vmul.f32 %v1909, %v1911
    %v1913 = vadd.f32 %v1909, %v1912
    %vm1914 = vweird.f32 %v1908
    %vm1915 = vweird.f32 %v1909
    %vm1916 = vmor %vm1914, %vm1915
    %v1917 = vsel %vm1916, %v1909, %v1913
    %v1918 = vand.u32 2147483647, %v1908
    %vm1919 = vcmp.eq.f32.partialorder %v1918, 8.507059e+37
    %v1920 = vand.u32 %v1908, 2147483648
    %v1921 = vor.u32 1.1754944e-38, %v1920
    %v1922 = vsel %vm1919, %v1921, %v1917
    %v1923 = vmul.f32 1.0, %v1922
    %v1924 = vxor.u32 %v1902, 2147483648
    %v1925 = vmul.f32 %v1924, 1.442695
    %v1926 = vpow.pop %v1925
    %v1927 = vadd.f32 %v1926, 1.0
    %v1928 = vrcp.pop %v1927
    %v1929 = vmul.f32 %v1927, %v1928
    %v1930 = vsub.f32 1.0, %v1929
    %v1931 = vmul.f32 %v1928, %v1930
    %v1932 = vadd.f32 %v1928, %v1931
    %vm1933 = vweird.f32 %v1927
    %vm1934 = vweird.f32 %v1928
    %vm1935 = vmor %vm1933, %vm1934
    %v1936 = vsel %vm1935, %v1928, %v1932
    %v1937 = vand.u32 2147483647, %v1927
    %vm1938 = vcmp.eq.f32.partialorder %v1937, 8.507059e+37
    %v1939 = vand.u32 %v1927, 2147483648
    %v1940 = vor.u32 1.1754944e-38, %v1939
    %v1941 = vsel %vm1938, %v1940, %v1936
    %v1942 = vmul.f32 1.0, %v1941
    %v1943 = vtanh.pop %v1903
    %v1944 = vxor.u32 %v1904, 2147483648
    %v1945 = vmul.f32 %v1944, 1.442695
    %v1946 = vpow.pop %v1945
    %v1947 = vadd.f32 %v1946, 1.0
    %v1948 = vrcp.pop %v1947
    %v1949 = vmul.f32 %v1947, %v1948
    %v1950 = vsub.f32 1.0, %v1949
    %v1951 = vmul.f32 %v1948, %v1950
    %v1952 = vadd.f32 %v1948, %v1951
    %vm1953 = vweird.f32 %v1947
    %vm1954 = vweird.f32 %v1948
    %vm1955 = vmor %vm1953, %vm1954
    %v1956 = vsel %vm1955, %v1948, %v1952
    %v1957 = vand.u32 2147483647, %v1947
    %vm1958 = vcmp.eq.f32.partialorder %v1957, 8.507059e+37
    %v1959 = vand.u32 %v1947, 2147483648
    %v1960 = vor.u32 1.1754944e-38, %v1959
    %v1961 = vsel %vm1958, %v1960, %v1956
    %v1962 = vmul.f32 1.0, %v1961
    %v1963 = vmul.f32 %v1942, %v1751
    %v1964 = vmul.f32 %v1923, %v1943
    %v1965 = vadd.f32 %v1963, %v1964
    %v1966 = vtanh.pop %v1965
    %v1967 = vmul.f32 %v1962, %v1966
    %1968 = vst [vmem:[#allocation5] sm:$0xff] %v1965
    %1969 = vst [vmem:[#allocation4] sm:$0xff] %v1967
    %s1970 = scalar_lea.vmem [#allocation2], 48
    %1971 = vst [vmem:[%s1970] sm:$0xff] %v1967
    %v1972 = vld [vmem:[#allocation4] sm:$0xff]
    %v1973 = vld [vmem:[#allocation5] sm:$0xff]
    %s1974 = scalar_lea.vmem [#allocation3], 224
    %v1975 = vld [vmem:[%s1974] sm:$0xff]
    %v1976 = vld [vmem:[%s1974 + $0x8] sm:$0xff]
    %v1977 = vld [vmem:[%s1974 + $0x10] sm:$0xff]
    %v1978 = vld [vmem:[%s1974 + $0x18] sm:$0xff]
    %v1979 = vld [vmem:[#allocation11] sm:$0xff]
    %v1980 = vld [vmem:[#allocation11 + $0x8] sm:$0xff]
    %v1981 = vld [vmem:[#allocation11 + $0x10] sm:$0xff]
    %v1982 = vld [vmem:[#allocation11 + $0x18] sm:$0xff]
    %v1983 = vld [vmem:[#allocation11 + $0x20] sm:$0xff]
    %v1984 = vld [vmem:[#allocation11 + $0x28] sm:$0xff]
    %v1985 = vld [vmem:[#allocation11 + $0x30] sm:$0xff]
    %v1986 = vld [vmem:[#allocation11 + $0x38] sm:$0xff]
    %v1987 = vld [vmem:[#allocation11 + $0x40] sm:$0xff]
    %v1988 = vld [vmem:[#allocation11 + $0x48] sm:$0xff]
    %v1989 = vld [vmem:[#allocation11 + $0x50] sm:$0xff]
    %v1990 = vld [vmem:[#allocation11 + $0x58] sm:$0xff]
    %v1991 = vld [vmem:[#allocation11 + $0x60] sm:$0xff]
    %v1992 = vld [vmem:[#allocation11 + $0x68] sm:$0xff]
    %v1993 = vld [vmem:[#allocation11 + $0x70] sm:$0xff]
    %v1994 = vld [vmem:[#allocation11 + $0x78] sm:$0xff]
    %v1995 = vld [vmem:[#allocation11 + $0x80] sm:$0xff]
    %v1996 = vld [vmem:[#allocation11 + $0x88] sm:$0xff]
    %v1997 = vld [vmem:[#allocation11 + $0x90] sm:$0xff]
    %v1998 = vld [vmem:[#allocation11 + $0x98] sm:$0xff]
    %v1999 = vld [vmem:[#allocation11 + $0xa0] sm:$0xff]
    %v2000 = vld [vmem:[#allocation11 + $0xa8] sm:$0xff]
    %v2001 = vld [vmem:[#allocation11 + $0xb0] sm:$0xff]
    %v2002 = vld [vmem:[#allocation11 + $0xb8] sm:$0xff]
    %v2003 = vld [vmem:[#allocation11 + $0xc0] sm:$0xff]
    %v2004 = vld [vmem:[#allocation11 + $0xc8] sm:$0xff]
    %v2005 = vld [vmem:[#allocation11 + $0xd0] sm:$0xff]
    %v2006 = vld [vmem:[#allocation11 + $0xd8] sm:$0xff]
    %v2007 = vld [vmem:[#allocation11 + $0xe0] sm:$0xff]
    %v2008 = vld [vmem:[#allocation11 + $0xe8] sm:$0xff]
    %v2009 = vld [vmem:[#allocation11 + $0xf0] sm:$0xff]
    %v2010 = vld [vmem:[#allocation11 + $0xf8] sm:$0xff]
    %v2011 = vld [vmem:[#allocation11 + $0x100] sm:$0xff]
    %v2012 = vld [vmem:[#allocation11 + $0x108] sm:$0xff]
    %v2013 = vld [vmem:[#allocation11 + $0x110] sm:$0xff]
    %v2014 = vld [vmem:[#allocation11 + $0x118] sm:$0xff]
    %v2015 = vld [vmem:[#allocation11 + $0x120] sm:$0xff]
    %v2016 = vld [vmem:[#allocation11 + $0x128] sm:$0xff]
    %v2017 = vld [vmem:[#allocation11 + $0x130] sm:$0xff]
    %v2018 = vld [vmem:[#allocation11 + $0x138] sm:$0xff]
    %v2019 = vld [vmem:[#allocation11 + $0x140] sm:$0xff]
    %v2020 = vld [vmem:[#allocation11 + $0x148] sm:$0xff]
    %v2021 = vld [vmem:[#allocation11 + $0x150] sm:$0xff]
    %v2022 = vld [vmem:[#allocation11 + $0x158] sm:$0xff]
    %v2023 = vld [vmem:[#allocation11 + $0x160] sm:$0xff]
    %v2024 = vld [vmem:[#allocation11 + $0x168] sm:$0xff]
    %v2025 = vld [vmem:[#allocation11 + $0x170] sm:$0xff]
    %v2026 = vld [vmem:[#allocation11 + $0x178] sm:$0xff]
    %v2027 = vld [vmem:[#allocation11 + $0x180] sm:$0xff]
    %v2028 = vld [vmem:[#allocation11 + $0x188] sm:$0xff]
    %v2029 = vld [vmem:[#allocation11 + $0x190] sm:$0xff]
    %v2030 = vld [vmem:[#allocation11 + $0x198] sm:$0xff]
    %v2031 = vld [vmem:[#allocation11 + $0x1a0] sm:$0xff]
    %v2032 = vld [vmem:[#allocation11 + $0x1a8] sm:$0xff]
    %v2033 = vld [vmem:[#allocation11 + $0x1b0] sm:$0xff]
    %v2034 = vld [vmem:[#allocation11 + $0x1b8] sm:$0xff]
    %v2035 = vld [vmem:[#allocation11 + $0x1c0] sm:$0xff]
    %v2036 = vld [vmem:[#allocation11 + $0x1c8] sm:$0xff]
    %v2037 = vld [vmem:[#allocation11 + $0x1d0] sm:$0xff]
    %v2038 = vld [vmem:[#allocation11 + $0x1d8] sm:$0xff]
    %v2039 = vld [vmem:[#allocation11 + $0x1e0] sm:$0xff]
    %v2040 = vld [vmem:[#allocation11 + $0x1e8] sm:$0xff]
    %v2041 = vld [vmem:[#allocation11 + $0x1f0] sm:$0xff]
    %v2042 = vld [vmem:[#allocation11 + $0x1f8] sm:$0xff]
    %2043 = vmatpush.msra.mxu0 %v2039
    %2044 = vmatpush.msra.mxu0 %v2035
    %2045 = vmatpush.msra.mxu0 %v2031
    %2046 = vmatpush.msra.mxu0 %v2027
    %2047 = vmatpush.msra.mxu0 %v2023
    %2048 = vmatpush.msra.mxu0 %v2019
    %2049 = vmatpush.msra.mxu0 %v2015
    %2050 = vmatpush.msra.mxu0 %v2011
    %2051 = vmatpush.msra.mxu0 %v2007
    %2052 = vmatpush.msra.mxu0 %v2003
    %2053 = vmatpush.msra.mxu0 %v1999
    %2054 = vmatpush.msra.mxu0 %v1995
    %2055 = vmatpush.msra.mxu0 %v1991
    %2056 = vmatpush.msra.mxu0 %v1987
    %2057 = vmatpush.msra.mxu0 %v1983
    %2058 = vmatpush.msra.mxu0 %v1979
    %2059 = vmatmul.f32.gmra.mxu0 %v1972
    %v2060 = vpop.f32.mrf.mxu0
    %v2061 = vadd.f32 0.0, %v2060
    %2062 = vdwg.mxu0
    %2063 = vmatpush.msra.mxu0 %v2040
    %2064 = vmatpush.msra.mxu0 %v2036
    %2065 = vmatpush.msra.mxu0 %v2032
    %2066 = vmatpush.msra.mxu0 %v2028
    %2067 = vmatpush.msra.mxu0 %v2024
    %2068 = vmatpush.msra.mxu0 %v2020
    %2069 = vmatpush.msra.mxu0 %v2016
    %2070 = vmatpush.msra.mxu0 %v2012
    %2071 = vmatpush.msra.mxu0 %v2008
    %2072 = vmatpush.msra.mxu0 %v2004
    %2073 = vmatpush.msra.mxu0 %v2000
    %2074 = vmatpush.msra.mxu0 %v1996
    %2075 = vmatpush.msra.mxu0 %v1992
    %2076 = vmatpush.msra.mxu0 %v1988
    %2077 = vmatpush.msra.mxu0 %v1984
    %2078 = vmatpush.msra.mxu0 %v1980
    %2079 = vmatmul.f32.gmra.mxu0 %v1972
    %v2080 = vpop.f32.mrf.mxu0
    %v2081 = vadd.f32 0.0, %v2080
    %2082 = vdwg.mxu0
    %2083 = vmatpush.msra.mxu0 %v2041
    %2084 = vmatpush.msra.mxu0 %v2037
    %2085 = vmatpush.msra.mxu0 %v2033
    %2086 = vmatpush.msra.mxu0 %v2029
    %2087 = vmatpush.msra.mxu0 %v2025
    %2088 = vmatpush.msra.mxu0 %v2021
    %2089 = vmatpush.msra.mxu0 %v2017
    %2090 = vmatpush.msra.mxu0 %v2013
    %2091 = vmatpush.msra.mxu0 %v2009
    %2092 = vmatpush.msra.mxu0 %v2005
    %2093 = vmatpush.msra.mxu0 %v2001
    %2094 = vmatpush.msra.mxu0 %v1997
    %2095 = vmatpush.msra.mxu0 %v1993
    %2096 = vmatpush.msra.mxu0 %v1989
    %2097 = vmatpush.msra.mxu0 %v1985
    %2098 = vmatpush.msra.mxu0 %v1981
    %2099 = vmatmul.f32.gmra.mxu0 %v1972
    %v2100 = vpop.f32.mrf.mxu0
    %v2101 = vadd.f32 0.0, %v2100
    %2102 = vdwg.mxu0
    %2103 = vmatpush.msra.mxu0 %v2042
    %2104 = vmatpush.msra.mxu0 %v2038
    %2105 = vmatpush.msra.mxu0 %v2034
    %2106 = vmatpush.msra.mxu0 %v2030
    %2107 = vmatpush.msra.mxu0 %v2026
    %2108 = vmatpush.msra.mxu0 %v2022
    %2109 = vmatpush.msra.mxu0 %v2018
    %2110 = vmatpush.msra.mxu0 %v2014
    %2111 = vmatpush.msra.mxu0 %v2010
    %2112 = vmatpush.msra.mxu0 %v2006
    %2113 = vmatpush.msra.mxu0 %v2002
    %2114 = vmatpush.msra.mxu0 %v1998
    %2115 = vmatpush.msra.mxu0 %v1994
    %2116 = vmatpush.msra.mxu0 %v1990
    %2117 = vmatpush.msra.mxu0 %v1986
    %2118 = vmatpush.msra.mxu0 %v1982
    %2119 = vmatmul.f32.gmra.mxu0 %v1972
    %v2120 = vpop.f32.mrf.mxu0
    %v2121 = vadd.f32 0.0, %v2120
    %2122 = vdwg.mxu0
    %v2123 = vadd.f32 %v1975, %v2061
    %v2124 = vadd.f32 %v1976, %v2081
    %v2125 = vadd.f32 %v1977, %v2101
    %v2126 = vadd.f32 %v1978, %v2121
    %v2127 = vxor.u32 %v2123, 2147483648
    %v2128 = vmul.f32 %v2127, 1.442695
    %v2129 = vpow.pop %v2128
    %v2130 = vadd.f32 %v2129, 1.0
    %v2131 = vrcp.pop %v2130
    %v2132 = vmul.f32 %v2130, %v2131
    %v2133 = vsub.f32 1.0, %v2132
    %v2134 = vmul.f32 %v2131, %v2133
    %v2135 = vadd.f32 %v2131, %v2134
    %vm2136 = vweird.f32 %v2130
    %vm2137 = vweird.f32 %v2131
    %vm2138 = vmor %vm2136, %vm2137
    %v2139 = vsel %vm2138, %v2131, %v2135
    %v2140 = vand.u32 2147483647, %v2130
    %vm2141 = vcmp.eq.f32.partialorder %v2140, 8.507059e+37
    %v2142 = vand.u32 %v2130, 2147483648
    %v2143 = vor.u32 1.1754944e-38, %v2142
    %v2144 = vsel %vm2141, %v2143, %v2139
    %v2145 = vmul.f32 1.0, %v2144
    %v2146 = vxor.u32 %v2124, 2147483648
    %v2147 = vmul.f32 %v2146, 1.442695
    %v2148 = vpow.pop %v2147
    %v2149 = vadd.f32 %v2148, 1.0
    %v2150 = vrcp.pop %v2149
    %v2151 = vmul.f32 %v2149, %v2150
    %v2152 = vsub.f32 1.0, %v2151
    %v2153 = vmul.f32 %v2150, %v2152
    %v2154 = vadd.f32 %v2150, %v2153
    %vm2155 = vweird.f32 %v2149
    %vm2156 = vweird.f32 %v2150
    %vm2157 = vmor %vm2155, %vm2156
    %v2158 = vsel %vm2157, %v2150, %v2154
    %v2159 = vand.u32 2147483647, %v2149
    %vm2160 = vcmp.eq.f32.partialorder %v2159, 8.507059e+37
    %v2161 = vand.u32 %v2149, 2147483648
    %v2162 = vor.u32 1.1754944e-38, %v2161
    %v2163 = vsel %vm2160, %v2162, %v2158
    %v2164 = vmul.f32 1.0, %v2163
    %v2165 = vtanh.pop %v2125
    %v2166 = vxor.u32 %v2126, 2147483648
    %v2167 = vmul.f32 %v2166, 1.442695
    %v2168 = vpow.pop %v2167
    %v2169 = vadd.f32 %v2168, 1.0
    %v2170 = vrcp.pop %v2169
    %v2171 = vmul.f32 %v2169, %v2170
    %v2172 = vsub.f32 1.0, %v2171
    %v2173 = vmul.f32 %v2170, %v2172
    %v2174 = vadd.f32 %v2170, %v2173
    %vm2175 = vweird.f32 %v2169
    %vm2176 = vweird.f32 %v2170
    %vm2177 = vmor %vm2175, %vm2176
    %v2178 = vsel %vm2177, %v2170, %v2174
    %v2179 = vand.u32 2147483647, %v2169
    %vm2180 = vcmp.eq.f32.partialorder %v2179, 8.507059e+37
    %v2181 = vand.u32 %v2169, 2147483648
    %v2182 = vor.u32 1.1754944e-38, %v2181
    %v2183 = vsel %vm2180, %v2182, %v2178
    %v2184 = vmul.f32 1.0, %v2183
    %v2185 = vmul.f32 %v2164, %v1973
    %v2186 = vmul.f32 %v2145, %v2165
    %v2187 = vadd.f32 %v2185, %v2186
    %v2188 = vtanh.pop %v2187
    %v2189 = vmul.f32 %v2184, %v2188
    %2190 = vst [vmem:[#allocation5] sm:$0xff] %v2187
    %2191 = vst [vmem:[#allocation4] sm:$0xff] %v2189
    %s2192 = scalar_lea.vmem [#allocation2], 56
    %2193 = vst [vmem:[%s2192] sm:$0xff] %v2189
    %v2194 = vld [vmem:[#allocation2] sm:$0xff]
    %v2195 = vld [vmem:[#allocation2 + $0x8] sm:$0xff]
    %v2196 = vld [vmem:[#allocation2 + $0x10] sm:$0xff]
    %v2197 = vld [vmem:[#allocation2 + $0x18] sm:$0xff]
    %v2198 = vld [vmem:[#allocation2 + $0x20] sm:$0xff]
    %v2199 = vld [vmem:[#allocation2 + $0x28] sm:$0xff]
    %v2200 = vld [vmem:[#allocation2 + $0x30] sm:$0xff]
    %v2201 = vld [vmem:[#allocation2 + $0x38] sm:$0xff]
    %v2202 = vld [vmem:[#allocation14] sm:$0xff]
    %v2203 = vld [vmem:[#allocation14 + $0x8] sm:$0xff]
    %v2204 = vld [vmem:[#allocation14 + $0x10] sm:$0xff]
    %v2205 = vld [vmem:[#allocation14 + $0x18] sm:$0xff]
    %v2206 = vld [vmem:[#allocation14 + $0x20] sm:$0xff]
    %v2207 = vld [vmem:[#allocation14 + $0x28] sm:$0xff]
    %v2208 = vld [vmem:[#allocation14 + $0x30] sm:$0xff]
    %v2209 = vld [vmem:[#allocation14 + $0x38] sm:$0xff]
    %v2210 = vld [vmem:[#allocation14 + $0x40] sm:$0xff]
    %v2211 = vld [vmem:[#allocation14 + $0x48] sm:$0xff]
    %v2212 = vld [vmem:[#allocation14 + $0x50] sm:$0xff]
    %v2213 = vld [vmem:[#allocation14 + $0x58] sm:$0xff]
    %v2214 = vld [vmem:[#allocation14 + $0x60] sm:$0xff]
    %v2215 = vld [vmem:[#allocation14 + $0x68] sm:$0xff]
    %v2216 = vld [vmem:[#allocation14 + $0x70] sm:$0xff]
    %v2217 = vld [vmem:[#allocation14 + $0x78] sm:$0xff]
    %v2218 = vld [vmem:[#allocation14 + $0x80] sm:$0xff]
    %v2219 = vld [vmem:[#allocation14 + $0x88] sm:$0xff]
    %v2220 = vld [vmem:[#allocation14 + $0x90] sm:$0xff]
    %v2221 = vld [vmem:[#allocation14 + $0x98] sm:$0xff]
    %v2222 = vld [vmem:[#allocation14 + $0xa0] sm:$0xff]
    %v2223 = vld [vmem:[#allocation14 + $0xa8] sm:$0xff]
    %v2224 = vld [vmem:[#allocation14 + $0xb0] sm:$0xff]
    %v2225 = vld [vmem:[#allocation14 + $0xb8] sm:$0xff]
    %v2226 = vld [vmem:[#allocation14 + $0xc0] sm:$0xff]
    %v2227 = vld [vmem:[#allocation14 + $0xc8] sm:$0xff]
    %v2228 = vld [vmem:[#allocation14 + $0xd0] sm:$0xff]
    %v2229 = vld [vmem:[#allocation14 + $0xd8] sm:$0xff]
    %v2230 = vld [vmem:[#allocation14 + $0xe0] sm:$0xff]
    %v2231 = vld [vmem:[#allocation14 + $0xe8] sm:$0xff]
    %v2232 = vld [vmem:[#allocation14 + $0xf0] sm:$0xff]
    %v2233 = vld [vmem:[#allocation14 + $0xf8] sm:$0xff]
    %v2234 = vld [vmem:[#allocation14 + $0x100] sm:$0xff]
    %v2235 = vld [vmem:[#allocation14 + $0x108] sm:$0xff]
    %v2236 = vld [vmem:[#allocation14 + $0x110] sm:$0xff]
    %v2237 = vld [vmem:[#allocation14 + $0x118] sm:$0xff]
    %v2238 = vld [vmem:[#allocation14 + $0x120] sm:$0xff]
    %v2239 = vld [vmem:[#allocation14 + $0x128] sm:$0xff]
    %v2240 = vld [vmem:[#allocation14 + $0x130] sm:$0xff]
    %v2241 = vld [vmem:[#allocation14 + $0x138] sm:$0xff]
    %v2242 = vld [vmem:[#allocation14 + $0x140] sm:$0xff]
    %v2243 = vld [vmem:[#allocation14 + $0x148] sm:$0xff]
    %v2244 = vld [vmem:[#allocation14 + $0x150] sm:$0xff]
    %v2245 = vld [vmem:[#allocation14 + $0x158] sm:$0xff]
    %v2246 = vld [vmem:[#allocation14 + $0x160] sm:$0xff]
    %v2247 = vld [vmem:[#allocation14 + $0x168] sm:$0xff]
    %v2248 = vld [vmem:[#allocation14 + $0x170] sm:$0xff]
    %v2249 = vld [vmem:[#allocation14 + $0x178] sm:$0xff]
    %v2250 = vld [vmem:[#allocation14 + $0x180] sm:$0xff]
    %v2251 = vld [vmem:[#allocation14 + $0x188] sm:$0xff]
    %v2252 = vld [vmem:[#allocation14 + $0x190] sm:$0xff]
    %v2253 = vld [vmem:[#allocation14 + $0x198] sm:$0xff]
    %v2254 = vld [vmem:[#allocation14 + $0x1a0] sm:$0xff]
    %v2255 = vld [vmem:[#allocation14 + $0x1a8] sm:$0xff]
    %v2256 = vld [vmem:[#allocation14 + $0x1b0] sm:$0xff]
    %v2257 = vld [vmem:[#allocation14 + $0x1b8] sm:$0xff]
    %v2258 = vld [vmem:[#allocation14 + $0x1c0] sm:$0xff]
    %v2259 = vld [vmem:[#allocation14 + $0x1c8] sm:$0xff]
    %v2260 = vld [vmem:[#allocation14 + $0x1d0] sm:$0xff]
    %v2261 = vld [vmem:[#allocation14 + $0x1d8] sm:$0xff]
    %v2262 = vld [vmem:[#allocation14 + $0x1e0] sm:$0xff]
    %v2263 = vld [vmem:[#allocation14 + $0x1e8] sm:$0xff]
    %v2264 = vld [vmem:[#allocation14 + $0x1f0] sm:$0xff]
    %v2265 = vld [vmem:[#allocation14 + $0x1f8] sm:$0xff]
    %v2266 = vld [vmem:[%s6] sm:$0xf]
    %v2268 = vperm.slane %v2266, 0
    %v2269 = vperm.slane %v2266, 1
    %v2270 = vperm.slane %v2266, 2
    %v2271 = vperm.slane %v2266, 3
    %2276 = vmatpush.msra.mxu0 %v2262
    %2277 = vmatpush.msra.mxu0 %v2258
    %2278 = vmatpush.msra.mxu0 %v2254
    %2279 = vmatpush.msra.mxu0 %v2250
    %2280 = vmatpush.msra.mxu0 %v2246
    %2281 = vmatpush.msra.mxu0 %v2242
    %2282 = vmatpush.msra.mxu0 %v2238
    %2283 = vmatpush.msra.mxu0 %v2234
    %2284 = vmatpush.msra.mxu0 %v2230
    %2285 = vmatpush.msra.mxu0 %v2226
    %2286 = vmatpush.msra.mxu0 %v2222
    %2287 = vmatpush.msra.mxu0 %v2218
    %2288 = vmatpush.msra.mxu0 %v2214
    %2289 = vmatpush.msra.mxu0 %v2210
    %2290 = vmatpush.msra.mxu0 %v2206
    %2291 = vmatpush.msra.mxu0 %v2202
    %2292 = vmatmul.f32.gmra.mxu0 %v2194
    %v2293 = vpop.f32.mrf.mxu0
    %v2294 = vadd.f32 %v2268, %v2293
    %2295 = vmatmul.f32.gmra.mxu0 %v2195
    %v2296 = vpop.f32.mrf.mxu0
    %v2297 = vadd.f32 %v2268, %v2296
    %2298 = vmatmul.f32.gmra.mxu0 %v2196
    %v2299 = vpop.f32.mrf.mxu0
    %v2300 = vadd.f32 %v2268, %v2299
    %2301 = vmatmul.f32.gmra.mxu0 %v2197
    %v2302 = vpop.f32.mrf.mxu0
    %v2303 = vadd.f32 %v2268, %v2302
    %2304 = vmatmul.f32.gmra.mxu0 %v2198
    %v2305 = vpop.f32.mrf.mxu0
    %v2306 = vadd.f32 %v2268, %v2305
    %2307 = vmatmul.f32.gmra.mxu0 %v2199
    %v2308 = vpop.f32.mrf.mxu0
    %v2309 = vadd.f32 %v2268, %v2308
    %2310 = vmatmul.f32.gmra.mxu0 %v2200
    %v2311 = vpop.f32.mrf.mxu0
    %v2312 = vadd.f32 %v2268, %v2311
    %2313 = vmatmul.f32.gmra.mxu0 %v2201
    %v2314 = vpop.f32.mrf.mxu0
    %v2315 = vadd.f32 %v2268, %v2314
    %2316 = vdwg.mxu0
    %2317 = vmatpush.msra.mxu0 %v2263
    %2318 = vmatpush.msra.mxu0 %v2259
    %2319 = vmatpush.msra.mxu0 %v2255
    %2320 = vmatpush.msra.mxu0 %v2251
    %2321 = vmatpush.msra.mxu0 %v2247
    %2322 = vmatpush.msra.mxu0 %v2243
    %2323 = vmatpush.msra.mxu0 %v2239
    %2324 = vmatpush.msra.mxu0 %v2235
    %2325 = vmatpush.msra.mxu0 %v2231
    %2326 = vmatpush.msra.mxu0 %v2227
    %2327 = vmatpush.msra.mxu0 %v2223
    %2328 = vmatpush.msra.mxu0 %v2219
    %2329 = vmatpush.msra.mxu0 %v2215
    %2330 = vmatpush.msra.mxu0 %v2211
    %2331 = vmatpush.msra.mxu0 %v2207
    %2332 = vmatpush.msra.mxu0 %v2203
    %2333 = vmatmul.f32.gmra.mxu0 %v2194
    %v2334 = vpop.f32.mrf.mxu0
    %v2335 = vadd.f32 %v2269, %v2334
    %2336 = vmatmul.f32.gmra.mxu0 %v2195
    %v2337 = vpop.f32.mrf.mxu0
    %v2338 = vadd.f32 %v2269, %v2337
    %2339 = vmatmul.f32.gmra.mxu0 %v2196
    %v2340 = vpop.f32.mrf.mxu0
    %v2341 = vadd.f32 %v2269, %v2340
    %2342 = vmatmul.f32.gmra.mxu0 %v2197
    %v2343 = vpop.f32.mrf.mxu0
    %v2344 = vadd.f32 %v2269, %v2343
    %2345 = vmatmul.f32.gmra.mxu0 %v2198
    %v2346 = vpop.f32.mrf.mxu0
    %v2347 = vadd.f32 %v2269, %v2346
    %2348 = vmatmul.f32.gmra.mxu0 %v2199
    %v2349 = vpop.f32.mrf.mxu0
    %v2350 = vadd.f32 %v2269, %v2349
    %2351 = vmatmul.f32.gmra.mxu0 %v2200
    %v2352 = vpop.f32.mrf.mxu0
    %v2353 = vadd.f32 %v2269, %v2352
    %2354 = vmatmul.f32.gmra.mxu0 %v2201
    %v2355 = vpop.f32.mrf.mxu0
    %v2356 = vadd.f32 %v2269, %v2355
    %2357 = vdwg.mxu0
    %2358 = vmatpush.msra.mxu0 %v2264
    %2359 = vmatpush.msra.mxu0 %v2260
    %2360 = vmatpush.msra.mxu0 %v2256
    %2361 = vmatpush.msra.mxu0 %v2252
    %2362 = vmatpush.msra.mxu0 %v2248
    %2363 = vmatpush.msra.mxu0 %v2244
    %2364 = vmatpush.msra.mxu0 %v2240
    %2365 = vmatpush.msra.mxu0 %v2236
    %2366 = vmatpush.msra.mxu0 %v2232
    %2367 = vmatpush.msra.mxu0 %v2228
    %2368 = vmatpush.msra.mxu0 %v2224
    %2369 = vmatpush.msra.mxu0 %v2220
    %2370 = vmatpush.msra.mxu0 %v2216
    %2371 = vmatpush.msra.mxu0 %v2212
    %2372 = vmatpush.msra.mxu0 %v2208
    %2373 = vmatpush.msra.mxu0 %v2204
    %2374 = vmatmul.f32.gmra.mxu0 %v2194
    %v2375 = vpop.f32.mrf.mxu0
    %v2376 = vadd.f32 %v2270, %v2375
    %2377 = vmatmul.f32.gmra.mxu0 %v2195
    %v2378 = vpop.f32.mrf.mxu0
    %v2379 = vadd.f32 %v2270, %v2378
    %2380 = vmatmul.f32.gmra.mxu0 %v2196
    %v2381 = vpop.f32.mrf.mxu0
    %v2382 = vadd.f32 %v2270, %v2381
    %2383 = vmatmul.f32.gmra.mxu0 %v2197
    %v2384 = vpop.f32.mrf.mxu0
    %v2385 = vadd.f32 %v2270, %v2384
    %2386 = vmatmul.f32.gmra.mxu0 %v2198
    %v2387 = vpop.f32.mrf.mxu0
    %v2388 = vadd.f32 %v2270, %v2387
    %2389 = vmatmul.f32.gmra.mxu0 %v2199
    %v2390 = vpop.f32.mrf.mxu0
    %v2391 = vadd.f32 %v2270, %v2390
    %2392 = vmatmul.f32.gmra.mxu0 %v2200
    %v2393 = vpop.f32.mrf.mxu0
    %v2394 = vadd.f32 %v2270, %v2393
    %2395 = vmatmul.f32.gmra.mxu0 %v2201
    %v2396 = vpop.f32.mrf.mxu0
    %v2397 = vadd.f32 %v2270, %v2396
    %2398 = vdwg.mxu0
    %2399 = vmatpush.msra.mxu0 %v2265
    %2400 = vmatpush.msra.mxu0 %v2261
    %2401 = vmatpush.msra.mxu0 %v2257
    %2402 = vmatpush.msra.mxu0 %v2253
    %2403 = vmatpush.msra.mxu0 %v2249
    %2404 = vmatpush.msra.mxu0 %v2245
    %2405 = vmatpush.msra.mxu0 %v2241
    %2406 = vmatpush.msra.mxu0 %v2237
    %2407 = vmatpush.msra.mxu0 %v2233
    %2408 = vmatpush.msra.mxu0 %v2229
    %2409 = vmatpush.msra.mxu0 %v2225
    %2410 = vmatpush.msra.mxu0 %v2221
    %2411 = vmatpush.msra.mxu0 %v2217
    %2412 = vmatpush.msra.mxu0 %v2213
    %2413 = vmatpush.msra.mxu0 %v2209
    %2414 = vmatpush.msra.mxu0 %v2205
    %2415 = vmatmul.f32.gmra.mxu0 %v2194
    %v2416 = vpop.f32.mrf.mxu0
    %v2417 = vadd.f32 %v2271, %v2416
    %2418 = vmatmul.f32.gmra.mxu0 %v2195
    %v2419 = vpop.f32.mrf.mxu0
    %v2420 = vadd.f32 %v2271, %v2419
    %2421 = vmatmul.f32.gmra.mxu0 %v2196
    %v2422 = vpop.f32.mrf.mxu0
    %v2423 = vadd.f32 %v2271, %v2422
    %2424 = vmatmul.f32.gmra.mxu0 %v2197
    %v2425 = vpop.f32.mrf.mxu0
    %v2426 = vadd.f32 %v2271, %v2425
    %2427 = vmatmul.f32.gmra.mxu0 %v2198
    %v2428 = vpop.f32.mrf.mxu0
    %v2429 = vadd.f32 %v2271, %v2428
    %2430 = vmatmul.f32.gmra.mxu0 %v2199
    %v2431 = vpop.f32.mrf.mxu0
    %v2432 = vadd.f32 %v2271, %v2431
    %2433 = vmatmul.f32.gmra.mxu0 %v2200
    %v2434 = vpop.f32.mrf.mxu0
    %v2435 = vadd.f32 %v2271, %v2434
    %2436 = vmatmul.f32.gmra.mxu0 %v2201
    %v2437 = vpop.f32.mrf.mxu0
    %v2438 = vadd.f32 %v2271, %v2437
    %2439 = vdwg.mxu0
    %2440 = vst [vmem:[#allocation3] sm:$0xff] %v2294
    %2441 = vst [vmem:[#allocation3 + $0x8] sm:$0xff] %v2335
    %2442 = vst [vmem:[#allocation3 + $0x10] sm:$0xff] %v2376
    %2443 = vst [vmem:[#allocation3 + $0x18] sm:$0xff] %v2417
    %2444 = vst [vmem:[#allocation3 + $0x20] sm:$0xff] %v2297
    %2445 = vst [vmem:[#allocation3 + $0x28] sm:$0xff] %v2338
    %2446 = vst [vmem:[#allocation3 + $0x30] sm:$0xff] %v2379
    %2447 = vst [vmem:[#allocation3 + $0x38] sm:$0xff] %v2420
    %2448 = vst [vmem:[#allocation3 + $0x40] sm:$0xff] %v2300
    %2449 = vst [vmem:[#allocation3 + $0x48] sm:$0xff] %v2341
    %2450 = vst [vmem:[#allocation3 + $0x50] sm:$0xff] %v2382
    %2451 = vst [vmem:[#allocation3 + $0x58] sm:$0xff] %v2423
    %2452 = vst [vmem:[#allocation3 + $0x60] sm:$0xff] %v2303
    %2453 = vst [vmem:[#allocation3 + $0x68] sm:$0xff] %v2344
    %2454 = vst [vmem:[#allocation3 + $0x70] sm:$0xff] %v2385
    %2455 = vst [vmem:[#allocation3 + $0x78] sm:$0xff] %v2426
    %2456 = vst [vmem:[#allocation3 + $0x80] sm:$0xff] %v2306
    %2457 = vst [vmem:[#allocation3 + $0x88] sm:$0xff] %v2347
    %2458 = vst [vmem:[#allocation3 + $0x90] sm:$0xff] %v2388
    %2459 = vst [vmem:[#allocation3 + $0x98] sm:$0xff] %v2429
    %2460 = vst [vmem:[#allocation3 + $0xa0] sm:$0xff] %v2309
    %2461 = vst [vmem:[#allocation3 + $0xa8] sm:$0xff] %v2350
    %2462 = vst [vmem:[#allocation3 + $0xb0] sm:$0xff] %v2391
    %2463 = vst [vmem:[#allocation3 + $0xb8] sm:$0xff] %v2432
    %2464 = vst [vmem:[#allocation3 + $0xc0] sm:$0xff] %v2312
    %2465 = vst [vmem:[#allocation3 + $0xc8] sm:$0xff] %v2353
    %2466 = vst [vmem:[#allocation3 + $0xd0] sm:$0xff] %v2394
    %2467 = vst [vmem:[#allocation3 + $0xd8] sm:$0xff] %v2435
    %2468 = vst [vmem:[#allocation3 + $0xe0] sm:$0xff] %v2315
    %2469 = vst [vmem:[#allocation3 + $0xe8] sm:$0xff] %v2356
    %2470 = vst [vmem:[#allocation3 + $0xf0] sm:$0xff] %v2397
    %2471 = vst [vmem:[#allocation3 + $0xf8] sm:$0xff] %v2438
    %2472 = vst [vmem:[#allocation4] sm:$0xff] 0.0
    %2473 = vst [vmem:[#allocation5] sm:$0xff] 0.0
    %v2474 = vld [vmem:[#allocation4] sm:$0xff]
    %v2475 = vld [vmem:[#allocation5] sm:$0xff]
    %v2476 = vld [vmem:[#allocation3] sm:$0xff]
    %v2477 = vld [vmem:[#allocation3 + $0x8] sm:$0xff]
    %v2478 = vld [vmem:[#allocation3 + $0x10] sm:$0xff]
    %v2479 = vld [vmem:[#allocation3 + $0x18] sm:$0xff]
    %v2480 = vld [vmem:[#allocation15] sm:$0xff]
    %v2481 = vld [vmem:[#allocation15 + $0x8] sm:$0xff]
    %v2482 = vld [vmem:[#allocation15 + $0x10] sm:$0xff]
    %v2483 = vld [vmem:[#allocation15 + $0x18] sm:$0xff]
    %v2484 = vld [vmem:[#allocation15 + $0x20] sm:$0xff]
    %v2485 = vld [vmem:[#allocation15 + $0x28] sm:$0xff]
    %v2486 = vld [vmem:[#allocation15 + $0x30] sm:$0xff]
    %v2487 = vld [vmem:[#allocation15 + $0x38] sm:$0xff]
    %v2488 = vld [vmem:[#allocation15 + $0x40] sm:$0xff]
    %v2489 = vld [vmem:[#allocation15 + $0x48] sm:$0xff]
    %v2490 = vld [vmem:[#allocation15 + $0x50] sm:$0xff]
    %v2491 = vld [vmem:[#allocation15 + $0x58] sm:$0xff]
    %v2492 = vld [vmem:[#allocation15 + $0x60] sm:$0xff]
    %v2493 = vld [vmem:[#allocation15 + $0x68] sm:$0xff]
    %v2494 = vld [vmem:[#allocation15 + $0x70] sm:$0xff]
    %v2495 = vld [vmem:[#allocation15 + $0x78] sm:$0xff]
    %v2496 = vld [vmem:[#allocation15 + $0x80] sm:$0xff]
    %v2497 = vld [vmem:[#allocation15 + $0x88] sm:$0xff]
    %v2498 = vld [vmem:[#allocation15 + $0x90] sm:$0xff]
    %v2499 = vld [vmem:[#allocation15 + $0x98] sm:$0xff]
    %v2500 = vld [vmem:[#allocation15 + $0xa0] sm:$0xff]
    %v2501 = vld [vmem:[#allocation15 + $0xa8] sm:$0xff]
    %v2502 = vld [vmem:[#allocation15 + $0xb0] sm:$0xff]
    %v2503 = vld [vmem:[#allocation15 + $0xb8] sm:$0xff]
    %v2504 = vld [vmem:[#allocation15 + $0xc0] sm:$0xff]
    %v2505 = vld [vmem:[#allocation15 + $0xc8] sm:$0xff]
    %v2506 = vld [vmem:[#allocation15 + $0xd0] sm:$0xff]
    %v2507 = vld [vmem:[#allocation15 + $0xd8] sm:$0xff]
    %v2508 = vld [vmem:[#allocation15 + $0xe0] sm:$0xff]
    %v2509 = vld [vmem:[#allocation15 + $0xe8] sm:$0xff]
    %v2510 = vld [vmem:[#allocation15 + $0xf0] sm:$0xff]
    %v2511 = vld [vmem:[#allocation15 + $0xf8] sm:$0xff]
    %v2512 = vld [vmem:[#allocation15 + $0x100] sm:$0xff]
    %v2513 = vld [vmem:[#allocation15 + $0x108] sm:$0xff]
    %v2514 = vld [vmem:[#allocation15 + $0x110] sm:$0xff]
    %v2515 = vld [vmem:[#allocation15 + $0x118] sm:$0xff]
    %v2516 = vld [vmem:[#allocation15 + $0x120] sm:$0xff]
    %v2517 = vld [vmem:[#allocation15 + $0x128] sm:$0xff]
    %v2518 = vld [vmem:[#allocation15 + $0x130] sm:$0xff]
    %v2519 = vld [vmem:[#allocation15 + $0x138] sm:$0xff]
    %v2520 = vld [vmem:[#allocation15 + $0x140] sm:$0xff]
    %v2521 = vld [vmem:[#allocation15 + $0x148] sm:$0xff]
    %v2522 = vld [vmem:[#allocation15 + $0x150] sm:$0xff]
    %v2523 = vld [vmem:[#allocation15 + $0x158] sm:$0xff]
    %v2524 = vld [vmem:[#allocation15 + $0x160] sm:$0xff]
    %v2525 = vld [vmem:[#allocation15 + $0x168] sm:$0xff]
    %v2526 = vld [vmem:[#allocation15 + $0x170] sm:$0xff]
    %v2527 = vld [vmem:[#allocation15 + $0x178] sm:$0xff]
    %v2528 = vld [vmem:[#allocation15 + $0x180] sm:$0xff]
    %v2529 = vld [vmem:[#allocation15 + $0x188] sm:$0xff]
    %v2530 = vld [vmem:[#allocation15 + $0x190] sm:$0xff]
    %v2531 = vld [vmem:[#allocation15 + $0x198] sm:$0xff]
    %v2532 = vld [vmem:[#allocation15 + $0x1a0] sm:$0xff]
    %v2533 = vld [vmem:[#allocation15 + $0x1a8] sm:$0xff]
    %v2534 = vld [vmem:[#allocation15 + $0x1b0] sm:$0xff]
    %v2535 = vld [vmem:[#allocation15 + $0x1b8] sm:$0xff]
    %v2536 = vld [vmem:[#allocation15 + $0x1c0] sm:$0xff]
    %v2537 = vld [vmem:[#allocation15 + $0x1c8] sm:$0xff]
    %v2538 = vld [vmem:[#allocation15 + $0x1d0] sm:$0xff]
    %v2539 = vld [vmem:[#allocation15 + $0x1d8] sm:$0xff]
    %v2540 = vld [vmem:[#allocation15 + $0x1e0] sm:$0xff]
    %v2541 = vld [vmem:[#allocation15 + $0x1e8] sm:$0xff]
    %v2542 = vld [vmem:[#allocation15 + $0x1f0] sm:$0xff]
    %v2543 = vld [vmem:[#allocation15 + $0x1f8] sm:$0xff]
    %2544 = vmatpush.msra.mxu0 %v2540
    %2545 = vmatpush.msra.mxu0 %v2536
    %2546 = vmatpush.msra.mxu0 %v2532
    %2547 = vmatpush.msra.mxu0 %v2528
    %2548 = vmatpush.msra.mxu0 %v2524
    %2549 = vmatpush.msra.mxu0 %v2520
    %2550 = vmatpush.msra.mxu0 %v2516
    %2551 = vmatpush.msra.mxu0 %v2512
    %2552 = vmatpush.msra.mxu0 %v2508
    %2553 = vmatpush.msra.mxu0 %v2504
    %2554 = vmatpush.msra.mxu0 %v2500
    %2555 = vmatpush.msra.mxu0 %v2496
    %2556 = vmatpush.msra.mxu0 %v2492
    %2557 = vmatpush.msra.mxu0 %v2488
    %2558 = vmatpush.msra.mxu0 %v2484
    %2559 = vmatpush.msra.mxu0 %v2480
    %2560 = vmatmul.f32.gmra.mxu0 %v2474
    %v2561 = vpop.f32.mrf.mxu0
    %v2562 = vadd.f32 0.0, %v2561
    %2563 = vdwg.mxu0
    %2564 = vmatpush.msra.mxu0 %v2541
    %2565 = vmatpush.msra.mxu0 %v2537
    %2566 = vmatpush.msra.mxu0 %v2533
    %2567 = vmatpush.msra.mxu0 %v2529
    %2568 = vmatpush.msra.mxu0 %v2525
    %2569 = vmatpush.msra.mxu0 %v2521
    %2570 = vmatpush.msra.mxu0 %v2517
    %2571 = vmatpush.msra.mxu0 %v2513
    %2572 = vmatpush.msra.mxu0 %v2509
    %2573 = vmatpush.msra.mxu0 %v2505
    %2574 = vmatpush.msra.mxu0 %v2501
    %2575 = vmatpush.msra.mxu0 %v2497
    %2576 = vmatpush.msra.mxu0 %v2493
    %2577 = vmatpush.msra.mxu0 %v2489
    %2578 = vmatpush.msra.mxu0 %v2485
    %2579 = vmatpush.msra.mxu0 %v2481
    %2580 = vmatmul.f32.gmra.mxu0 %v2474
    %v2581 = vpop.f32.mrf.mxu0
    %v2582 = vadd.f32 0.0, %v2581
    %2583 = vdwg.mxu0
    %2584 = vmatpush.msra.mxu0 %v2542
    %2585 = vmatpush.msra.mxu0 %v2538
    %2586 = vmatpush.msra.mxu0 %v2534
    %2587 = vmatpush.msra.mxu0 %v2530
    %2588 = vmatpush.msra.mxu0 %v2526
    %2589 = vmatpush.msra.mxu0 %v2522
    %2590 = vmatpush.msra.mxu0 %v2518
    %2591 = vmatpush.msra.mxu0 %v2514
    %2592 = vmatpush.msra.mxu0 %v2510
    %2593 = vmatpush.msra.mxu0 %v2506
    %2594 = vmatpush.msra.mxu0 %v2502
    %2595 = vmatpush.msra.mxu0 %v2498
    %2596 = vmatpush.msra.mxu0 %v2494
    %2597 = vmatpush.msra.mxu0 %v2490
    %2598 = vmatpush.msra.mxu0 %v2486
    %2599 = vmatpush.msra.mxu0 %v2482
    %2600 = vmatmul.f32.gmra.mxu0 %v2474
    %v2601 = vpop.f32.mrf.mxu0
    %v2602 = vadd.f32 0.0, %v2601
    %2603 = vdwg.mxu0
    %2604 = vmatpush.msra.mxu0 %v2543
    %2605 = vmatpush.msra.mxu0 %v2539
    %2606 = vmatpush.msra.mxu0 %v2535
    %2607 = vmatpush.msra.mxu0 %v2531
    %2608 = vmatpush.msra.mxu0 %v2527
    %2609 = vmatpush.msra.mxu0 %v2523
    %2610 = vmatpush.msra.mxu0 %v2519
    %2611 = vmatpush.msra.mxu0 %v2515
    %2612 = vmatpush.msra.mxu0 %v2511
    %2613 = vmatpush.msra.mxu0 %v2507
    %2614 = vmatpush.msra.mxu0 %v2503
    %2615 = vmatpush.msra.mxu0 %v2499
    %2616 = vmatpush.msra.mxu0 %v2495
    %2617 = vmatpush.msra.mxu0 %v2491
    %2618 = vmatpush.msra.mxu0 %v2487
    %2619 = vmatpush.msra.mxu0 %v2483
    %2620 = vmatmul.f32.gmra.mxu0 %v2474
    %v2621 = vpop.f32.mrf.mxu0
    %v2622 = vadd.f32 0.0, %v2621
    %2623 = vdwg.mxu0
    %v2624 = vadd.f32 %v2476, %v2562
    %v2625 = vadd.f32 %v2477, %v2582
    %v2626 = vadd.f32 %v2478, %v2602
    %v2627 = vadd.f32 %v2479, %v2622
    %v2628 = vxor.u32 %v2624, 2147483648
    %v2629 = vmul.f32 %v2628, 1.442695
    %v2630 = vpow.pop %v2629
    %v2631 = vadd.f32 %v2630, 1.0
    %v2632 = vrcp.pop %v2631
    %v2633 = vmul.f32 %v2631, %v2632
    %v2634 = vsub.f32 1.0, %v2633
    %v2635 = vmul.f32 %v2632, %v2634
    %v2636 = vadd.f32 %v2632, %v2635
    %vm2637 = vweird.f32 %v2631
    %vm2638 = vweird.f32 %v2632
    %vm2639 = vmor %vm2637, %vm2638
    %v2640 = vsel %vm2639, %v2632, %v2636
    %v2641 = vand.u32 2147483647, %v2631
    %vm2642 = vcmp.eq.f32.partialorder %v2641, 8.507059e+37
    %v2643 = vand.u32 %v2631, 2147483648
    %v2644 = vor.u32 1.1754944e-38, %v2643
    %v2645 = vsel %vm2642, %v2644, %v2640
    %v2646 = vmul.f32 1.0, %v2645
    %v2647 = vxor.u32 %v2625, 2147483648
    %v2648 = vmul.f32 %v2647, 1.442695
    %v2649 = vpow.pop %v2648
    %v2650 = vadd.f32 %v2649, 1.0
    %v2651 = vrcp.pop %v2650
    %v2652 = vmul.f32 %v2650, %v2651
    %v2653 = vsub.f32 1.0, %v2652
    %v2654 = vmul.f32 %v2651, %v2653
    %v2655 = vadd.f32 %v2651, %v2654
    %vm2656 = vweird.f32 %v2650
    %vm2657 = vweird.f32 %v2651
    %vm2658 = vmor %vm2656, %vm2657
    %v2659 = vsel %vm2658, %v2651, %v2655
    %v2660 = vand.u32 2147483647, %v2650
    %vm2661 = vcmp.eq.f32.partialorder %v2660, 8.507059e+37
    %v2662 = vand.u32 %v2650, 2147483648
    %v2663 = vor.u32 1.1754944e-38, %v2662
    %v2664 = vsel %vm2661, %v2663, %v2659
    %v2665 = vmul.f32 1.0, %v2664
    %v2666 = vtanh.pop %v2626
    %v2667 = vxor.u32 %v2627, 2147483648
    %v2668 = vmul.f32 %v2667, 1.442695
    %v2669 = vpow.pop %v2668
    %v2670 = vadd.f32 %v2669, 1.0
    %v2671 = vrcp.pop %v2670
    %v2672 = vmul.f32 %v2670, %v2671
    %v2673 = vsub.f32 1.0, %v2672
    %v2674 = vmul.f32 %v2671, %v2673
    %v2675 = vadd.f32 %v2671, %v2674
    %vm2676 = vweird.f32 %v2670
    %vm2677 = vweird.f32 %v2671
    %vm2678 = vmor %vm2676, %vm2677
    %v2679 = vsel %vm2678, %v2671, %v2675
    %v2680 = vand.u32 2147483647, %v2670
    %vm2681 = vcmp.eq.f32.partialorder %v2680, 8.507059e+37
    %v2682 = vand.u32 %v2670, 2147483648
    %v2683 = vor.u32 1.1754944e-38, %v2682
    %v2684 = vsel %vm2681, %v2683, %v2679
    %v2685 = vmul.f32 1.0, %v2684
    %v2686 = vmul.f32 %v2665, %v2475
    %v2687 = vmul.f32 %v2646, %v2666
    %v2688 = vadd.f32 %v2686, %v2687
    %v2689 = vtanh.pop %v2688
    %v2690 = vmul.f32 %v2685, %v2689
    %2691 = vst [vmem:[#allocation5] sm:$0xff] %v2688
    %2692 = vst [vmem:[#allocation4] sm:$0xff] %v2690
    %v2693 = vld [vmem:[#allocation4] sm:$0xff]
    %v2694 = vld [vmem:[#allocation5] sm:$0xff]
    %v2695 = vld [vmem:[%s642] sm:$0xff]
    %v2696 = vld [vmem:[%s642 + $0x8] sm:$0xff]
    %v2697 = vld [vmem:[%s642 + $0x10] sm:$0xff]
    %v2698 = vld [vmem:[%s642 + $0x18] sm:$0xff]
    %v2699 = vld [vmem:[#allocation15] sm:$0xff]
    %v2700 = vld [vmem:[#allocation15 + $0x8] sm:$0xff]
    %v2701 = vld [vmem:[#allocation15 + $0x10] sm:$0xff]
    %v2702 = vld [vmem:[#allocation15 + $0x18] sm:$0xff]
    %v2703 = vld [vmem:[#allocation15 + $0x20] sm:$0xff]
    %v2704 = vld [vmem:[#allocation15 + $0x28] sm:$0xff]
    %v2705 = vld [vmem:[#allocation15 + $0x30] sm:$0xff]
    %v2706 = vld [vmem:[#allocation15 + $0x38] sm:$0xff]
    %v2707 = vld [vmem:[#allocation15 + $0x40] sm:$0xff]
    %v2708 = vld [vmem:[#allocation15 + $0x48] sm:$0xff]
    %v2709 = vld [vmem:[#allocation15 + $0x50] sm:$0xff]
    %v2710 = vld [vmem:[#allocation15 + $0x58] sm:$0xff]
    %v2711 = vld [vmem:[#allocation15 + $0x60] sm:$0xff]
    %v2712 = vld [vmem:[#allocation15 + $0x68] sm:$0xff]
    %v2713 = vld [vmem:[#allocation15 + $0x70] sm:$0xff]
    %v2714 = vld [vmem:[#allocation15 + $0x78] sm:$0xff]
    %v2715 = vld [vmem:[#allocation15 + $0x80] sm:$0xff]
    %v2716 = vld [vmem:[#allocation15 + $0x88] sm:$0xff]
    %v2717 = vld [vmem:[#allocation15 + $0x90] sm:$0xff]
    %v2718 = vld [vmem:[#allocation15 + $0x98] sm:$0xff]
    %v2719 = vld [vmem:[#allocation15 + $0xa0] sm:$0xff]
    %v2720 = vld [vmem:[#allocation15 + $0xa8] sm:$0xff]
    %v2721 = vld [vmem:[#allocation15 + $0xb0] sm:$0xff]
    %v2722 = vld [vmem:[#allocation15 + $0xb8] sm:$0xff]
    %v2723 = vld [vmem:[#allocation15 + $0xc0] sm:$0xff]
    %v2724 = vld [vmem:[#allocation15 + $0xc8] sm:$0xff]
    %v2725 = vld [vmem:[#allocation15 + $0xd0] sm:$0xff]
    %v2726 = vld [vmem:[#allocation15 + $0xd8] sm:$0xff]
    %v2727 = vld [vmem:[#allocation15 + $0xe0] sm:$0xff]
    %v2728 = vld [vmem:[#allocation15 + $0xe8] sm:$0xff]
    %v2729 = vld [vmem:[#allocation15 + $0xf0] sm:$0xff]
    %v2730 = vld [vmem:[#allocation15 + $0xf8] sm:$0xff]
    %v2731 = vld [vmem:[#allocation15 + $0x100] sm:$0xff]
    %v2732 = vld [vmem:[#allocation15 + $0x108] sm:$0xff]
    %v2733 = vld [vmem:[#allocation15 + $0x110] sm:$0xff]
    %v2734 = vld [vmem:[#allocation15 + $0x118] sm:$0xff]
    %v2735 = vld [vmem:[#allocation15 + $0x120] sm:$0xff]
    %v2736 = vld [vmem:[#allocation15 + $0x128] sm:$0xff]
    %v2737 = vld [vmem:[#allocation15 + $0x130] sm:$0xff]
    %v2738 = vld [vmem:[#allocation15 + $0x138] sm:$0xff]
    %v2739 = vld [vmem:[#allocation15 + $0x140] sm:$0xff]
    %v2740 = vld [vmem:[#allocation15 + $0x148] sm:$0xff]
    %v2741 = vld [vmem:[#allocation15 + $0x150] sm:$0xff]
    %v2742 = vld [vmem:[#allocation15 + $0x158] sm:$0xff]
    %v2743 = vld [vmem:[#allocation15 + $0x160] sm:$0xff]
    %v2744 = vld [vmem:[#allocation15 + $0x168] sm:$0xff]
    %v2745 = vld [vmem:[#allocation15 + $0x170] sm:$0xff]
    %v2746 = vld [vmem:[#allocation15 + $0x178] sm:$0xff]
    %v2747 = vld [vmem:[#allocation15 + $0x180] sm:$0xff]
    %v2748 = vld [vmem:[#allocation15 + $0x188] sm:$0xff]
    %v2749 = vld [vmem:[#allocation15 + $0x190] sm:$0xff]
    %v2750 = vld [vmem:[#allocation15 + $0x198] sm:$0xff]
    %v2751 = vld [vmem:[#allocation15 + $0x1a0] sm:$0xff]
    %v2752 = vld [vmem:[#allocation15 + $0x1a8] sm:$0xff]
    %v2753 = vld [vmem:[#allocation15 + $0x1b0] sm:$0xff]
    %v2754 = vld [vmem:[#allocation15 + $0x1b8] sm:$0xff]
    %v2755 = vld [vmem:[#allocation15 + $0x1c0] sm:$0xff]
    %v2756 = vld [vmem:[#allocation15 + $0x1c8] sm:$0xff]
    %v2757 = vld [vmem:[#allocation15 + $0x1d0] sm:$0xff]
    %v2758 = vld [vmem:[#allocation15 + $0x1d8] sm:$0xff]
    %v2759 = vld [vmem:[#allocation15 + $0x1e0] sm:$0xff]
    %v2760 = vld [vmem:[#allocation15 + $0x1e8] sm:$0xff]
    %v2761 = vld [vmem:[#allocation15 + $0x1f0] sm:$0xff]
    %v2762 = vld [vmem:[#allocation15 + $0x1f8] sm:$0xff]
    %2763 = vmatpush.msra.mxu0 %v2759
    %2764 = vmatpush.msra.mxu0 %v2755
    %2765 = vmatpush.msra.mxu0 %v2751
    %2766 = vmatpush.msra.mxu0 %v2747
    %2767 = vmatpush.msra.mxu0 %v2743
    %2768 = vmatpush.msra.mxu0 %v2739
    %2769 = vmatpush.msra.mxu0 %v2735
    %2770 = vmatpush.msra.mxu0 %v2731
    %2771 = vmatpush.msra.mxu0 %v2727
    %2772 = vmatpush.msra.mxu0 %v2723
    %2773 = vmatpush.msra.mxu0 %v2719
    %2774 = vmatpush.msra.mxu0 %v2715
    %2775 = vmatpush.msra.mxu0 %v2711
    %2776 = vmatpush.msra.mxu0 %v2707
    %2777 = vmatpush.msra.mxu0 %v2703
    %2778 = vmatpush.msra.mxu0 %v2699
    %2779 = vmatmul.f32.gmra.mxu0 %v2693
    %v2780 = vpop.f32.mrf.mxu0
    %v2781 = vadd.f32 0.0, %v2780
    %2782 = vdwg.mxu0
    %2783 = vmatpush.msra.mxu0 %v2760
    %2784 = vmatpush.msra.mxu0 %v2756
    %2785 = vmatpush.msra.mxu0 %v2752
    %2786 = vmatpush.msra.mxu0 %v2748
    %2787 = vmatpush.msra.mxu0 %v2744
    %2788 = vmatpush.msra.mxu0 %v2740
    %2789 = vmatpush.msra.mxu0 %v2736
    %2790 = vmatpush.msra.mxu0 %v2732
    %2791 = vmatpush.msra.mxu0 %v2728
    %2792 = vmatpush.msra.mxu0 %v2724
    %2793 = vmatpush.msra.mxu0 %v2720
    %2794 = vmatpush.msra.mxu0 %v2716
    %2795 = vmatpush.msra.mxu0 %v2712
    %2796 = vmatpush.msra.mxu0 %v2708
    %2797 = vmatpush.msra.mxu0 %v2704
    %2798 = vmatpush.msra.mxu0 %v2700
    %2799 = vmatmul.f32.gmra.mxu0 %v2693
    %v2800 = vpop.f32.mrf.mxu0
    %v2801 = vadd.f32 0.0, %v2800
    %2802 = vdwg.mxu0
    %2803 = vmatpush.msra.mxu0 %v2761
    %2804 = vmatpush.msra.mxu0 %v2757
    %2805 = vmatpush.msra.mxu0 %v2753
    %2806 = vmatpush.msra.mxu0 %v2749
    %2807 = vmatpush.msra.mxu0 %v2745
    %2808 = vmatpush.msra.mxu0 %v2741
    %2809 = vmatpush.msra.mxu0 %v2737
    %2810 = vmatpush.msra.mxu0 %v2733
    %2811 = vmatpush.msra.mxu0 %v2729
    %2812 = vmatpush.msra.mxu0 %v2725
    %2813 = vmatpush.msra.mxu0 %v2721
    %2814 = vmatpush.msra.mxu0 %v2717
    %2815 = vmatpush.msra.mxu0 %v2713
    %2816 = vmatpush.msra.mxu0 %v2709
    %2817 = vmatpush.msra.mxu0 %v2705
    %2818 = vmatpush.msra.mxu0 %v2701
    %2819 = vmatmul.f32.gmra.mxu0 %v2693
    %v2820 = vpop.f32.mrf.mxu0
    %v2821 = vadd.f32 0.0, %v2820
    %2822 = vdwg.mxu0
    %2823 = vmatpush.msra.mxu0 %v2762
    %2824 = vmatpush.msra.mxu0 %v2758
    %2825 = vmatpush.msra.mxu0 %v2754
    %2826 = vmatpush.msra.mxu0 %v2750
    %2827 = vmatpush.msra.mxu0 %v2746
    %2828 = vmatpush.msra.mxu0 %v2742
    %2829 = vmatpush.msra.mxu0 %v2738
    %2830 = vmatpush.msra.mxu0 %v2734
    %2831 = vmatpush.msra.mxu0 %v2730
    %2832 = vmatpush.msra.mxu0 %v2726
    %2833 = vmatpush.msra.mxu0 %v2722
    %2834 = vmatpush.msra.mxu0 %v2718
    %2835 = vmatpush.msra.mxu0 %v2714
    %2836 = vmatpush.msra.mxu0 %v2710
    %2837 = vmatpush.msra.mxu0 %v2706
    %2838 = vmatpush.msra.mxu0 %v2702
    %2839 = vmatmul.f32.gmra.mxu0 %v2693
    %v2840 = vpop.f32.mrf.mxu0
    %v2841 = vadd.f32 0.0, %v2840
    %2842 = vdwg.mxu0
    %v2843 = vadd.f32 %v2695, %v2781
    %v2844 = vadd.f32 %v2696, %v2801
    %v2845 = vadd.f32 %v2697, %v2821
    %v2846 = vadd.f32 %v2698, %v2841
    %v2847 = vxor.u32 %v2843, 2147483648
    %v2848 = vmul.f32 %v2847, 1.442695
    %v2849 = vpow.pop %v2848
    %v2850 = vadd.f32 %v2849, 1.0
    %v2851 = vrcp.pop %v2850
    %v2852 = vmul.f32 %v2850, %v2851
    %v2853 = vsub.f32 1.0, %v2852
    %v2854 = vmul.f32 %v2851, %v2853
    %v2855 = vadd.f32 %v2851, %v2854
    %vm2856 = vweird.f32 %v2850
    %vm2857 = vweird.f32 %v2851
    %vm2858 = vmor %vm2856, %vm2857
    %v2859 = vsel %vm2858, %v2851, %v2855
    %v2860 = vand.u32 2147483647, %v2850
    %vm2861 = vcmp.eq.f32.partialorder %v2860, 8.507059e+37
    %v2862 = vand.u32 %v2850, 2147483648
    %v2863 = vor.u32 1.1754944e-38, %v2862
    %v2864 = vsel %vm2861, %v2863, %v2859
    %v2865 = vmul.f32 1.0, %v2864
    %v2866 = vxor.u32 %v2844, 2147483648
    %v2867 = vmul.f32 %v2866, 1.442695
    %v2868 = vpow.pop %v2867
    %v2869 = vadd.f32 %v2868, 1.0
    %v2870 = vrcp.pop %v2869
    %v2871 = vmul.f32 %v2869, %v2870
    %v2872 = vsub.f32 1.0, %v2871
    %v2873 = vmul.f32 %v2870, %v2872
    %v2874 = vadd.f32 %v2870, %v2873
    %vm2875 = vweird.f32 %v2869
    %vm2876 = vweird.f32 %v2870
    %vm2877 = vmor %vm2875, %vm2876
    %v2878 = vsel %vm2877, %v2870, %v2874
    %v2879 = vand.u32 2147483647, %v2869
    %vm2880 = vcmp.eq.f32.partialorder %v2879, 8.507059e+37
    %v2881 = vand.u32 %v2869, 2147483648
    %v2882 = vor.u32 1.1754944e-38, %v2881
    %v2883 = vsel %vm2880, %v2882, %v2878
    %v2884 = vmul.f32 1.0, %v2883
    %v2885 = vtanh.pop %v2845
    %v2886 = vxor.u32 %v2846, 2147483648
    %v2887 = vmul.f32 %v2886, 1.442695
    %v2888 = vpow.pop %v2887
    %v2889 = vadd.f32 %v2888, 1.0
    %v2890 = vrcp.pop %v2889
    %v2891 = vmul.f32 %v2889, %v2890
    %v2892 = vsub.f32 1.0, %v2891
    %v2893 = vmul.f32 %v2890, %v2892
    %v2894 = vadd.f32 %v2890, %v2893
    %vm2895 = vweird.f32 %v2889
    %vm2896 = vweird.f32 %v2890
    %vm2897 = vmor %vm2895, %vm2896
    %v2898 = vsel %vm2897, %v2890, %v2894
    %v2899 = vand.u32 2147483647, %v2889
    %vm2900 = vcmp.eq.f32.partialorder %v2899, 8.507059e+37
    %v2901 = vand.u32 %v2889, 2147483648
    %v2902 = vor.u32 1.1754944e-38, %v2901
    %v2903 = vsel %vm2900, %v2902, %v2898
    %v2904 = vmul.f32 1.0, %v2903
    %v2905 = vmul.f32 %v2884, %v2694
    %v2906 = vmul.f32 %v2865, %v2885
    %v2907 = vadd.f32 %v2905, %v2906
    %v2908 = vtanh.pop %v2907
    %v2909 = vmul.f32 %v2904, %v2908
    %2910 = vst [vmem:[#allocation5] sm:$0xff] %v2907
    %2911 = vst [vmem:[#allocation4] sm:$0xff] %v2909
    %v2912 = vld [vmem:[#allocation4] sm:$0xff]
    %v2913 = vld [vmem:[#allocation5] sm:$0xff]
    %v2914 = vld [vmem:[%s864] sm:$0xff]
    %v2915 = vld [vmem:[%s864 + $0x8] sm:$0xff]
    %v2916 = vld [vmem:[%s864 + $0x10] sm:$0xff]
    %v2917 = vld [vmem:[%s864 + $0x18] sm:$0xff]
    %v2918 = vld [vmem:[#allocation15] sm:$0xff]
    %v2919 = vld [vmem:[#allocation15 + $0x8] sm:$0xff]
    %v2920 = vld [vmem:[#allocation15 + $0x10] sm:$0xff]
    %v2921 = vld [vmem:[#allocation15 + $0x18] sm:$0xff]
    %v2922 = vld [vmem:[#allocation15 + $0x20] sm:$0xff]
    %v2923 = vld [vmem:[#allocation15 + $0x28] sm:$0xff]
    %v2924 = vld [vmem:[#allocation15 + $0x30] sm:$0xff]
    %v2925 = vld [vmem:[#allocation15 + $0x38] sm:$0xff]
    %v2926 = vld [vmem:[#allocation15 + $0x40] sm:$0xff]
    %v2927 = vld [vmem:[#allocation15 + $0x48] sm:$0xff]
    %v2928 = vld [vmem:[#allocation15 + $0x50] sm:$0xff]
    %v2929 = vld [vmem:[#allocation15 + $0x58] sm:$0xff]
    %v2930 = vld [vmem:[#allocation15 + $0x60] sm:$0xff]
    %v2931 = vld [vmem:[#allocation15 + $0x68] sm:$0xff]
    %v2932 = vld [vmem:[#allocation15 + $0x70] sm:$0xff]
    %v2933 = vld [vmem:[#allocation15 + $0x78] sm:$0xff]
    %v2934 = vld [vmem:[#allocation15 + $0x80] sm:$0xff]
    %v2935 = vld [vmem:[#allocation15 + $0x88] sm:$0xff]
    %v2936 = vld [vmem:[#allocation15 + $0x90] sm:$0xff]
    %v2937 = vld [vmem:[#allocation15 + $0x98] sm:$0xff]
    %v2938 = vld [vmem:[#allocation15 + $0xa0] sm:$0xff]
    %v2939 = vld [vmem:[#allocation15 + $0xa8] sm:$0xff]
    %v2940 = vld [vmem:[#allocation15 + $0xb0] sm:$0xff]
    %v2941 = vld [vmem:[#allocation15 + $0xb8] sm:$0xff]
    %v2942 = vld [vmem:[#allocation15 + $0xc0] sm:$0xff]
    %v2943 = vld [vmem:[#allocation15 + $0xc8] sm:$0xff]
    %v2944 = vld [vmem:[#allocation15 + $0xd0] sm:$0xff]
    %v2945 = vld [vmem:[#allocation15 + $0xd8] sm:$0xff]
    %v2946 = vld [vmem:[#allocation15 + $0xe0] sm:$0xff]
    %v2947 = vld [vmem:[#allocation15 + $0xe8] sm:$0xff]
    %v2948 = vld [vmem:[#allocation15 + $0xf0] sm:$0xff]
    %v2949 = vld [vmem:[#allocation15 + $0xf8] sm:$0xff]
    %v2950 = vld [vmem:[#allocation15 + $0x100] sm:$0xff]
    %v2951 = vld [vmem:[#allocation15 + $0x108] sm:$0xff]
    %v2952 = vld [vmem:[#allocation15 + $0x110] sm:$0xff]
    %v2953 = vld [vmem:[#allocation15 + $0x118] sm:$0xff]
    %v2954 = vld [vmem:[#allocation15 + $0x120] sm:$0xff]
    %v2955 = vld [vmem:[#allocation15 + $0x128] sm:$0xff]
    %v2956 = vld [vmem:[#allocation15 + $0x130] sm:$0xff]
    %v2957 = vld [vmem:[#allocation15 + $0x138] sm:$0xff]
    %v2958 = vld [vmem:[#allocation15 + $0x140] sm:$0xff]
    %v2959 = vld [vmem:[#allocation15 + $0x148] sm:$0xff]
    %v2960 = vld [vmem:[#allocation15 + $0x150] sm:$0xff]
    %v2961 = vld [vmem:[#allocation15 + $0x158] sm:$0xff]
    %v2962 = vld [vmem:[#allocation15 + $0x160] sm:$0xff]
    %v2963 = vld [vmem:[#allocation15 + $0x168] sm:$0xff]
    %v2964 = vld [vmem:[#allocation15 + $0x170] sm:$0xff]
    %v2965 = vld [vmem:[#allocation15 + $0x178] sm:$0xff]
    %v2966 = vld [vmem:[#allocation15 + $0x180] sm:$0xff]
    %v2967 = vld [vmem:[#allocation15 + $0x188] sm:$0xff]
    %v2968 = vld [vmem:[#allocation15 + $0x190] sm:$0xff]
    %v2969 = vld [vmem:[#allocation15 + $0x198] sm:$0xff]
    %v2970 = vld [vmem:[#allocation15 + $0x1a0] sm:$0xff]
    %v2971 = vld [vmem:[#allocation15 + $0x1a8] sm:$0xff]
    %v2972 = vld [vmem:[#allocation15 + $0x1b0] sm:$0xff]
    %v2973 = vld [vmem:[#allocation15 + $0x1b8] sm:$0xff]
    %v2974 = vld [vmem:[#allocation15 + $0x1c0] sm:$0xff]
    %v2975 = vld [vmem:[#allocation15 + $0x1c8] sm:$0xff]
    %v2976 = vld [vmem:[#allocation15 + $0x1d0] sm:$0xff]
    %v2977 = vld [vmem:[#allocation15 + $0x1d8] sm:$0xff]
    %v2978 = vld [vmem:[#allocation15 + $0x1e0] sm:$0xff]
    %v2979 = vld [vmem:[#allocation15 + $0x1e8] sm:$0xff]
    %v2980 = vld [vmem:[#allocation15 + $0x1f0] sm:$0xff]
    %v2981 = vld [vmem:[#allocation15 + $0x1f8] sm:$0xff]
    %2982 = vmatpush.msra.mxu0 %v2978
    %2983 = vmatpush.msra.mxu0 %v2974
    %2984 = vmatpush.msra.mxu0 %v2970
    %2985 = vmatpush.msra.mxu0 %v2966
    %2986 = vmatpush.msra.mxu0 %v2962
    %2987 = vmatpush.msra.mxu0 %v2958
    %2988 = vmatpush.msra.mxu0 %v2954
    %2989 = vmatpush.msra.mxu0 %v2950
    %2990 = vmatpush.msra.mxu0 %v2946
    %2991 = vmatpush.msra.mxu0 %v2942
    %2992 = vmatpush.msra.mxu0 %v2938
    %2993 = vmatpush.msra.mxu0 %v2934
    %2994 = vmatpush.msra.mxu0 %v2930
    %2995 = vmatpush.msra.mxu0 %v2926
    %2996 = vmatpush.msra.mxu0 %v2922
    %2997 = vmatpush.msra.mxu0 %v2918
    %2998 = vmatmul.f32.gmra.mxu0 %v2912
    %v2999 = vpop.f32.mrf.mxu0
    %v3000 = vadd.f32 0.0, %v2999
    %3001 = vdwg.mxu0
    %3002 = vmatpush.msra.mxu0 %v2979
    %3003 = vmatpush.msra.mxu0 %v2975
    %3004 = vmatpush.msra.mxu0 %v2971
    %3005 = vmatpush.msra.mxu0 %v2967
    %3006 = vmatpush.msra.mxu0 %v2963
    %3007 = vmatpush.msra.mxu0 %v2959
    %3008 = vmatpush.msra.mxu0 %v2955
    %3009 = vmatpush.msra.mxu0 %v2951
    %3010 = vmatpush.msra.mxu0 %v2947
    %3011 = vmatpush.msra.mxu0 %v2943
    %3012 = vmatpush.msra.mxu0 %v2939
    %3013 = vmatpush.msra.mxu0 %v2935
    %3014 = vmatpush.msra.mxu0 %v2931
    %3015 = vmatpush.msra.mxu0 %v2927
    %3016 = vmatpush.msra.mxu0 %v2923
    %3017 = vmatpush.msra.mxu0 %v2919
    %3018 = vmatmul.f32.gmra.mxu0 %v2912
    %v3019 = vpop.f32.mrf.mxu0
    %v3020 = vadd.f32 0.0, %v3019
    %3021 = vdwg.mxu0
    %3022 = vmatpush.msra.mxu0 %v2980
    %3023 = vmatpush.msra.mxu0 %v2976
    %3024 = vmatpush.msra.mxu0 %v2972
    %3025 = vmatpush.msra.mxu0 %v2968
    %3026 = vmatpush.msra.mxu0 %v2964
    %3027 = vmatpush.msra.mxu0 %v2960
    %3028 = vmatpush.msra.mxu0 %v2956
    %3029 = vmatpush.msra.mxu0 %v2952
    %3030 = vmatpush.msra.mxu0 %v2948
    %3031 = vmatpush.msra.mxu0 %v2944
    %3032 = vmatpush.msra.mxu0 %v2940
    %3033 = vmatpush.msra.mxu0 %v2936
    %3034 = vmatpush.msra.mxu0 %v2932
    %3035 = vmatpush.msra.mxu0 %v2928
    %3036 = vmatpush.msra.mxu0 %v2924
    %3037 = vmatpush.msra.mxu0 %v2920
    %3038 = vmatmul.f32.gmra.mxu0 %v2912
    %v3039 = vpop.f32.mrf.mxu0
    %v3040 = vadd.f32 0.0, %v3039
    %3041 = vdwg.mxu0
    %3042 = vmatpush.msra.mxu0 %v2981
    %3043 = vmatpush.msra.mxu0 %v2977
    %3044 = vmatpush.msra.mxu0 %v2973
    %3045 = vmatpush.msra.mxu0 %v2969
    %3046 = vmatpush.msra.mxu0 %v2965
    %3047 = vmatpush.msra.mxu0 %v2961
    %3048 = vmatpush.msra.mxu0 %v2957
    %3049 = vmatpush.msra.mxu0 %v2953
    %3050 = vmatpush.msra.mxu0 %v2949
    %3051 = vmatpush.msra.mxu0 %v2945
    %3052 = vmatpush.msra.mxu0 %v2941
    %3053 = vmatpush.msra.mxu0 %v2937
    %3054 = vmatpush.msra.mxu0 %v2933
    %3055 = vmatpush.msra.mxu0 %v2929
    %3056 = vmatpush.msra.mxu0 %v2925
    %3057 = vmatpush.msra.mxu0 %v2921
    %3058 = vmatmul.f32.gmra.mxu0 %v2912
    %v3059 = vpop.f32.mrf.mxu0
    %v3060 = vadd.f32 0.0, %v3059
    %3061 = vdwg.mxu0
    %v3062 = vadd.f32 %v2914, %v3000
    %v3063 = vadd.f32 %v2915, %v3020
    %v3064 = vadd.f32 %v2916, %v3040
    %v3065 = vadd.f32 %v2917, %v3060
    %v3066 = vxor.u32 %v3062, 2147483648
    %v3067 = vmul.f32 %v3066, 1.442695
    %v3068 = vpow.pop %v3067
    %v3069 = vadd.f32 %v3068, 1.0
    %v3070 = vrcp.pop %v3069
    %v3071 = vmul.f32 %v3069, %v3070
    %v3072 = vsub.f32 1.0, %v3071
    %v3073 = vmul.f32 %v3070, %v3072
    %v3074 = vadd.f32 %v3070, %v3073
    %vm3075 = vweird.f32 %v3069
    %vm3076 = vweird.f32 %v3070
    %vm3077 = vmor %vm3075, %vm3076
    %v3078 = vsel %vm3077, %v3070, %v3074
    %v3079 = vand.u32 2147483647, %v3069
    %vm3080 = vcmp.eq.f32.partialorder %v3079, 8.507059e+37
    %v3081 = vand.u32 %v3069, 2147483648
    %v3082 = vor.u32 1.1754944e-38, %v3081
    %v3083 = vsel %vm3080, %v3082, %v3078
    %v3084 = vmul.f32 1.0, %v3083
    %v3085 = vxor.u32 %v3063, 2147483648
    %v3086 = vmul.f32 %v3085, 1.442695
    %v3087 = vpow.pop %v3086
    %v3088 = vadd.f32 %v3087, 1.0
    %v3089 = vrcp.pop %v3088
    %v3090 = vmul.f32 %v3088, %v3089
    %v3091 = vsub.f32 1.0, %v3090
    %v3092 = vmul.f32 %v3089, %v3091
    %v3093 = vadd.f32 %v3089, %v3092
    %vm3094 = vweird.f32 %v3088
    %vm3095 = vweird.f32 %v3089
    %vm3096 = vmor %vm3094, %vm3095
    %v3097 = vsel %vm3096, %v3089, %v3093
    %v3098 = vand.u32 2147483647, %v3088
    %vm3099 = vcmp.eq.f32.partialorder %v3098, 8.507059e+37
    %v3100 = vand.u32 %v3088, 2147483648
    %v3101 = vor.u32 1.1754944e-38, %v3100
    %v3102 = vsel %vm3099, %v3101, %v3097
    %v3103 = vmul.f32 1.0, %v3102
    %v3104 = vtanh.pop %v3064
    %v3105 = vxor.u32 %v3065, 2147483648
    %v3106 = vmul.f32 %v3105, 1.442695
    %v3107 = vpow.pop %v3106
    %v3108 = vadd.f32 %v3107, 1.0
    %v3109 = vrcp.pop %v3108
    %v3110 = vmul.f32 %v3108, %v3109
    %v3111 = vsub.f32 1.0, %v3110
    %v3112 = vmul.f32 %v3109, %v3111
    %v3113 = vadd.f32 %v3109, %v3112
    %vm3114 = vweird.f32 %v3108
    %vm3115 = vweird.f32 %v3109
    %vm3116 = vmor %vm3114, %vm3115
    %v3117 = vsel %vm3116, %v3109, %v3113
    %v3118 = vand.u32 2147483647, %v3108
    %vm3119 = vcmp.eq.f32.partialorder %v3118, 8.507059e+37
    %v3120 = vand.u32 %v3108, 2147483648
    %v3121 = vor.u32 1.1754944e-38, %v3120
    %v3122 = vsel %vm3119, %v3121, %v3117
    %v3123 = vmul.f32 1.0, %v3122
    %v3124 = vmul.f32 %v3103, %v2913
    %v3125 = vmul.f32 %v3084, %v3104
    %v3126 = vadd.f32 %v3124, %v3125
    %v3127 = vtanh.pop %v3126
    %v3128 = vmul.f32 %v3123, %v3127
    %3129 = vst [vmem:[#allocation5] sm:$0xff] %v3126
    %3130 = vst [vmem:[#allocation4] sm:$0xff] %v3128
    %v3131 = vld [vmem:[#allocation4] sm:$0xff]
    %v3132 = vld [vmem:[#allocation5] sm:$0xff]
    %v3133 = vld [vmem:[%s1086] sm:$0xff]
    %v3134 = vld [vmem:[%s1086 + $0x8] sm:$0xff]
    %v3135 = vld [vmem:[%s1086 + $0x10] sm:$0xff]
    %v3136 = vld [vmem:[%s1086 + $0x18] sm:$0xff]
    %v3137 = vld [vmem:[#allocation15] sm:$0xff]
    %v3138 = vld [vmem:[#allocation15 + $0x8] sm:$0xff]
    %v3139 = vld [vmem:[#allocation15 + $0x10] sm:$0xff]
    %v3140 = vld [vmem:[#allocation15 + $0x18] sm:$0xff]
    %v3141 = vld [vmem:[#allocation15 + $0x20] sm:$0xff]
    %v3142 = vld [vmem:[#allocation15 + $0x28] sm:$0xff]
    %v3143 = vld [vmem:[#allocation15 + $0x30] sm:$0xff]
    %v3144 = vld [vmem:[#allocation15 + $0x38] sm:$0xff]
    %v3145 = vld [vmem:[#allocation15 + $0x40] sm:$0xff]
    %v3146 = vld [vmem:[#allocation15 + $0x48] sm:$0xff]
    %v3147 = vld [vmem:[#allocation15 + $0x50] sm:$0xff]
    %v3148 = vld [vmem:[#allocation15 + $0x58] sm:$0xff]
    %v3149 = vld [vmem:[#allocation15 + $0x60] sm:$0xff]
    %v3150 = vld [vmem:[#allocation15 + $0x68] sm:$0xff]
    %v3151 = vld [vmem:[#allocation15 + $0x70] sm:$0xff]
    %v3152 = vld [vmem:[#allocation15 + $0x78] sm:$0xff]
    %v3153 = vld [vmem:[#allocation15 + $0x80] sm:$0xff]
    %v3154 = vld [vmem:[#allocation15 + $0x88] sm:$0xff]
    %v3155 = vld [vmem:[#allocation15 + $0x90] sm:$0xff]
    %v3156 = vld [vmem:[#allocation15 + $0x98] sm:$0xff]
    %v3157 = vld [vmem:[#allocation15 + $0xa0] sm:$0xff]
    %v3158 = vld [vmem:[#allocation15 + $0xa8] sm:$0xff]
    %v3159 = vld [vmem:[#allocation15 + $0xb0] sm:$0xff]
    %v3160 = vld [vmem:[#allocation15 + $0xb8] sm:$0xff]
    %v3161 = vld [vmem:[#allocation15 + $0xc0] sm:$0xff]
    %v3162 = vld [vmem:[#allocation15 + $0xc8] sm:$0xff]
    %v3163 = vld [vmem:[#allocation15 + $0xd0] sm:$0xff]
    %v3164 = vld [vmem:[#allocation15 + $0xd8] sm:$0xff]
    %v3165 = vld [vmem:[#allocation15 + $0xe0] sm:$0xff]
    %v3166 = vld [vmem:[#allocation15 + $0xe8] sm:$0xff]
    %v3167 = vld [vmem:[#allocation15 + $0xf0] sm:$0xff]
    %v3168 = vld [vmem:[#allocation15 + $0xf8] sm:$0xff]
    %v3169 = vld [vmem:[#allocation15 + $0x100] sm:$0xff]
    %v3170 = vld [vmem:[#allocation15 + $0x108] sm:$0xff]
    %v3171 = vld [vmem:[#allocation15 + $0x110] sm:$0xff]
    %v3172 = vld [vmem:[#allocation15 + $0x118] sm:$0xff]
    %v3173 = vld [vmem:[#allocation15 + $0x120] sm:$0xff]
    %v3174 = vld [vmem:[#allocation15 + $0x128] sm:$0xff]
    %v3175 = vld [vmem:[#allocation15 + $0x130] sm:$0xff]
    %v3176 = vld [vmem:[#allocation15 + $0x138] sm:$0xff]
    %v3177 = vld [vmem:[#allocation15 + $0x140] sm:$0xff]
    %v3178 = vld [vmem:[#allocation15 + $0x148] sm:$0xff]
    %v3179 = vld [vmem:[#allocation15 + $0x150] sm:$0xff]
    %v3180 = vld [vmem:[#allocation15 + $0x158] sm:$0xff]
    %v3181 = vld [vmem:[#allocation15 + $0x160] sm:$0xff]
    %v3182 = vld [vmem:[#allocation15 + $0x168] sm:$0xff]
    %v3183 = vld [vmem:[#allocation15 + $0x170] sm:$0xff]
    %v3184 = vld [vmem:[#allocation15 + $0x178] sm:$0xff]
    %v3185 = vld [vmem:[#allocation15 + $0x180] sm:$0xff]
    %v3186 = vld [vmem:[#allocation15 + $0x188] sm:$0xff]
    %v3187 = vld [vmem:[#allocation15 + $0x190] sm:$0xff]
    %v3188 = vld [vmem:[#allocation15 + $0x198] sm:$0xff]
    %v3189 = vld [vmem:[#allocation15 + $0x1a0] sm:$0xff]
    %v3190 = vld [vmem:[#allocation15 + $0x1a8] sm:$0xff]
    %v3191 = vld [vmem:[#allocation15 + $0x1b0] sm:$0xff]
    %v3192 = vld [vmem:[#allocation15 + $0x1b8] sm:$0xff]
    %v3193 = vld [vmem:[#allocation15 + $0x1c0] sm:$0xff]
    %v3194 = vld [vmem:[#allocation15 + $0x1c8] sm:$0xff]
    %v3195 = vld [vmem:[#allocation15 + $0x1d0] sm:$0xff]
    %v3196 = vld [vmem:[#allocation15 + $0x1d8] sm:$0xff]
    %v3197 = vld [vmem:[#allocation15 + $0x1e0] sm:$0xff]
    %v3198 = vld [vmem:[#allocation15 + $0x1e8] sm:$0xff]
    %v3199 = vld [vmem:[#allocation15 + $0x1f0] sm:$0xff]
    %v3200 = vld [vmem:[#allocation15 + $0x1f8] sm:$0xff]
    %3201 = vmatpush.msra.mxu0 %v3197
    %3202 = vmatpush.msra.mxu0 %v3193
    %3203 = vmatpush.msra.mxu0 %v3189
    %3204 = vmatpush.msra.mxu0 %v3185
    %3205 = vmatpush.msra.mxu0 %v3181
    %3206 = vmatpush.msra.mxu0 %v3177
    %3207 = vmatpush.msra.mxu0 %v3173
    %3208 = vmatpush.msra.mxu0 %v3169
    %3209 = vmatpush.msra.mxu0 %v3165
    %3210 = vmatpush.msra.mxu0 %v3161
    %3211 = vmatpush.msra.mxu0 %v3157
    %3212 = vmatpush.msra.mxu0 %v3153
    %3213 = vmatpush.msra.mxu0 %v3149
    %3214 = vmatpush.msra.mxu0 %v3145
    %3215 = vmatpush.msra.mxu0 %v3141
    %3216 = vmatpush.msra.mxu0 %v3137
    %3217 = vmatmul.f32.gmra.mxu0 %v3131
    %v3218 = vpop.f32.mrf.mxu0
    %v3219 = vadd.f32 0.0, %v3218
    %3220 = vdwg.mxu0
    %3221 = vmatpush.msra.mxu0 %v3198
    %3222 = vmatpush.msra.mxu0 %v3194
    %3223 = vmatpush.msra.mxu0 %v3190
    %3224 = vmatpush.msra.mxu0 %v3186
    %3225 = vmatpush.msra.mxu0 %v3182
    %3226 = vmatpush.msra.mxu0 %v3178
    %3227 = vmatpush.msra.mxu0 %v3174
    %3228 = vmatpush.msra.mxu0 %v3170
    %3229 = vmatpush.msra.mxu0 %v3166
    %3230 = vmatpush.msra.mxu0 %v3162
    %3231 = vmatpush.msra.mxu0 %v3158
    %3232 = vmatpush.msra.mxu0 %v3154
    %3233 = vmatpush.msra.mxu0 %v3150
    %3234 = vmatpush.msra.mxu0 %v3146
    %3235 = vmatpush.msra.mxu0 %v3142
    %3236 = vmatpush.msra.mxu0 %v3138
    %3237 = vmatmul.f32.gmra.mxu0 %v3131
    %v3238 = vpop.f32.mrf.mxu0
    %v3239 = vadd.f32 0.0, %v3238
    %3240 = vdwg.mxu0
    %3241 = vmatpush.msra.mxu0 %v3199
    %3242 = vmatpush.msra.mxu0 %v3195
    %3243 = vmatpush.msra.mxu0 %v3191
    %3244 = vmatpush.msra.mxu0 %v3187
    %3245 = vmatpush.msra.mxu0 %v3183
    %3246 = vmatpush.msra.mxu0 %v3179
    %3247 = vmatpush.msra.mxu0 %v3175
    %3248 = vmatpush.msra.mxu0 %v3171
    %3249 = vmatpush.msra.mxu0 %v3167
    %3250 = vmatpush.msra.mxu0 %v3163
    %3251 = vmatpush.msra.mxu0 %v3159
    %3252 = vmatpush.msra.mxu0 %v3155
    %3253 = vmatpush.msra.mxu0 %v3151
    %3254 = vmatpush.msra.mxu0 %v3147
    %3255 = vmatpush.msra.mxu0 %v3143
    %3256 = vmatpush.msra.mxu0 %v3139
    %3257 = vmatmul.f32.gmra.mxu0 %v3131
    %v3258 = vpop.f32.mrf.mxu0
    %v3259 = vadd.f32 0.0, %v3258
    %3260 = vdwg.mxu0
    %3261 = vmatpush.msra.mxu0 %v3200
    %3262 = vmatpush.msra.mxu0 %v3196
    %3263 = vmatpush.msra.mxu0 %v3192
    %3264 = vmatpush.msra.mxu0 %v3188
    %3265 = vmatpush.msra.mxu0 %v3184
    %3266 = vmatpush.msra.mxu0 %v3180
    %3267 = vmatpush.msra.mxu0 %v3176
    %3268 = vmatpush.msra.mxu0 %v3172
    %3269 = vmatpush.msra.mxu0 %v3168
    %3270 = vmatpush.msra.mxu0 %v3164
    %3271 = vmatpush.msra.mxu0 %v3160
    %3272 = vmatpush.msra.mxu0 %v3156
    %3273 = vmatpush.msra.mxu0 %v3152
    %3274 = vmatpush.msra.mxu0 %v3148
    %3275 = vmatpush.msra.mxu0 %v3144
    %3276 = vmatpush.msra.mxu0 %v3140
    %3277 = vmatmul.f32.gmra.mxu0 %v3131
    %v3278 = vpop.f32.mrf.mxu0
    %v3279 = vadd.f32 0.0, %v3278
    %3280 = vdwg.mxu0
    %v3281 = vadd.f32 %v3133, %v3219
    %v3282 = vadd.f32 %v3134, %v3239
    %v3283 = vadd.f32 %v3135, %v3259
    %v3284 = vadd.f32 %v3136, %v3279
    %v3285 = vxor.u32 %v3281, 2147483648
    %v3286 = vmul.f32 %v3285, 1.442695
    %v3287 = vpow.pop %v3286
    %v3288 = vadd.f32 %v3287, 1.0
    %v3289 = vrcp.pop %v3288
    %v3290 = vmul.f32 %v3288, %v3289
    %v3291 = vsub.f32 1.0, %v3290
    %v3292 = vmul.f32 %v3289, %v3291
    %v3293 = vadd.f32 %v3289, %v3292
    %vm3294 = vweird.f32 %v3288
    %vm3295 = vweird.f32 %v3289
    %vm3296 = vmor %vm3294, %vm3295
    %v3297 = vsel %vm3296, %v3289, %v3293
    %v3298 = vand.u32 2147483647, %v3288
    %vm3299 = vcmp.eq.f32.partialorder %v3298, 8.507059e+37
    %v3300 = vand.u32 %v3288, 2147483648
    %v3301 = vor.u32 1.1754944e-38, %v3300
    %v3302 = vsel %vm3299, %v3301, %v3297
    %v3303 = vmul.f32 1.0, %v3302
    %v3304 = vxor.u32 %v3282, 2147483648
    %v3305 = vmul.f32 %v3304, 1.442695
    %v3306 = vpow.pop %v3305
    %v3307 = vadd.f32 %v3306, 1.0
    %v3308 = vrcp.pop %v3307
    %v3309 = vmul.f32 %v3307, %v3308
    %v3310 = vsub.f32 1.0, %v3309
    %v3311 = vmul.f32 %v3308, %v3310
    %v3312 = vadd.f32 %v3308, %v3311
    %vm3313 = vweird.f32 %v3307
    %vm3314 = vweird.f32 %v3308
    %vm3315 = vmor %vm3313, %vm3314
    %v3316 = vsel %vm3315, %v3308, %v3312
    %v3317 = vand.u32 2147483647, %v3307
    %vm3318 = vcmp.eq.f32.partialorder %v3317, 8.507059e+37
    %v3319 = vand.u32 %v3307, 2147483648
    %v3320 = vor.u32 1.1754944e-38, %v3319
    %v3321 = vsel %vm3318, %v3320, %v3316
    %v3322 = vmul.f32 1.0, %v3321
    %v3323 = vtanh.pop %v3283
    %v3324 = vxor.u32 %v3284, 2147483648
    %v3325 = vmul.f32 %v3324, 1.442695
    %v3326 = vpow.pop %v3325
    %v3327 = vadd.f32 %v3326, 1.0
    %v3328 = vrcp.pop %v3327
    %v3329 = vmul.f32 %v3327, %v3328
    %v3330 = vsub.f32 1.0, %v3329
    %v3331 = vmul.f32 %v3328, %v3330
    %v3332 = vadd.f32 %v3328, %v3331
    %vm3333 = vweird.f32 %v3327
    %vm3334 = vweird.f32 %v3328
    %vm3335 = vmor %vm3333, %vm3334
    %v3336 = vsel %vm3335, %v3328, %v3332
    %v3337 = vand.u32 2147483647, %v3327
    %vm3338 = vcmp.eq.f32.partialorder %v3337, 8.507059e+37
    %v3339 = vand.u32 %v3327, 2147483648
    %v3340 = vor.u32 1.1754944e-38, %v3339
    %v3341 = vsel %vm3338, %v3340, %v3336
    %v3342 = vmul.f32 1.0, %v3341
    %v3343 = vmul.f32 %v3322, %v3132
    %v3344 = vmul.f32 %v3303, %v3323
    %v3345 = vadd.f32 %v3343, %v3344
    %v3346 = vtanh.pop %v3345
    %v3347 = vmul.f32 %v3342, %v3346
    %3348 = vst [vmem:[#allocation5] sm:$0xff] %v3345
    %3349 = vst [vmem:[#allocation4] sm:$0xff] %v3347
    %v3350 = vld [vmem:[#allocation4] sm:$0xff]
    %v3351 = vld [vmem:[#allocation5] sm:$0xff]
    %v3352 = vld [vmem:[%s1308] sm:$0xff]
    %v3353 = vld [vmem:[%s1308 + $0x8] sm:$0xff]
    %v3354 = vld [vmem:[%s1308 + $0x10] sm:$0xff]
    %v3355 = vld [vmem:[%s1308 + $0x18] sm:$0xff]
    %v3356 = vld [vmem:[#allocation15] sm:$0xff]
    %v3357 = vld [vmem:[#allocation15 + $0x8] sm:$0xff]
    %v3358 = vld [vmem:[#allocation15 + $0x10] sm:$0xff]
    %v3359 = vld [vmem:[#allocation15 + $0x18] sm:$0xff]
    %v3360 = vld [vmem:[#allocation15 + $0x20] sm:$0xff]
    %v3361 = vld [vmem:[#allocation15 + $0x28] sm:$0xff]
    %v3362 = vld [vmem:[#allocation15 + $0x30] sm:$0xff]
    %v3363 = vld [vmem:[#allocation15 + $0x38] sm:$0xff]
    %v3364 = vld [vmem:[#allocation15 + $0x40] sm:$0xff]
    %v3365 = vld [vmem:[#allocation15 + $0x48] sm:$0xff]
    %v3366 = vld [vmem:[#allocation15 + $0x50] sm:$0xff]
    %v3367 = vld [vmem:[#allocation15 + $0x58] sm:$0xff]
    %v3368 = vld [vmem:[#allocation15 + $0x60] sm:$0xff]
    %v3369 = vld [vmem:[#allocation15 + $0x68] sm:$0xff]
    %v3370 = vld [vmem:[#allocation15 + $0x70] sm:$0xff]
    %v3371 = vld [vmem:[#allocation15 + $0x78] sm:$0xff]
    %v3372 = vld [vmem:[#allocation15 + $0x80] sm:$0xff]
    %v3373 = vld [vmem:[#allocation15 + $0x88] sm:$0xff]
    %v3374 = vld [vmem:[#allocation15 + $0x90] sm:$0xff]
    %v3375 = vld [vmem:[#allocation15 + $0x98] sm:$0xff]
    %v3376 = vld [vmem:[#allocation15 + $0xa0] sm:$0xff]
    %v3377 = vld [vmem:[#allocation15 + $0xa8] sm:$0xff]
    %v3378 = vld [vmem:[#allocation15 + $0xb0] sm:$0xff]
    %v3379 = vld [vmem:[#allocation15 + $0xb8] sm:$0xff]
    %v3380 = vld [vmem:[#allocation15 + $0xc0] sm:$0xff]
    %v3381 = vld [vmem:[#allocation15 + $0xc8] sm:$0xff]
    %v3382 = vld [vmem:[#allocation15 + $0xd0] sm:$0xff]
    %v3383 = vld [vmem:[#allocation15 + $0xd8] sm:$0xff]
    %v3384 = vld [vmem:[#allocation15 + $0xe0] sm:$0xff]
    %v3385 = vld [vmem:[#allocation15 + $0xe8] sm:$0xff]
    %v3386 = vld [vmem:[#allocation15 + $0xf0] sm:$0xff]
    %v3387 = vld [vmem:[#allocation15 + $0xf8] sm:$0xff]
    %v3388 = vld [vmem:[#allocation15 + $0x100] sm:$0xff]
    %v3389 = vld [vmem:[#allocation15 + $0x108] sm:$0xff]
    %v3390 = vld [vmem:[#allocation15 + $0x110] sm:$0xff]
    %v3391 = vld [vmem:[#allocation15 + $0x118] sm:$0xff]
    %v3392 = vld [vmem:[#allocation15 + $0x120] sm:$0xff]
    %v3393 = vld [vmem:[#allocation15 + $0x128] sm:$0xff]
    %v3394 = vld [vmem:[#allocation15 + $0x130] sm:$0xff]
    %v3395 = vld [vmem:[#allocation15 + $0x138] sm:$0xff]
    %v3396 = vld [vmem:[#allocation15 + $0x140] sm:$0xff]
    %v3397 = vld [vmem:[#allocation15 + $0x148] sm:$0xff]
    %v3398 = vld [vmem:[#allocation15 + $0x150] sm:$0xff]
    %v3399 = vld [vmem:[#allocation15 + $0x158] sm:$0xff]
    %v3400 = vld [vmem:[#allocation15 + $0x160] sm:$0xff]
    %v3401 = vld [vmem:[#allocation15 + $0x168] sm:$0xff]
    %v3402 = vld [vmem:[#allocation15 + $0x170] sm:$0xff]
    %v3403 = vld [vmem:[#allocation15 + $0x178] sm:$0xff]
    %v3404 = vld [vmem:[#allocation15 + $0x180] sm:$0xff]
    %v3405 = vld [vmem:[#allocation15 + $0x188] sm:$0xff]
    %v3406 = vld [vmem:[#allocation15 + $0x190] sm:$0xff]
    %v3407 = vld [vmem:[#allocation15 + $0x198] sm:$0xff]
    %v3408 = vld [vmem:[#allocation15 + $0x1a0] sm:$0xff]
    %v3409 = vld [vmem:[#allocation15 + $0x1a8] sm:$0xff]
    %v3410 = vld [vmem:[#allocation15 + $0x1b0] sm:$0xff]
    %v3411 = vld [vmem:[#allocation15 + $0x1b8] sm:$0xff]
    %v3412 = vld [vmem:[#allocation15 + $0x1c0] sm:$0xff]
    %v3413 = vld [vmem:[#allocation15 + $0x1c8] sm:$0xff]
    %v3414 = vld [vmem:[#allocation15 + $0x1d0] sm:$0xff]
    %v3415 = vld [vmem:[#allocation15 + $0x1d8] sm:$0xff]
    %v3416 = vld [vmem:[#allocation15 + $0x1e0] sm:$0xff]
    %v3417 = vld [vmem:[#allocation15 + $0x1e8] sm:$0xff]
    %v3418 = vld [vmem:[#allocation15 + $0x1f0] sm:$0xff]
    %v3419 = vld [vmem:[#allocation15 + $0x1f8] sm:$0xff]
    %3420 = vmatpush.msra.mxu0 %v3416
    %3421 = vmatpush.msra.mxu0 %v3412
    %3422 = vmatpush.msra.mxu0 %v3408
    %3423 = vmatpush.msra.mxu0 %v3404
    %3424 = vmatpush.msra.mxu0 %v3400
    %3425 = vmatpush.msra.mxu0 %v3396
    %3426 = vmatpush.msra.mxu0 %v3392
    %3427 = vmatpush.msra.mxu0 %v3388
    %3428 = vmatpush.msra.mxu0 %v3384
    %3429 = vmatpush.msra.mxu0 %v3380
    %3430 = vmatpush.msra.mxu0 %v3376
    %3431 = vmatpush.msra.mxu0 %v3372
    %3432 = vmatpush.msra.mxu0 %v3368
    %3433 = vmatpush.msra.mxu0 %v3364
    %3434 = vmatpush.msra.mxu0 %v3360
    %3435 = vmatpush.msra.mxu0 %v3356
    %3436 = vmatmul.f32.gmra.mxu0 %v3350
    %v3437 = vpop.f32.mrf.mxu0
    %v3438 = vadd.f32 0.0, %v3437
    %3439 = vdwg.mxu0
    %3440 = vmatpush.msra.mxu0 %v3417
    %3441 = vmatpush.msra.mxu0 %v3413
    %3442 = vmatpush.msra.mxu0 %v3409
    %3443 = vmatpush.msra.mxu0 %v3405
    %3444 = vmatpush.msra.mxu0 %v3401
    %3445 = vmatpush.msra.mxu0 %v3397
    %3446 = vmatpush.msra.mxu0 %v3393
    %3447 = vmatpush.msra.mxu0 %v3389
    %3448 = vmatpush.msra.mxu0 %v3385
    %3449 = vmatpush.msra.mxu0 %v3381
    %3450 = vmatpush.msra.mxu0 %v3377
    %3451 = vmatpush.msra.mxu0 %v3373
    %3452 = vmatpush.msra.mxu0 %v3369
    %3453 = vmatpush.msra.mxu0 %v3365
    %3454 = vmatpush.msra.mxu0 %v3361
    %3455 = vmatpush.msra.mxu0 %v3357
    %3456 = vmatmul.f32.gmra.mxu0 %v3350
    %v3457 = vpop.f32.mrf.mxu0
    %v3458 = vadd.f32 0.0, %v3457
    %3459 = vdwg.mxu0
    %3460 = vmatpush.msra.mxu0 %v3418
    %3461 = vmatpush.msra.mxu0 %v3414
    %3462 = vmatpush.msra.mxu0 %v3410
    %3463 = vmatpush.msra.mxu0 %v3406
    %3464 = vmatpush.msra.mxu0 %v3402
    %3465 = vmatpush.msra.mxu0 %v3398
    %3466 = vmatpush.msra.mxu0 %v3394
    %3467 = vmatpush.msra.mxu0 %v3390
    %3468 = vmatpush.msra.mxu0 %v3386
    %3469 = vmatpush.msra.mxu0 %v3382
    %3470 = vmatpush.msra.mxu0 %v3378
    %3471 = vmatpush.msra.mxu0 %v3374
    %3472 = vmatpush.msra.mxu0 %v3370
    %3473 = vmatpush.msra.mxu0 %v3366
    %3474 = vmatpush.msra.mxu0 %v3362
    %3475 = vmatpush.msra.mxu0 %v3358
    %3476 = vmatmul.f32.gmra.mxu0 %v3350
    %v3477 = vpop.f32.mrf.mxu0
    %v3478 = vadd.f32 0.0, %v3477
    %3479 = vdwg.mxu0
    %3480 = vmatpush.msra.mxu0 %v3419
    %3481 = vmatpush.msra.mxu0 %v3415
    %3482 = vmatpush.msra.mxu0 %v3411
    %3483 = vmatpush.msra.mxu0 %v3407
    %3484 = vmatpush.msra.mxu0 %v3403
    %3485 = vmatpush.msra.mxu0 %v3399
    %3486 = vmatpush.msra.mxu0 %v3395
    %3487 = vmatpush.msra.mxu0 %v3391
    %3488 = vmatpush.msra.mxu0 %v3387
    %3489 = vmatpush.msra.mxu0 %v3383
    %3490 = vmatpush.msra.mxu0 %v3379
    %3491 = vmatpush.msra.mxu0 %v3375
    %3492 = vmatpush.msra.mxu0 %v3371
    %3493 = vmatpush.msra.mxu0 %v3367
    %3494 = vmatpush.msra.mxu0 %v3363
    %3495 = vmatpush.msra.mxu0 %v3359
    %3496 = vmatmul.f32.gmra.mxu0 %v3350
    %v3497 = vpop.f32.mrf.mxu0
    %v3498 = vadd.f32 0.0, %v3497
    %3499 = vdwg.mxu0
    %v3500 = vadd.f32 %v3352, %v3438
    %v3501 = vadd.f32 %v3353, %v3458
    %v3502 = vadd.f32 %v3354, %v3478
    %v3503 = vadd.f32 %v3355, %v3498
    %v3504 = vxor.u32 %v3500, 2147483648
    %v3505 = vmul.f32 %v3504, 1.442695
    %v3506 = vpow.pop %v3505
    %v3507 = vadd.f32 %v3506, 1.0
    %v3508 = vrcp.pop %v3507
    %v3509 = vmul.f32 %v3507, %v3508
    %v3510 = vsub.f32 1.0, %v3509
    %v3511 = vmul.f32 %v3508, %v3510
    %v3512 = vadd.f32 %v3508, %v3511
    %vm3513 = vweird.f32 %v3507
    %vm3514 = vweird.f32 %v3508
    %vm3515 = vmor %vm3513, %vm3514
    %v3516 = vsel %vm3515, %v3508, %v3512
    %v3517 = vand.u32 2147483647, %v3507
    %vm3518 = vcmp.eq.f32.partialorder %v3517, 8.507059e+37
    %v3519 = vand.u32 %v3507, 2147483648
    %v3520 = vor.u32 1.1754944e-38, %v3519
    %v3521 = vsel %vm3518, %v3520, %v3516
    %v3522 = vmul.f32 1.0, %v3521
    %v3523 = vxor.u32 %v3501, 2147483648
    %v3524 = vmul.f32 %v3523, 1.442695
    %v3525 = vpow.pop %v3524
    %v3526 = vadd.f32 %v3525, 1.0
    %v3527 = vrcp.pop %v3526
    %v3528 = vmul.f32 %v3526, %v3527
    %v3529 = vsub.f32 1.0, %v3528
    %v3530 = vmul.f32 %v3527, %v3529
    %v3531 = vadd.f32 %v3527, %v3530
    %vm3532 = vweird.f32 %v3526
    %vm3533 = vweird.f32 %v3527
    %vm3534 = vmor %vm3532, %vm3533
    %v3535 = vsel %vm3534, %v3527, %v3531
    %v3536 = vand.u32 2147483647, %v3526
    %vm3537 = vcmp.eq.f32.partialorder %v3536, 8.507059e+37
    %v3538 = vand.u32 %v3526, 2147483648
    %v3539 = vor.u32 1.1754944e-38, %v3538
    %v3540 = vsel %vm3537, %v3539, %v3535
    %v3541 = vmul.f32 1.0, %v3540
    %v3542 = vtanh.pop %v3502
    %v3543 = vxor.u32 %v3503, 2147483648
    %v3544 = vmul.f32 %v3543, 1.442695
    %v3545 = vpow.pop %v3544
    %v3546 = vadd.f32 %v3545, 1.0
    %v3547 = vrcp.pop %v3546
    %v3548 = vmul.f32 %v3546, %v3547
    %v3549 = vsub.f32 1.0, %v3548
    %v3550 = vmul.f32 %v3547, %v3549
    %v3551 = vadd.f32 %v3547, %v3550
    %vm3552 = vweird.f32 %v3546
    %vm3553 = vweird.f32 %v3547
    %vm3554 = vmor %vm3552, %vm3553
    %v3555 = vsel %vm3554, %v3547, %v3551
    %v3556 = vand.u32 2147483647, %v3546
    %vm3557 = vcmp.eq.f32.partialorder %v3556, 8.507059e+37
    %v3558 = vand.u32 %v3546, 2147483648
    %v3559 = vor.u32 1.1754944e-38, %v3558
    %v3560 = vsel %vm3557, %v3559, %v3555
    %v3561 = vmul.f32 1.0, %v3560
    %v3562 = vmul.f32 %v3541, %v3351
    %v3563 = vmul.f32 %v3522, %v3542
    %v3564 = vadd.f32 %v3562, %v3563
    %v3565 = vtanh.pop %v3564
    %v3566 = vmul.f32 %v3561, %v3565
    %3567 = vst [vmem:[#allocation5] sm:$0xff] %v3564
    %3568 = vst [vmem:[#allocation4] sm:$0xff] %v3566
    %v3569 = vld [vmem:[#allocation4] sm:$0xff]
    %v3570 = vld [vmem:[#allocation5] sm:$0xff]
    %v3571 = vld [vmem:[%s1530] sm:$0xff]
    %v3572 = vld [vmem:[%s1530 + $0x8] sm:$0xff]
    %v3573 = vld [vmem:[%s1530 + $0x10] sm:$0xff]
    %v3574 = vld [vmem:[%s1530 + $0x18] sm:$0xff]
    %v3575 = vld [vmem:[#allocation15] sm:$0xff]
    %v3576 = vld [vmem:[#allocation15 + $0x8] sm:$0xff]
    %v3577 = vld [vmem:[#allocation15 + $0x10] sm:$0xff]
    %v3578 = vld [vmem:[#allocation15 + $0x18] sm:$0xff]
    %v3579 = vld [vmem:[#allocation15 + $0x20] sm:$0xff]
    %v3580 = vld [vmem:[#allocation15 + $0x28] sm:$0xff]
    %v3581 = vld [vmem:[#allocation15 + $0x30] sm:$0xff]
    %v3582 = vld [vmem:[#allocation15 + $0x38] sm:$0xff]
    %v3583 = vld [vmem:[#allocation15 + $0x40] sm:$0xff]
    %v3584 = vld [vmem:[#allocation15 + $0x48] sm:$0xff]
    %v3585 = vld [vmem:[#allocation15 + $0x50] sm:$0xff]
    %v3586 = vld [vmem:[#allocation15 + $0x58] sm:$0xff]
    %v3587 = vld [vmem:[#allocation15 + $0x60] sm:$0xff]
    %v3588 = vld [vmem:[#allocation15 + $0x68] sm:$0xff]
    %v3589 = vld [vmem:[#allocation15 + $0x70] sm:$0xff]
    %v3590 = vld [vmem:[#allocation15 + $0x78] sm:$0xff]
    %v3591 = vld [vmem:[#allocation15 + $0x80] sm:$0xff]
    %v3592 = vld [vmem:[#allocation15 + $0x88] sm:$0xff]
    %v3593 = vld [vmem:[#allocation15 + $0x90] sm:$0xff]
    %v3594 = vld [vmem:[#allocation15 + $0x98] sm:$0xff]
    %v3595 = vld [vmem:[#allocation15 + $0xa0] sm:$0xff]
    %v3596 = vld [vmem:[#allocation15 + $0xa8] sm:$0xff]
    %v3597 = vld [vmem:[#allocation15 + $0xb0] sm:$0xff]
    %v3598 = vld [vmem:[#allocation15 + $0xb8] sm:$0xff]
    %v3599 = vld [vmem:[#allocation15 + $0xc0] sm:$0xff]
    %v3600 = vld [vmem:[#allocation15 + $0xc8] sm:$0xff]
    %v3601 = vld [vmem:[#allocation15 + $0xd0] sm:$0xff]
    %v3602 = vld [vmem:[#allocation15 + $0xd8] sm:$0xff]
    %v3603 = vld [vmem:[#allocation15 + $0xe0] sm:$0xff]
    %v3604 = vld [vmem:[#allocation15 + $0xe8] sm:$0xff]
    %v3605 = vld [vmem:[#allocation15 + $0xf0] sm:$0xff]
    %v3606 = vld [vmem:[#allocation15 + $0xf8] sm:$0xff]
    %v3607 = vld [vmem:[#allocation15 + $0x100] sm:$0xff]
    %v3608 = vld [vmem:[#allocation15 + $0x108] sm:$0xff]
    %v3609 = vld [vmem:[#allocation15 + $0x110] sm:$0xff]
    %v3610 = vld [vmem:[#allocation15 + $0x118] sm:$0xff]
    %v3611 = vld [vmem:[#allocation15 + $0x120] sm:$0xff]
    %v3612 = vld [vmem:[#allocation15 + $0x128] sm:$0xff]
    %v3613 = vld [vmem:[#allocation15 + $0x130] sm:$0xff]
    %v3614 = vld [vmem:[#allocation15 + $0x138] sm:$0xff]
    %v3615 = vld [vmem:[#allocation15 + $0x140] sm:$0xff]
    %v3616 = vld [vmem:[#allocation15 + $0x148] sm:$0xff]
    %v3617 = vld [vmem:[#allocation15 + $0x150] sm:$0xff]
    %v3618 = vld [vmem:[#allocation15 + $0x158] sm:$0xff]
    %v3619 = vld [vmem:[#allocation15 + $0x160] sm:$0xff]
    %v3620 = vld [vmem:[#allocation15 + $0x168] sm:$0xff]
    %v3621 = vld [vmem:[#allocation15 + $0x170] sm:$0xff]
    %v3622 = vld [vmem:[#allocation15 + $0x178] sm:$0xff]
    %v3623 = vld [vmem:[#allocation15 + $0x180] sm:$0xff]
    %v3624 = vld [vmem:[#allocation15 + $0x188] sm:$0xff]
    %v3625 = vld [vmem:[#allocation15 + $0x190] sm:$0xff]
    %v3626 = vld [vmem:[#allocation15 + $0x198] sm:$0xff]
    %v3627 = vld [vmem:[#allocation15 + $0x1a0] sm:$0xff]
    %v3628 = vld [vmem:[#allocation15 + $0x1a8] sm:$0xff]
    %v3629 = vld [vmem:[#allocation15 + $0x1b0] sm:$0xff]
    %v3630 = vld [vmem:[#allocation15 + $0x1b8] sm:$0xff]
    %v3631 = vld [vmem:[#allocation15 + $0x1c0] sm:$0xff]
    %v3632 = vld [vmem:[#allocation15 + $0x1c8] sm:$0xff]
    %v3633 = vld [vmem:[#allocation15 + $0x1d0] sm:$0xff]
    %v3634 = vld [vmem:[#allocation15 + $0x1d8] sm:$0xff]
    %v3635 = vld [vmem:[#allocation15 + $0x1e0] sm:$0xff]
    %v3636 = vld [vmem:[#allocation15 + $0x1e8] sm:$0xff]
    %v3637 = vld [vmem:[#allocation15 + $0x1f0] sm:$0xff]
    %v3638 = vld [vmem:[#allocation15 + $0x1f8] sm:$0xff]
    %3639 = vmatpush.msra.mxu0 %v3635
    %3640 = vmatpush.msra.mxu0 %v3631
    %3641 = vmatpush.msra.mxu0 %v3627
    %3642 = vmatpush.msra.mxu0 %v3623
    %3643 = vmatpush.msra.mxu0 %v3619
    %3644 = vmatpush.msra.mxu0 %v3615
    %3645 = vmatpush.msra.mxu0 %v3611
    %3646 = vmatpush.msra.mxu0 %v3607
    %3647 = vmatpush.msra.mxu0 %v3603
    %3648 = vmatpush.msra.mxu0 %v3599
    %3649 = vmatpush.msra.mxu0 %v3595
    %3650 = vmatpush.msra.mxu0 %v3591
    %3651 = vmatpush.msra.mxu0 %v3587
    %3652 = vmatpush.msra.mxu0 %v3583
    %3653 = vmatpush.msra.mxu0 %v3579
    %3654 = vmatpush.msra.mxu0 %v3575
    %3655 = vmatmul.f32.gmra.mxu0 %v3569
    %v3656 = vpop.f32.mrf.mxu0
    %v3657 = vadd.f32 0.0, %v3656
    %3658 = vdwg.mxu0
    %3659 = vmatpush.msra.mxu0 %v3636
    %3660 = vmatpush.msra.mxu0 %v3632
    %3661 = vmatpush.msra.mxu0 %v3628
    %3662 = vmatpush.msra.mxu0 %v3624
    %3663 = vmatpush.msra.mxu0 %v3620
    %3664 = vmatpush.msra.mxu0 %v3616
    %3665 = vmatpush.msra.mxu0 %v3612
    %3666 = vmatpush.msra.mxu0 %v3608
    %3667 = vmatpush.msra.mxu0 %v3604
    %3668 = vmatpush.msra.mxu0 %v3600
    %3669 = vmatpush.msra.mxu0 %v3596
    %3670 = vmatpush.msra.mxu0 %v3592
    %3671 = vmatpush.msra.mxu0 %v3588
    %3672 = vmatpush.msra.mxu0 %v3584
    %3673 = vmatpush.msra.mxu0 %v3580
    %3674 = vmatpush.msra.mxu0 %v3576
    %3675 = vmatmul.f32.gmra.mxu0 %v3569
    %v3676 = vpop.f32.mrf.mxu0
    %v3677 = vadd.f32 0.0, %v3676
    %3678 = vdwg.mxu0
    %3679 = vmatpush.msra.mxu0 %v3637
    %3680 = vmatpush.msra.mxu0 %v3633
    %3681 = vmatpush.msra.mxu0 %v3629
    %3682 = vmatpush.msra.mxu0 %v3625
    %3683 = vmatpush.msra.mxu0 %v3621
    %3684 = vmatpush.msra.mxu0 %v3617
    %3685 = vmatpush.msra.mxu0 %v3613
    %3686 = vmatpush.msra.mxu0 %v3609
    %3687 = vmatpush.msra.mxu0 %v3605
    %3688 = vmatpush.msra.mxu0 %v3601
    %3689 = vmatpush.msra.mxu0 %v3597
    %3690 = vmatpush.msra.mxu0 %v3593
    %3691 = vmatpush.msra.mxu0 %v3589
    %3692 = vmatpush.msra.mxu0 %v3585
    %3693 = vmatpush.msra.mxu0 %v3581
    %3694 = vmatpush.msra.mxu0 %v3577
    %3695 = vmatmul.f32.gmra.mxu0 %v3569
    %v3696 = vpop.f32.mrf.mxu0
    %v3697 = vadd.f32 0.0, %v3696
    %3698 = vdwg.mxu0
    %3699 = vmatpush.msra.mxu0 %v3638
    %3700 = vmatpush.msra.mxu0 %v3634
    %3701 = vmatpush.msra.mxu0 %v3630
    %3702 = vmatpush.msra.mxu0 %v3626
    %3703 = vmatpush.msra.mxu0 %v3622
    %3704 = vmatpush.msra.mxu0 %v3618
    %3705 = vmatpush.msra.mxu0 %v3614
    %3706 = vmatpush.msra.mxu0 %v3610
    %3707 = vmatpush.msra.mxu0 %v3606
    %3708 = vmatpush.msra.mxu0 %v3602
    %3709 = vmatpush.msra.mxu0 %v3598
    %3710 = vmatpush.msra.mxu0 %v3594
    %3711 = vmatpush.msra.mxu0 %v3590
    %3712 = vmatpush.msra.mxu0 %v3586
    %3713 = vmatpush.msra.mxu0 %v3582
    %3714 = vmatpush.msra.mxu0 %v3578
    %3715 = vmatmul.f32.gmra.mxu0 %v3569
    %v3716 = vpop.f32.mrf.mxu0
    %v3717 = vadd.f32 0.0, %v3716
    %3718 = vdwg.mxu0
    %v3719 = vadd.f32 %v3571, %v3657
    %v3720 = vadd.f32 %v3572, %v3677
    %v3721 = vadd.f32 %v3573, %v3697
    %v3722 = vadd.f32 %v3574, %v3717
    %v3723 = vxor.u32 %v3719, 2147483648
    %v3724 = vmul.f32 %v3723, 1.442695
    %v3725 = vpow.pop %v3724
    %v3726 = vadd.f32 %v3725, 1.0
    %v3727 = vrcp.pop %v3726
    %v3728 = vmul.f32 %v3726, %v3727
    %v3729 = vsub.f32 1.0, %v3728
    %v3730 = vmul.f32 %v3727, %v3729
    %v3731 = vadd.f32 %v3727, %v3730
    %vm3732 = vweird.f32 %v3726
    %vm3733 = vweird.f32 %v3727
    %vm3734 = vmor %vm3732, %vm3733
    %v3735 = vsel %vm3734, %v3727, %v3731
    %v3736 = vand.u32 2147483647, %v3726
    %vm3737 = vcmp.eq.f32.partialorder %v3736, 8.507059e+37
    %v3738 = vand.u32 %v3726, 2147483648
    %v3739 = vor.u32 1.1754944e-38, %v3738
    %v3740 = vsel %vm3737, %v3739, %v3735
    %v3741 = vmul.f32 1.0, %v3740
    %v3742 = vxor.u32 %v3720, 2147483648
    %v3743 = vmul.f32 %v3742, 1.442695
    %v3744 = vpow.pop %v3743
    %v3745 = vadd.f32 %v3744, 1.0
    %v3746 = vrcp.pop %v3745
    %v3747 = vmul.f32 %v3745, %v3746
    %v3748 = vsub.f32 1.0, %v3747
    %v3749 = vmul.f32 %v3746, %v3748
    %v3750 = vadd.f32 %v3746, %v3749
    %vm3751 = vweird.f32 %v3745
    %vm3752 = vweird.f32 %v3746
    %vm3753 = vmor %vm3751, %vm3752
    %v3754 = vsel %vm3753, %v3746, %v3750
    %v3755 = vand.u32 2147483647, %v3745
    %vm3756 = vcmp.eq.f32.partialorder %v3755, 8.507059e+37
    %v3757 = vand.u32 %v3745, 2147483648
    %v3758 = vor.u32 1.1754944e-38, %v3757
    %v3759 = vsel %vm3756, %v3758, %v3754
    %v3760 = vmul.f32 1.0, %v3759
    %v3761 = vtanh.pop %v3721
    %v3762 = vxor.u32 %v3722, 2147483648
    %v3763 = vmul.f32 %v3762, 1.442695
    %v3764 = vpow.pop %v3763
    %v3765 = vadd.f32 %v3764, 1.0
    %v3766 = vrcp.pop %v3765
    %v3767 = vmul.f32 %v3765, %v3766
    %v3768 = vsub.f32 1.0, %v3767
    %v3769 = vmul.f32 %v3766, %v3768
    %v3770 = vadd.f32 %v3766, %v3769
    %vm3771 = vweird.f32 %v3765
    %vm3772 = vweird.f32 %v3766
    %vm3773 = vmor %vm3771, %vm3772
    %v3774 = vsel %vm3773, %v3766, %v3770
    %v3775 = vand.u32 2147483647, %v3765
    %vm3776 = vcmp.eq.f32.partialorder %v3775, 8.507059e+37
    %v3777 = vand.u32 %v3765, 2147483648
    %v3778 = vor.u32 1.1754944e-38, %v3777
    %v3779 = vsel %vm3776, %v3778, %v3774
    %v3780 = vmul.f32 1.0, %v3779
    %v3781 = vmul.f32 %v3760, %v3570
    %v3782 = vmul.f32 %v3741, %v3761
    %v3783 = vadd.f32 %v3781, %v3782
    %v3784 = vtanh.pop %v3783
    %v3785 = vmul.f32 %v3780, %v3784
    %3786 = vst [vmem:[#allocation5] sm:$0xff] %v3783
    %3787 = vst [vmem:[#allocation4] sm:$0xff] %v3785
    %v3788 = vld [vmem:[#allocation4] sm:$0xff]
    %v3789 = vld [vmem:[#allocation5] sm:$0xff]
    %v3790 = vld [vmem:[%s1752] sm:$0xff]
    %v3791 = vld [vmem:[%s1752 + $0x8] sm:$0xff]
    %v3792 = vld [vmem:[%s1752 + $0x10] sm:$0xff]
    %v3793 = vld [vmem:[%s1752 + $0x18] sm:$0xff]
    %v3794 = vld [vmem:[#allocation15] sm:$0xff]
    %v3795 = vld [vmem:[#allocation15 + $0x8] sm:$0xff]
    %v3796 = vld [vmem:[#allocation15 + $0x10] sm:$0xff]
    %v3797 = vld [vmem:[#allocation15 + $0x18] sm:$0xff]
    %v3798 = vld [vmem:[#allocation15 + $0x20] sm:$0xff]
    %v3799 = vld [vmem:[#allocation15 + $0x28] sm:$0xff]
    %v3800 = vld [vmem:[#allocation15 + $0x30] sm:$0xff]
    %v3801 = vld [vmem:[#allocation15 + $0x38] sm:$0xff]
    %v3802 = vld [vmem:[#allocation15 + $0x40] sm:$0xff]
    %v3803 = vld [vmem:[#allocation15 + $0x48] sm:$0xff]
    %v3804 = vld [vmem:[#allocation15 + $0x50] sm:$0xff]
    %v3805 = vld [vmem:[#allocation15 + $0x58] sm:$0xff]
    %v3806 = vld [vmem:[#allocation15 + $0x60] sm:$0xff]
    %v3807 = vld [vmem:[#allocation15 + $0x68] sm:$0xff]
    %v3808 = vld [vmem:[#allocation15 + $0x70] sm:$0xff]
    %v3809 = vld [vmem:[#allocation15 + $0x78] sm:$0xff]
    %v3810 = vld [vmem:[#allocation15 + $0x80] sm:$0xff]
    %v3811 = vld [vmem:[#allocation15 + $0x88] sm:$0xff]
    %v3812 = vld [vmem:[#allocation15 + $0x90] sm:$0xff]
    %v3813 = vld [vmem:[#allocation15 + $0x98] sm:$0xff]
    %v3814 = vld [vmem:[#allocation15 + $0xa0] sm:$0xff]
    %v3815 = vld [vmem:[#allocation15 + $0xa8] sm:$0xff]
    %v3816 = vld [vmem:[#allocation15 + $0xb0] sm:$0xff]
    %v3817 = vld [vmem:[#allocation15 + $0xb8] sm:$0xff]
    %v3818 = vld [vmem:[#allocation15 + $0xc0] sm:$0xff]
    %v3819 = vld [vmem:[#allocation15 + $0xc8] sm:$0xff]
    %v3820 = vld [vmem:[#allocation15 + $0xd0] sm:$0xff]
    %v3821 = vld [vmem:[#allocation15 + $0xd8] sm:$0xff]
    %v3822 = vld [vmem:[#allocation15 + $0xe0] sm:$0xff]
    %v3823 = vld [vmem:[#allocation15 + $0xe8] sm:$0xff]
    %v3824 = vld [vmem:[#allocation15 + $0xf0] sm:$0xff]
    %v3825 = vld [vmem:[#allocation15 + $0xf8] sm:$0xff]
    %v3826 = vld [vmem:[#allocation15 + $0x100] sm:$0xff]
    %v3827 = vld [vmem:[#allocation15 + $0x108] sm:$0xff]
    %v3828 = vld [vmem:[#allocation15 + $0x110] sm:$0xff]
    %v3829 = vld [vmem:[#allocation15 + $0x118] sm:$0xff]
    %v3830 = vld [vmem:[#allocation15 + $0x120] sm:$0xff]
    %v3831 = vld [vmem:[#allocation15 + $0x128] sm:$0xff]
    %v3832 = vld [vmem:[#allocation15 + $0x130] sm:$0xff]
    %v3833 = vld [vmem:[#allocation15 + $0x138] sm:$0xff]
    %v3834 = vld [vmem:[#allocation15 + $0x140] sm:$0xff]
    %v3835 = vld [vmem:[#allocation15 + $0x148] sm:$0xff]
    %v3836 = vld [vmem:[#allocation15 + $0x150] sm:$0xff]
    %v3837 = vld [vmem:[#allocation15 + $0x158] sm:$0xff]
    %v3838 = vld [vmem:[#allocation15 + $0x160] sm:$0xff]
    %v3839 = vld [vmem:[#allocation15 + $0x168] sm:$0xff]
    %v3840 = vld [vmem:[#allocation15 + $0x170] sm:$0xff]
    %v3841 = vld [vmem:[#allocation15 + $0x178] sm:$0xff]
    %v3842 = vld [vmem:[#allocation15 + $0x180] sm:$0xff]
    %v3843 = vld [vmem:[#allocation15 + $0x188] sm:$0xff]
    %v3844 = vld [vmem:[#allocation15 + $0x190] sm:$0xff]
    %v3845 = vld [vmem:[#allocation15 + $0x198] sm:$0xff]
    %v3846 = vld [vmem:[#allocation15 + $0x1a0] sm:$0xff]
    %v3847 = vld [vmem:[#allocation15 + $0x1a8] sm:$0xff]
    %v3848 = vld [vmem:[#allocation15 + $0x1b0] sm:$0xff]
    %v3849 = vld [vmem:[#allocation15 + $0x1b8] sm:$0xff]
    %v3850 = vld [vmem:[#allocation15 + $0x1c0] sm:$0xff]
    %v3851 = vld [vmem:[#allocation15 + $0x1c8] sm:$0xff]
    %v3852 = vld [vmem:[#allocation15 + $0x1d0] sm:$0xff]
    %v3853 = vld [vmem:[#allocation15 + $0x1d8] sm:$0xff]
    %v3854 = vld [vmem:[#allocation15 + $0x1e0] sm:$0xff]
    %v3855 = vld [vmem:[#allocation15 + $0x1e8] sm:$0xff]
    %v3856 = vld [vmem:[#allocation15 + $0x1f0] sm:$0xff]
    %v3857 = vld [vmem:[#allocation15 + $0x1f8] sm:$0xff]
    %3858 = vmatpush.msra.mxu0 %v3854
    %3859 = vmatpush.msra.mxu0 %v3850
    %3860 = vmatpush.msra.mxu0 %v3846
    %3861 = vmatpush.msra.mxu0 %v3842
    %3862 = vmatpush.msra.mxu0 %v3838
    %3863 = vmatpush.msra.mxu0 %v3834
    %3864 = vmatpush.msra.mxu0 %v3830
    %3865 = vmatpush.msra.mxu0 %v3826
    %3866 = vmatpush.msra.mxu0 %v3822
    %3867 = vmatpush.msra.mxu0 %v3818
    %3868 = vmatpush.msra.mxu0 %v3814
    %3869 = vmatpush.msra.mxu0 %v3810
    %3870 = vmatpush.msra.mxu0 %v3806
    %3871 = vmatpush.msra.mxu0 %v3802
    %3872 = vmatpush.msra.mxu0 %v3798
    %3873 = vmatpush.msra.mxu0 %v3794
    %3874 = vmatmul.f32.gmra.mxu0 %v3788
    %v3875 = vpop.f32.mrf.mxu0
    %v3876 = vadd.f32 0.0, %v3875
    %3877 = vdwg.mxu0
    %3878 = vmatpush.msra.mxu0 %v3855
    %3879 = vmatpush.msra.mxu0 %v3851
    %3880 = vmatpush.msra.mxu0 %v3847
    %3881 = vmatpush.msra.mxu0 %v3843
    %3882 = vmatpush.msra.mxu0 %v3839
    %3883 = vmatpush.msra.mxu0 %v3835
    %3884 = vmatpush.msra.mxu0 %v3831
    %3885 = vmatpush.msra.mxu0 %v3827
    %3886 = vmatpush.msra.mxu0 %v3823
    %3887 = vmatpush.msra.mxu0 %v3819
    %3888 = vmatpush.msra.mxu0 %v3815
    %3889 = vmatpush.msra.mxu0 %v3811
    %3890 = vmatpush.msra.mxu0 %v3807
    %3891 = vmatpush.msra.mxu0 %v3803
    %3892 = vmatpush.msra.mxu0 %v3799
    %3893 = vmatpush.msra.mxu0 %v3795
    %3894 = vmatmul.f32.gmra.mxu0 %v3788
    %v3895 = vpop.f32.mrf.mxu0
    %v3896 = vadd.f32 0.0, %v3895
    %3897 = vdwg.mxu0
    %3898 = vmatpush.msra.mxu0 %v3856
    %3899 = vmatpush.msra.mxu0 %v3852
    %3900 = vmatpush.msra.mxu0 %v3848
    %3901 = vmatpush.msra.mxu0 %v3844
    %3902 = vmatpush.msra.mxu0 %v3840
    %3903 = vmatpush.msra.mxu0 %v3836
    %3904 = vmatpush.msra.mxu0 %v3832
    %3905 = vmatpush.msra.mxu0 %v3828
    %3906 = vmatpush.msra.mxu0 %v3824
    %3907 = vmatpush.msra.mxu0 %v3820
    %3908 = vmatpush.msra.mxu0 %v3816
    %3909 = vmatpush.msra.mxu0 %v3812
    %3910 = vmatpush.msra.mxu0 %v3808
    %3911 = vmatpush.msra.mxu0 %v3804
    %3912 = vmatpush.msra.mxu0 %v3800
    %3913 = vmatpush.msra.mxu0 %v3796
    %3914 = vmatmul.f32.gmra.mxu0 %v3788
    %v3915 = vpop.f32.mrf.mxu0
    %v3916 = vadd.f32 0.0, %v3915
    %3917 = vdwg.mxu0
    %3918 = vmatpush.msra.mxu0 %v3857
    %3919 = vmatpush.msra.mxu0 %v3853
    %3920 = vmatpush.msra.mxu0 %v3849
    %3921 = vmatpush.msra.mxu0 %v3845
    %3922 = vmatpush.msra.mxu0 %v3841
    %3923 = vmatpush.msra.mxu0 %v3837
    %3924 = vmatpush.msra.mxu0 %v3833
    %3925 = vmatpush.msra.mxu0 %v3829
    %3926 = vmatpush.msra.mxu0 %v3825
    %3927 = vmatpush.msra.mxu0 %v3821
    %3928 = vmatpush.msra.mxu0 %v3817
    %3929 = vmatpush.msra.mxu0 %v3813
    %3930 = vmatpush.msra.mxu0 %v3809
    %3931 = vmatpush.msra.mxu0 %v3805
    %3932 = vmatpush.msra.mxu0 %v3801
    %3933 = vmatpush.msra.mxu0 %v3797
    %3934 = vmatmul.f32.gmra.mxu0 %v3788
    %v3935 = vpop.f32.mrf.mxu0
    %v3936 = vadd.f32 0.0, %v3935
    %3937 = vdwg.mxu0
    %v3938 = vadd.f32 %v3790, %v3876
    %v3939 = vadd.f32 %v3791, %v3896
    %v3940 = vadd.f32 %v3792, %v3916
    %v3941 = vadd.f32 %v3793, %v3936
    %v3942 = vxor.u32 %v3938, 2147483648
    %v3943 = vmul.f32 %v3942, 1.442695
    %v3944 = vpow.pop %v3943
    %v3945 = vadd.f32 %v3944, 1.0
    %v3946 = vrcp.pop %v3945
    %v3947 = vmul.f32 %v3945, %v3946
    %v3948 = vsub.f32 1.0, %v3947
    %v3949 = vmul.f32 %v3946, %v3948
    %v3950 = vadd.f32 %v3946, %v3949
    %vm3951 = vweird.f32 %v3945
    %vm3952 = vweird.f32 %v3946
    %vm3953 = vmor %vm3951, %vm3952
    %v3954 = vsel %vm3953, %v3946, %v3950
    %v3955 = vand.u32 2147483647, %v3945
    %vm3956 = vcmp.eq.f32.partialorder %v3955, 8.507059e+37
    %v3957 = vand.u32 %v3945, 2147483648
    %v3958 = vor.u32 1.1754944e-38, %v3957
    %v3959 = vsel %vm3956, %v3958, %v3954
    %v3960 = vmul.f32 1.0, %v3959
    %v3961 = vxor.u32 %v3939, 2147483648
    %v3962 = vmul.f32 %v3961, 1.442695
    %v3963 = vpow.pop %v3962
    %v3964 = vadd.f32 %v3963, 1.0
    %v3965 = vrcp.pop %v3964
    %v3966 = vmul.f32 %v3964, %v3965
    %v3967 = vsub.f32 1.0, %v3966
    %v3968 = vmul.f32 %v3965, %v3967
    %v3969 = vadd.f32 %v3965, %v3968
    %vm3970 = vweird.f32 %v3964
    %vm3971 = vweird.f32 %v3965
    %vm3972 = vmor %vm3970, %vm3971
    %v3973 = vsel %vm3972, %v3965, %v3969
    %v3974 = vand.u32 2147483647, %v3964
    %vm3975 = vcmp.eq.f32.partialorder %v3974, 8.507059e+37
    %v3976 = vand.u32 %v3964, 2147483648
    %v3977 = vor.u32 1.1754944e-38, %v3976
    %v3978 = vsel %vm3975, %v3977, %v3973
    %v3979 = vmul.f32 1.0, %v3978
    %v3980 = vtanh.pop %v3940
    %v3981 = vxor.u32 %v3941, 2147483648
    %v3982 = vmul.f32 %v3981, 1.442695
    %v3983 = vpow.pop %v3982
    %v3984 = vadd.f32 %v3983, 1.0
    %v3985 = vrcp.pop %v3984
    %v3986 = vmul.f32 %v3984, %v3985
    %v3987 = vsub.f32 1.0, %v3986
    %v3988 = vmul.f32 %v3985, %v3987
    %v3989 = vadd.f32 %v3985, %v3988
    %vm3990 = vweird.f32 %v3984
    %vm3991 = vweird.f32 %v3985
    %vm3992 = vmor %vm3990, %vm3991
    %v3993 = vsel %vm3992, %v3985, %v3989
    %v3994 = vand.u32 2147483647, %v3984
    %vm3995 = vcmp.eq.f32.partialorder %v3994, 8.507059e+37
    %v3996 = vand.u32 %v3984, 2147483648
    %v3997 = vor.u32 1.1754944e-38, %v3996
    %v3998 = vsel %vm3995, %v3997, %v3993
    %v3999 = vmul.f32 1.0, %v3998
    %v4000 = vmul.f32 %v3979, %v3789
    %v4001 = vmul.f32 %v3960, %v3980
    %v4002 = vadd.f32 %v4000, %v4001
    %v4003 = vtanh.pop %v4002
    %v4004 = vmul.f32 %v3999, %v4003
    %4005 = vst [vmem:[#allocation5] sm:$0xff] %v4002
    %4006 = vst [vmem:[#allocation4] sm:$0xff] %v4004
    %v4007 = vld [vmem:[#allocation4] sm:$0xff]
    %v4008 = vld [vmem:[#allocation5] sm:$0xff]
    %v4009 = vld [vmem:[%s1974] sm:$0xff]
    %v4010 = vld [vmem:[%s1974 + $0x8] sm:$0xff]
    %v4011 = vld [vmem:[%s1974 + $0x10] sm:$0xff]
    %v4012 = vld [vmem:[%s1974 + $0x18] sm:$0xff]
    %v4013 = vld [vmem:[#allocation15] sm:$0xff]
    %v4014 = vld [vmem:[#allocation15 + $0x8] sm:$0xff]
    %v4015 = vld [vmem:[#allocation15 + $0x10] sm:$0xff]
    %v4016 = vld [vmem:[#allocation15 + $0x18] sm:$0xff]
    %v4017 = vld [vmem:[#allocation15 + $0x20] sm:$0xff]
    %v4018 = vld [vmem:[#allocation15 + $0x28] sm:$0xff]
    %v4019 = vld [vmem:[#allocation15 + $0x30] sm:$0xff]
    %v4020 = vld [vmem:[#allocation15 + $0x38] sm:$0xff]
    %v4021 = vld [vmem:[#allocation15 + $0x40] sm:$0xff]
    %v4022 = vld [vmem:[#allocation15 + $0x48] sm:$0xff]
    %v4023 = vld [vmem:[#allocation15 + $0x50] sm:$0xff]
    %v4024 = vld [vmem:[#allocation15 + $0x58] sm:$0xff]
    %v4025 = vld [vmem:[#allocation15 + $0x60] sm:$0xff]
    %v4026 = vld [vmem:[#allocation15 + $0x68] sm:$0xff]
    %v4027 = vld [vmem:[#allocation15 + $0x70] sm:$0xff]
    %v4028 = vld [vmem:[#allocation15 + $0x78] sm:$0xff]
    %v4029 = vld [vmem:[#allocation15 + $0x80] sm:$0xff]
    %v4030 = vld [vmem:[#allocation15 + $0x88] sm:$0xff]
    %v4031 = vld [vmem:[#allocation15 + $0x90] sm:$0xff]
    %v4032 = vld [vmem:[#allocation15 + $0x98] sm:$0xff]
    %v4033 = vld [vmem:[#allocation15 + $0xa0] sm:$0xff]
    %v4034 = vld [vmem:[#allocation15 + $0xa8] sm:$0xff]
    %v4035 = vld [vmem:[#allocation15 + $0xb0] sm:$0xff]
    %v4036 = vld [vmem:[#allocation15 + $0xb8] sm:$0xff]
    %v4037 = vld [vmem:[#allocation15 + $0xc0] sm:$0xff]
    %v4038 = vld [vmem:[#allocation15 + $0xc8] sm:$0xff]
    %v4039 = vld [vmem:[#allocation15 + $0xd0] sm:$0xff]
    %v4040 = vld [vmem:[#allocation15 + $0xd8] sm:$0xff]
    %v4041 = vld [vmem:[#allocation15 + $0xe0] sm:$0xff]
    %v4042 = vld [vmem:[#allocation15 + $0xe8] sm:$0xff]
    %v4043 = vld [vmem:[#allocation15 + $0xf0] sm:$0xff]
    %v4044 = vld [vmem:[#allocation15 + $0xf8] sm:$0xff]
    %v4045 = vld [vmem:[#allocation15 + $0x100] sm:$0xff]
    %v4046 = vld [vmem:[#allocation15 + $0x108] sm:$0xff]
    %v4047 = vld [vmem:[#allocation15 + $0x110] sm:$0xff]
    %v4048 = vld [vmem:[#allocation15 + $0x118] sm:$0xff]
    %v4049 = vld [vmem:[#allocation15 + $0x120] sm:$0xff]
    %v4050 = vld [vmem:[#allocation15 + $0x128] sm:$0xff]
    %v4051 = vld [vmem:[#allocation15 + $0x130] sm:$0xff]
    %v4052 = vld [vmem:[#allocation15 + $0x138] sm:$0xff]
    %v4053 = vld [vmem:[#allocation15 + $0x140] sm:$0xff]
    %v4054 = vld [vmem:[#allocation15 + $0x148] sm:$0xff]
    %v4055 = vld [vmem:[#allocation15 + $0x150] sm:$0xff]
    %v4056 = vld [vmem:[#allocation15 + $0x158] sm:$0xff]
    %v4057 = vld [vmem:[#allocation15 + $0x160] sm:$0xff]
    %v4058 = vld [vmem:[#allocation15 + $0x168] sm:$0xff]
    %v4059 = vld [vmem:[#allocation15 + $0x170] sm:$0xff]
    %v4060 = vld [vmem:[#allocation15 + $0x178] sm:$0xff]
    %v4061 = vld [vmem:[#allocation15 + $0x180] sm:$0xff]
    %v4062 = vld [vmem:[#allocation15 + $0x188] sm:$0xff]
    %v4063 = vld [vmem:[#allocation15 + $0x190] sm:$0xff]
    %v4064 = vld [vmem:[#allocation15 + $0x198] sm:$0xff]
    %v4065 = vld [vmem:[#allocation15 + $0x1a0] sm:$0xff]
    %v4066 = vld [vmem:[#allocation15 + $0x1a8] sm:$0xff]
    %v4067 = vld [vmem:[#allocation15 + $0x1b0] sm:$0xff]
    %v4068 = vld [vmem:[#allocation15 + $0x1b8] sm:$0xff]
    %v4069 = vld [vmem:[#allocation15 + $0x1c0] sm:$0xff]
    %v4070 = vld [vmem:[#allocation15 + $0x1c8] sm:$0xff]
    %v4071 = vld [vmem:[#allocation15 + $0x1d0] sm:$0xff]
    %v4072 = vld [vmem:[#allocation15 + $0x1d8] sm:$0xff]
    %v4073 = vld [vmem:[#allocation15 + $0x1e0] sm:$0xff]
    %v4074 = vld [vmem:[#allocation15 + $0x1e8] sm:$0xff]
    %v4075 = vld [vmem:[#allocation15 + $0x1f0] sm:$0xff]
    %v4076 = vld [vmem:[#allocation15 + $0x1f8] sm:$0xff]
    %4077 = vmatpush.msra.mxu0 %v4073
    %4078 = vmatpush.msra.mxu0 %v4069
    %4079 = vmatpush.msra.mxu0 %v4065
    %4080 = vmatpush.msra.mxu0 %v4061
    %4081 = vmatpush.msra.mxu0 %v4057
    %4082 = vmatpush.msra.mxu0 %v4053
    %4083 = vmatpush.msra.mxu0 %v4049
    %4084 = vmatpush.msra.mxu0 %v4045
    %4085 = vmatpush.msra.mxu0 %v4041
    %4086 = vmatpush.msra.mxu0 %v4037
    %4087 = vmatpush.msra.mxu0 %v4033
    %4088 = vmatpush.msra.mxu0 %v4029
    %4089 = vmatpush.msra.mxu0 %v4025
    %4090 = vmatpush.msra.mxu0 %v4021
    %4091 = vmatpush.msra.mxu0 %v4017
    %4092 = vmatpush.msra.mxu0 %v4013
    %4093 = vmatmul.f32.gmra.mxu0 %v4007
    %v4094 = vpop.f32.mrf.mxu0
    %v4095 = vadd.f32 0.0, %v4094
    %4096 = vdwg.mxu0
    %4097 = vmatpush.msra.mxu0 %v4074
    %4098 = vmatpush.msra.mxu0 %v4070
    %4099 = vmatpush.msra.mxu0 %v4066
    %4100 = vmatpush.msra.mxu0 %v4062
    %4101 = vmatpush.msra.mxu0 %v4058
    %4102 = vmatpush.msra.mxu0 %v4054
    %4103 = vmatpush.msra.mxu0 %v4050
    %4104 = vmatpush.msra.mxu0 %v4046
    %4105 = vmatpush.msra.mxu0 %v4042
    %4106 = vmatpush.msra.mxu0 %v4038
    %4107 = vmatpush.msra.mxu0 %v4034
    %4108 = vmatpush.msra.mxu0 %v4030
    %4109 = vmatpush.msra.mxu0 %v4026
    %4110 = vmatpush.msra.mxu0 %v4022
    %4111 = vmatpush.msra.mxu0 %v4018
    %4112 = vmatpush.msra.mxu0 %v4014
    %4113 = vmatmul.f32.gmra.mxu0 %v4007
    %v4114 = vpop.f32.mrf.mxu0
    %v4115 = vadd.f32 0.0, %v4114
    %4116 = vdwg.mxu0
    %4117 = vmatpush.msra.mxu0 %v4075
    %4118 = vmatpush.msra.mxu0 %v4071
    %4119 = vmatpush.msra.mxu0 %v4067
    %4120 = vmatpush.msra.mxu0 %v4063
    %4121 = vmatpush.msra.mxu0 %v4059
    %4122 = vmatpush.msra.mxu0 %v4055
    %4123 = vmatpush.msra.mxu0 %v4051
    %4124 = vmatpush.msra.mxu0 %v4047
    %4125 = vmatpush.msra.mxu0 %v4043
    %4126 = vmatpush.msra.mxu0 %v4039
    %4127 = vmatpush.msra.mxu0 %v4035
    %4128 = vmatpush.msra.mxu0 %v4031
    %4129 = vmatpush.msra.mxu0 %v4027
    %4130 = vmatpush.msra.mxu0 %v4023
    %4131 = vmatpush.msra.mxu0 %v4019
    %4132 = vmatpush.msra.mxu0 %v4015
    %4133 = vmatmul.f32.gmra.mxu0 %v4007
    %v4134 = vpop.f32.mrf.mxu0
    %v4135 = vadd.f32 0.0, %v4134
    %4136 = vdwg.mxu0
    %4137 = vmatpush.msra.mxu0 %v4076
    %4138 = vmatpush.msra.mxu0 %v4072
    %4139 = vmatpush.msra.mxu0 %v4068
    %4140 = vmatpush.msra.mxu0 %v4064
    %4141 = vmatpush.msra.mxu0 %v4060
    %4142 = vmatpush.msra.mxu0 %v4056
    %4143 = vmatpush.msra.mxu0 %v4052
    %4144 = vmatpush.msra.mxu0 %v4048
    %4145 = vmatpush.msra.mxu0 %v4044
    %4146 = vmatpush.msra.mxu0 %v4040
    %4147 = vmatpush.msra.mxu0 %v4036
    %4148 = vmatpush.msra.mxu0 %v4032
    %4149 = vmatpush.msra.mxu0 %v4028
    %4150 = vmatpush.msra.mxu0 %v4024
    %4151 = vmatpush.msra.mxu0 %v4020
    %4152 = vmatpush.msra.mxu0 %v4016
    %4153 = vmatmul.f32.gmra.mxu0 %v4007
    %v4154 = vpop.f32.mrf.mxu0
    %v4155 = vadd.f32 0.0, %v4154
    %4156 = vdwg.mxu0
    %v4157 = vadd.f32 %v4009, %v4095
    %v4158 = vadd.f32 %v4010, %v4115
    %v4159 = vadd.f32 %v4011, %v4135
    %v4160 = vadd.f32 %v4012, %v4155
    %v4161 = vxor.u32 %v4157, 2147483648
    %v4162 = vmul.f32 %v4161, 1.442695
    %v4163 = vpow.pop %v4162
    %v4164 = vadd.f32 %v4163, 1.0
    %v4165 = vrcp.pop %v4164
    %v4166 = vmul.f32 %v4164, %v4165
    %v4167 = vsub.f32 1.0, %v4166
    %v4168 = vmul.f32 %v4165, %v4167
    %v4169 = vadd.f32 %v4165, %v4168
    %vm4170 = vweird.f32 %v4164
    %vm4171 = vweird.f32 %v4165
    %vm4172 = vmor %vm4170, %vm4171
    %v4173 = vsel %vm4172, %v4165, %v4169
    %v4174 = vand.u32 2147483647, %v4164
    %vm4175 = vcmp.eq.f32.partialorder %v4174, 8.507059e+37
    %v4176 = vand.u32 %v4164, 2147483648
    %v4177 = vor.u32 1.1754944e-38, %v4176
    %v4178 = vsel %vm4175, %v4177, %v4173
    %v4179 = vmul.f32 1.0, %v4178
    %v4180 = vxor.u32 %v4158, 2147483648
    %v4181 = vmul.f32 %v4180, 1.442695
    %v4182 = vpow.pop %v4181
    %v4183 = vadd.f32 %v4182, 1.0
    %v4184 = vrcp.pop %v4183
    %v4185 = vmul.f32 %v4183, %v4184
    %v4186 = vsub.f32 1.0, %v4185
    %v4187 = vmul.f32 %v4184, %v4186
    %v4188 = vadd.f32 %v4184, %v4187
    %vm4189 = vweird.f32 %v4183
    %vm4190 = vweird.f32 %v4184
    %vm4191 = vmor %vm4189, %vm4190
    %v4192 = vsel %vm4191, %v4184, %v4188
    %v4193 = vand.u32 2147483647, %v4183
    %vm4194 = vcmp.eq.f32.partialorder %v4193, 8.507059e+37
    %v4195 = vand.u32 %v4183, 2147483648
    %v4196 = vor.u32 1.1754944e-38, %v4195
    %v4197 = vsel %vm4194, %v4196, %v4192
    %v4198 = vmul.f32 1.0, %v4197
    %v4199 = vtanh.pop %v4159
    %v4200 = vxor.u32 %v4160, 2147483648
    %v4201 = vmul.f32 %v4200, 1.442695
    %v4202 = vpow.pop %v4201
    %v4203 = vadd.f32 %v4202, 1.0
    %v4204 = vrcp.pop %v4203
    %v4205 = vmul.f32 %v4203, %v4204
    %v4206 = vsub.f32 1.0, %v4205
    %v4207 = vmul.f32 %v4204, %v4206
    %v4208 = vadd.f32 %v4204, %v4207
    %vm4209 = vweird.f32 %v4203
    %vm4210 = vweird.f32 %v4204
    %vm4211 = vmor %vm4209, %vm4210
    %v4212 = vsel %vm4211, %v4204, %v4208
    %v4213 = vand.u32 2147483647, %v4203
    %vm4214 = vcmp.eq.f32.partialorder %v4213, 8.507059e+37
    %v4215 = vand.u32 %v4203, 2147483648
    %v4216 = vor.u32 1.1754944e-38, %v4215
    %v4217 = vsel %vm4214, %v4216, %v4212
    %v4218 = vmul.f32 1.0, %v4217
    %v4219 = vmul.f32 %v4198, %v4008
    %v4220 = vmul.f32 %v4179, %v4199
    %v4221 = vadd.f32 %v4219, %v4220
    %v4222 = vtanh.pop %v4221
    %v4223 = vmul.f32 %v4218, %v4222
    %4224 = vst [vmem:[#allocation5] sm:$0xff] %v4221
    %4225 = vst [vmem:[#allocation4] sm:$0xff] %v4223
    %v4226 = vld [vmem:[#allocation4] sm:$0xff]
    %v4227 = vld [vmem:[#allocation17] sm:$0xff]
    %v4228 = vld [vmem:[#allocation17 + $0x8] sm:$0xff]
    %v4229 = vld [vmem:[#allocation17 + $0x10] sm:$0xff]
    %v4230 = vld [vmem:[#allocation17 + $0x18] sm:$0xff]
    %v4231 = vld [vmem:[#allocation17 + $0x20] sm:$0xff]
    %v4232 = vld [vmem:[#allocation17 + $0x28] sm:$0xff]
    %v4233 = vld [vmem:[#allocation17 + $0x30] sm:$0xff]
    %v4234 = vld [vmem:[#allocation17 + $0x38] sm:$0xff]
    %v4235 = vld [vmem:[#allocation17 + $0x40] sm:$0xff]
    %v4236 = vld [vmem:[#allocation17 + $0x48] sm:$0xff]
    %v4237 = vld [vmem:[#allocation17 + $0x50] sm:$0xff]
    %v4238 = vld [vmem:[#allocation17 + $0x58] sm:$0xff]
    %v4239 = vld [vmem:[#allocation17 + $0x60] sm:$0xff]
    %v4240 = vld [vmem:[#allocation17 + $0x68] sm:$0xff]
    %v4241 = vld [vmem:[#allocation17 + $0x70] sm:$0xff]
    %v4242 = vld [vmem:[#allocation17 + $0x78] sm:$0xff]
    %v4243 = vld [vmem:[%s8] sm:$0x1]
    %v4245 = vperm.slane %v4243, 0
    %4247 = vmatpush.msra.mxu0 %v4242
    %4248 = vmatpush.msra.mxu0 %v4241
    %4249 = vmatpush.msra.mxu0 %v4240
    %4250 = vmatpush.msra.mxu0 %v4239
    %4251 = vmatpush.msra.mxu0 %v4238
    %4252 = vmatpush.msra.mxu0 %v4237
    %4253 = vmatpush.msra.mxu0 %v4236
    %4254 = vmatpush.msra.mxu0 %v4235
    %4255 = vmatpush.msra.mxu0 %v4234
    %4256 = vmatpush.msra.mxu0 %v4233
    %4257 = vmatpush.msra.mxu0 %v4232
    %4258 = vmatpush.msra.mxu0 %v4231
    %4259 = vmatpush.msra.mxu0 %v4230
    %4260 = vmatpush.msra.mxu0 %v4229
    %4261 = vmatpush.msra.mxu0 %v4228
    %4262 = vmatpush.msra.mxu0 %v4227
    %4263 = vmatmul.f32.gmra.mxu0 %v4226
    %v4264 = vpop.f32.mrf.mxu0
    %v4265 = vadd.f32 %v4245, %v4264
    %4266 = vdwg.mxu0
    %4267 = vst [vmem:[#allocation18] sm:$0xff] %v4265
    // Predicated region
    $region66: #{tpu_custom_call.1} parent=1 // pred_check
      _
    $region67: #{tpu_custom_call.1} parent=1 // pred_check_branch
      %4269 = sbr.rel (0) target = $region69
    $region68: #{tpu_custom_call.1} parent=1 // pred_region
      %4271 = vsyncadd [#allocation8], 0
      %s4273 = sshll.u32 [#allocation18], 4
      %s4274 = int_to_ptr.vmem [resolvable:$true] %s4273
      %s4275 = sshll.u32 %s9, 4
      %s4276 = int_to_ptr.hbm [resolvable:$true] %s4275
      %4278 = dma.vmem_to_hbm [thread:$0]  %s4274, 128, %s4276, [#allocation8]
    $region69: #{tpu_custom_call.1} parent=1 // pred_fallthru
      _
    // Predicated region
    $region70: #{tpu_custom_call.1} parent=1 // pred_check
      _
    $region71: #{tpu_custom_call.1} parent=1 // pred_check_branch
      %4280 = sbr.rel (0) target = $region73
    $region72: #{tpu_custom_call.1} parent=1 // pred_region
      %4282 = dma.done [#allocation8], 128
    $region73: #{tpu_custom_call.1} parent=1 // pred_fallthru
      _
    %4283 = vsyncpa [#allocation7], 1
    %4284 = vsyncpa [#allocation10], 1
    %4285 = vsyncpa [#allocation13], 1
    %4286 = vsyncpa [#allocation16], 1
    %4287 = vsyncpa [#allocation8], 1

</llo_original>
